<compile_context>
chip_gen: v6e
topology: v6e:2x2x1
jax: 0.10.0
libtpu: 0.0.40
codegen_flags: <defaults>
</compile_context>

<pallas_src>
import functools

import jax
import jax.numpy as jnp
from jax.experimental import pallas as pl
from jax.experimental.pallas import tpu as pltpu


def _round_up(x, m):
    return ((x + m - 1) // m) * m


def _cdiv(a, b):
    return (a + b - 1) // b


def _conv_bn_relu_kernel(x_ref, w_ref, shift_ref, o_ref, acc_ref, *,
                         kh, kw, dilation, th, wout, apply_relu):
    # x_ref:     (1, 1, R, WpP, Cin)   padded input rows for this (batch, row-block)
    #                                  R = th + (kh-1)*dilation  (halo included)
    # w_ref:     (kh, kw, Cin, CoutP)  conv weight, BN scale pre-folded, Cout padded ->128k
    # shift_ref: (1, CoutP)            folded BN shift (+ conv bias)
    # o_ref:     (1, 1, th*wout, CoutP)
    # acc_ref:   (th*wout, CoutP) f32  VMEM accumulator
    cin = w_ref.shape[2]
    for i in range(kh):
        for j in range(kw):
            # Shifted window for tap (i, j): (th, wout, cin).
            win = x_ref[0, 0,
                        i * dilation:i * dilation + th,
                        j * dilation:j * dilation + wout,
                        :]
            # wout is padded to a multiple of 8 in the wrapper, so this collapse of the
            # two leading dims is layout-preserving (no relayout).
            a = win.reshape(th * wout, cin)
            contrib = jnp.dot(a, w_ref[i, j], preferred_element_type=jnp.float32)
            if i == 0 and j == 0:
                acc_ref[...] = contrib
            else:
                acc_ref[...] += contrib
    y = acc_ref[...] + shift_ref[...]
    if apply_relu:
        y = jnp.maximum(y, 0.0)
    o_ref[0, 0] = y.astype(o_ref.dtype)


def _pick_row_block(hout, wout_c, wp2, kh, dilation, cout_p,
                    target_rows=1024, budget_bytes=12 * 1024 * 1024):
    """Pick output-row block height: aim for ~target_rows GEMM rows per grid step,
    shrink until (double-buffered) blocks fit the VMEM budget."""
    th = max(1, min(hout, max(1, target_rows // max(wout_c, 1))))

    def cost(t):
        r = t + dilation * (kh - 1)
        # input block stored with (Wp, Cin) as the tiled (sublane, lane) dims
        x_bytes = r * _round_up(wp2, 8) * 128 * 4
        o_bytes = t * wout_c * cout_p * 4
        return 2 * x_bytes + 2 * o_bytes + t * wout_c * cout_p * 4  # + f32 accumulator

    while th > 1 and cost(th) > budget_bytes:
        th = (th + 1) // 2
    return th


@functools.partial(jax.jit, static_argnames=(
    "stride", "padding", "dilation", "groups", "relu", "bn", "eps", "out_format"))
def basic_conv_forward(x, conv_w, gamma=None, beta=None, running_mean=None,
                       running_var=None, conv_bias=None, *,
                       stride=1, padding=0, dilation=1, groups=1,
                       relu=True, bn=True, eps=1e-5, out_format="NCHW"):
    n, cin, h, w = x.shape
    cout, cin_w, kh, kw = conv_w.shape
    if groups != 1:
        raise NotImplementedError("groups != 1 not supported")  # TODO(synk): grouped conv
    assert cin_w == cin

    # ---- BN (eval mode) folding: scale into weights, shift stays per-channel ----
    if bn:
        inv_std = 1.0 / jnp.sqrt(running_var + eps)
        scale = gamma * inv_std
        shift = beta - running_mean * scale
    else:
        scale = jnp.ones((cout,), jnp.float32)
        shift = jnp.zeros((cout,), jnp.float32)
    if conv_bias is not None:
        shift = shift + conv_bias * scale

    cout_p = _round_up(cout, 128)  # lane-dense output channels

    # (Cout, Cin, kH, kW) -> (kH, kW, Cin, Cout), fold BN scale, zero-pad Cout lanes.
    w_t = conv_w.transpose(2, 3, 1, 0) * scale[None, None, None, :]
    w_t = jnp.pad(w_t, ((0, 0), (0, 0), (0, 0), (0, cout_p - cout))).astype(x.dtype)
    shift_p = jnp.pad(shift, (0, cout_p - cout)).reshape(1, cout_p).astype(jnp.float32)

    # ---- spatial geometry (computed at stride 1 internally) ----
    hout1 = h + 2 * padding - dilation * (kh - 1)
    wout1 = w + 2 * padding - dilation * (kw - 1)
    wout_c = _round_up(wout1, 8)                 # sublane-friendly in-kernel reshape
    wp2 = wout_c + dilation * (kw - 1)

    th = _pick_row_block(hout1, wout_c, wp2, kh, dilation, cout_p)
    n_hb = _cdiv(hout1, th)
    hout_p = n_hb * th
    hp2 = hout_p + dilation * (kh - 1)
    r_blk = th + dilation * (kh - 1)

    # NCHW -> NHWC (kept for PyTorch layout parity) + spatial zero-pad.
    x_nhwc = x.transpose(0, 2, 3, 1)
    x_pad = jnp.pad(x_nhwc, ((0, 0),
                             (padding, hp2 - h - padding),
                             (padding, wp2 - w - padding),
                             (0, 0)))

    # Row-blocks with their (kh-1)*dilation halo rows (only halo rows are duplicated;
    # n_hb == 1 means no duplication at all).
    x_blocks = jnp.stack(
        [x_pad[:, hb * th: hb * th + r_blk] for hb in range(n_hb)], axis=1)
    # x_blocks: (N, n_hb, r_blk, wp2, cin)

    m_blk = th * wout_c
    kernel = functools.partial(_conv_bn_relu_kernel, kh=kh, kw=kw,
                               dilation=dilation, th=th, wout=wout_c,
                               apply_relu=relu)

    out4 = pl.pallas_call(
        kernel,
        out_shape=jax.ShapeDtypeStruct((n, n_hb, m_blk, cout_p), x.dtype),
        grid=(n, n_hb),
        in_specs=[
            pl.BlockSpec((1, 1, r_blk, wp2, cin), lambda b, hb: (b, hb, 0, 0, 0)),
            pl.BlockSpec((kh, kw, cin, cout_p), lambda b, hb: (0, 0, 0, 0)),
            pl.BlockSpec((1, cout_p), lambda b, hb: (0, 0)),
        ],
        out_specs=pl.BlockSpec((1, 1, m_blk, cout_p), lambda b, hb: (b, hb, 0, 0)),
        scratch_shapes=[pltpu.VMEM((m_blk, cout_p), jnp.float32)],
        compiler_params=pltpu.CompilerParams(
            dimension_semantics=("parallel", "parallel"),
            vmem_limit_bytes=32 * 1024 * 1024,
        ),
    )(x_blocks, w_t, shift_p)

    # (N, n_hb, th*wout_c, CoutP) -> (N, Hout_pad, Wout_c, CoutP) -> valid region.
    out = out4.reshape(n, hout_p, wout_c, cout_p)[:, :hout1, :wout1, :cout]
    if stride > 1:
        # TODO(synk): computed at stride 1 and subsampled; a native strided-window
        # gather in the kernel would avoid the wasted compute.
        out = out[:, ::stride, ::stride, :]
    if out_format == "NCHW":
        out = out.transpose(0, 3, 1, 2)
    return out


if __name__ == "__main__":
    # BasicConv(in_planes=4, out_planes=8, kernel_size=3, stride=1, padding=1)
    N, CIN, H, W = 2, 4, 16, 16
    COUT, KH, KW = 8, 3, 3

    key = jax.random.PRNGKey(0)
    kx, kw_, kg, kb, km, kv = jax.random.split(key, 6)

    x = jax.random.normal(kx, (N, CIN, H, W), dtype=jnp.float32)
    conv_w = jax.random.normal(kw_, (COUT, CIN, KH, KW), dtype=jnp.float32) * 0.1
    gamma = 1.0 + 0.1 * jax.random.normal(kg, (COUT,), dtype=jnp.float32)
    beta = 0.1 * jax.random.normal(kb, (COUT,), dtype=jnp.float32)
    running_mean = 0.05 * jax.random.normal(km, (COUT,), dtype=jnp.float32)
    running_var = 1.0 + 0.1 * jax.random.uniform(kv, (COUT,), dtype=jnp.float32)

    out = basic_conv_forward(x, conv_w, gamma, beta, running_mean, running_var,
                             stride=1, padding=1, dilation=1)
    jax.block_until_ready(out)

    # Sanity check against a pure-JAX reference.
    ref = jax.lax.conv_general_dilated(
        x, conv_w, window_strides=(1, 1), padding=((1, 1), (1, 1)),
        dimension_numbers=("NCHW", "OIHW", "NCHW"))
    scale = gamma / jnp.sqrt(running_var + 1e-5)
    shift = beta - running_mean * scale
    ref = jnp.maximum(ref * scale[None, :, None, None] + shift[None, :, None, None], 0.0)
    assert out.shape == (N, COUT, H, W)
    assert jnp.allclose(out, ref, atol=1e-3, rtol=1e-3)

    print("KERNEL_OK")
</pallas_src>

<mosaic_0001>
module attributes {stable_mosaic.version = 11 : i64} {
  func.func @_conv_bn_relu_kernel(%arg0: i32, %arg1: i32, %arg2: memref<1x1x18x18x4xf32, #tpu.memory_space<vmem>>, %arg3: memref<3x3x4x128xf32, #tpu.memory_space<vmem>>, %arg4: memref<1x128xf32, #tpu.memory_space<vmem>>, %arg5: memref<1x1x256x128xf32, #tpu.memory_space<vmem>>, %arg6: memref<256x128xf32, #tpu.memory_space<vmem>>) attributes {dimension_semantics = [#tpu.dimension_semantics<parallel>, #tpu.dimension_semantics<parallel>], iteration_bounds = array<i64: 2, 1>, scalar_prefetch = 0 : i64, scratch_operands = 1 : i64, tpu.core_type = #tpu.core_type<tc>, window_params = [{transform_indices = @transform_0, window_bounds = array<i64: 1, 1, 18, 18, 4>}, {pipeline_mode = #tpu.pipeline_mode<synchronous>, transform_indices = @transform_1, window_bounds = array<i64: 3, 3, 4, 128>}, {pipeline_mode = #tpu.pipeline_mode<synchronous>, transform_indices = @transform_2, window_bounds = array<i64: 1, 128>}, {transform_indices = @transform_3, window_bounds = array<i64: 1, 1, 256, 128>}]} {
    %c0 = arith.constant 0 : index
    %c0_0 = arith.constant 0 : index
    %c0_1 = arith.constant 0 : index
    %c0_2 = arith.constant 0 : index
    %c0_3 = arith.constant 0 : index
    %0 = vector.load %arg2[%c0, %c0_0, %c0_1, %c0_2, %c0_3] : memref<1x1x18x18x4xf32, #tpu.memory_space<vmem>>, vector<1x1x16x16x4xf32>
    %1 = vector.shape_cast %0 : vector<1x1x16x16x4xf32> to vector<16x16x4xf32>
    %2 = vector.shape_cast %1 : vector<16x16x4xf32> to vector<256x4xf32>
    %c0_4 = arith.constant 0 : index
    %c0_5 = arith.constant 0 : index
    %c0_6 = arith.constant 0 : index
    %c0_7 = arith.constant 0 : index
    %3 = vector.load %arg3[%c0_4, %c0_5, %c0_6, %c0_7] : memref<3x3x4x128xf32, #tpu.memory_space<vmem>>, vector<1x1x4x128xf32>
    %4 = vector.shape_cast %3 : vector<1x1x4x128xf32> to vector<4x128xf32>
    %cst = arith.constant dense<0.000000e+00> : vector<256x128xf32>
    %5 = tpu.matmul %2, %4, %cst {dimension_numbers = #tpu.dot_dimension_numbers<[1], [0], [0], [1], [0, 0, 1, 1], [], []>} : vector<256x4xf32>, vector<4x128xf32>, vector<256x128xf32> -> vector<256x128xf32>
    %c0_8 = arith.constant 0 : index
    %c0_9 = arith.constant 0 : index
    %6 = vector.load %arg6[%c0_8, %c0_9] : memref<256x128xf32, #tpu.memory_space<vmem>>, vector<256x128xf32>
    tpu.vector_store %arg6[%c0_8, %c0_9], %5 {strides = array<i32>} : memref<256x128xf32, #tpu.memory_space<vmem>>, vector<256x128xf32>,
    %c0_10 = arith.constant 0 : index
    %c0_11 = arith.constant 0 : index
    %c0_12 = arith.constant 0 : index
    %c1 = arith.constant 1 : index
    %c0_13 = arith.constant 0 : index
    %7 = vector.load %arg2[%c0_10, %c0_11, %c0_12, %c1, %c0_13] : memref<1x1x18x18x4xf32, #tpu.memory_space<vmem>>, vector<1x1x16x16x4xf32>
    %8 = vector.shape_cast %7 : vector<1x1x16x16x4xf32> to vector<16x16x4xf32>
    %9 = vector.shape_cast %8 : vector<16x16x4xf32> to vector<256x4xf32>
    %c0_14 = arith.constant 0 : index
    %c1_15 = arith.constant 1 : index
    %c0_16 = arith.constant 0 : index
    %c0_17 = arith.constant 0 : index
    %10 = vector.load %arg3[%c0_14, %c1_15, %c0_16, %c0_17] : memref<3x3x4x128xf32, #tpu.memory_space<vmem>>, vector<1x1x4x128xf32>
    %11 = vector.shape_cast %10 : vector<1x1x4x128xf32> to vector<4x128xf32>
    %cst_18 = arith.constant dense<0.000000e+00> : vector<256x128xf32>
    %12 = tpu.matmul %9, %11, %cst_18 {dimension_numbers = #tpu.dot_dimension_numbers<[1], [0], [0], [1], [0, 0, 1, 1], [], []>} : vector<256x4xf32>, vector<4x128xf32>, vector<256x128xf32> -> vector<256x128xf32>
    %c0_19 = arith.constant 0 : index
    %c0_20 = arith.constant 0 : index
    %13 = vector.load %arg6[%c0_19, %c0_20] : memref<256x128xf32, #tpu.memory_space<vmem>>, vector<256x128xf32>
    %14 = arith.addf %13, %12 : vector<256x128xf32>
    %c0_21 = arith.constant 0 : index
    %c0_22 = arith.constant 0 : index
    %15 = vector.load %arg6[%c0_21, %c0_22] : memref<256x128xf32, #tpu.memory_space<vmem>>, vector<256x128xf32>
    tpu.vector_store %arg6[%c0_21, %c0_22], %14 {strides = array<i32>} : memref<256x128xf32, #tpu.memory_space<vmem>>, vector<256x128xf32>,
    %c0_23 = arith.constant 0 : index
    %c0_24 = arith.constant 0 : index
    %c0_25 = arith.constant 0 : index
    %c2 = arith.constant 2 : index
    %c0_26 = arith.constant 0 : index
    %16 = vector.load %arg2[%c0_23, %c0_24, %c0_25, %c2, %c0_26] : memref<1x1x18x18x4xf32, #tpu.memory_space<vmem>>, vector<1x1x16x16x4xf32>
    %17 = vector.shape_cast %16 : vector<1x1x16x16x4xf32> to vector<16x16x4xf32>
    %18 = vector.shape_cast %17 : vector<16x16x4xf32> to vector<256x4xf32>
    %c0_27 = arith.constant 0 : index
    %c2_28 = arith.constant 2 : index
    %c0_29 = arith.constant 0 : index
    %c0_30 = arith.constant 0 : index
    %19 = vector.load %arg3[%c0_27, %c2_28, %c0_29, %c0_30] : memref<3x3x4x128xf32, #tpu.memory_space<vmem>>, vector<1x1x4x128xf32>
    %20 = vector.shape_cast %19 : vector<1x1x4x128xf32> to vector<4x128xf32>
    %cst_31 = arith.constant dense<0.000000e+00> : vector<256x128xf32>
    %21 = tpu.matmul %18, %20, %cst_31 {dimension_numbers = #tpu.dot_dimension_numbers<[1], [0], [0], [1], [0, 0, 1, 1], [], []>} : vector<256x4xf32>, vector<4x128xf32>, vector<256x128xf32> -> vector<256x128xf32>
    %c0_32 = arith.constant 0 : index
    %c0_33 = arith.constant 0 : index
    %22 = vector.load %arg6[%c0_32, %c0_33] : memref<256x128xf32, #tpu.memory_space<vmem>>, vector<256x128xf32>
    %23 = arith.addf %22, %21 : vector<256x128xf32>
    %c0_34 = arith.constant 0 : index
    %c0_35 = arith.constant 0 : index
    %24 = vector.load %arg6[%c0_34, %c0_35] : memref<256x128xf32, #tpu.memory_space<vmem>>, vector<256x128xf32>
    tpu.vector_store %arg6[%c0_34, %c0_35], %23 {strides = array<i32>} : memref<256x128xf32, #tpu.memory_space<vmem>>, vector<256x128xf32>,
    %c0_36 = arith.constant 0 : index
    %c0_37 = arith.constant 0 : index
    %c1_38 = arith.constant 1 : index
    %c0_39 = arith.constant 0 : index
    %c0_40 = arith.constant 0 : index
    %25 = vector.load %arg2[%c0_36, %c0_37, %c1_38, %c0_39, %c0_40] : memref<1x1x18x18x4xf32, #tpu.memory_space<vmem>>, vector<1x1x16x16x4xf32>
    %26 = vector.shape_cast %25 : vector<1x1x16x16x4xf32> to vector<16x16x4xf32>
    %27 = vector.shape_cast %26 : vector<16x16x4xf32> to vector<256x4xf32>
    %c1_41 = arith.constant 1 : index
    %c0_42 = arith.constant 0 : index
    %c0_43 = arith.constant 0 : index
    %c0_44 = arith.constant 0 : index
    %28 = vector.load %arg3[%c1_41, %c0_42, %c0_43, %c0_44] : memref<3x3x4x128xf32, #tpu.memory_space<vmem>>, vector<1x1x4x128xf32>
    %29 = vector.shape_cast %28 : vector<1x1x4x128xf32> to vector<4x128xf32>
    %cst_45 = arith.constant dense<0.000000e+00> : vector<256x128xf32>
    %30 = tpu.matmul %27, %29, %cst_45 {dimension_numbers = #tpu.dot_dimension_numbers<[1], [0], [0], [1], [0, 0, 1, 1], [], []>} : vector<256x4xf32>, vector<4x128xf32>, vector<256x128xf32> -> vector<256x128xf32>
    %c0_46 = arith.constant 0 : index
    %c0_47 = arith.constant 0 : index
    %31 = vector.load %arg6[%c0_46, %c0_47] : memref<256x128xf32, #tpu.memory_space<vmem>>, vector<256x128xf32>
    %32 = arith.addf %31, %30 : vector<256x128xf32>
    %c0_48 = arith.constant 0 : index
    %c0_49 = arith.constant 0 : index
    %33 = vector.load %arg6[%c0_48, %c0_49] : memref<256x128xf32, #tpu.memory_space<vmem>>, vector<256x128xf32>
    tpu.vector_store %arg6[%c0_48, %c0_49], %32 {strides = array<i32>} : memref<256x128xf32, #tpu.memory_space<vmem>>, vector<256x128xf32>,
    %c0_50 = arith.constant 0 : index
    %c0_51 = arith.constant 0 : index
    %c1_52 = arith.constant 1 : index
    %c1_53 = arith.constant 1 : index
    %c0_54 = arith.constant 0 : index
    %34 = vector.load %arg2[%c0_50, %c0_51, %c1_52, %c1_53, %c0_54] : memref<1x1x18x18x4xf32, #tpu.memory_space<vmem>>, vector<1x1x16x16x4xf32>
    %35 = vector.shape_cast %34 : vector<1x1x16x16x4xf32> to vector<16x16x4xf32>
    %36 = vector.shape_cast %35 : vector<16x16x4xf32> to vector<256x4xf32>
    %c1_55 = arith.constant 1 : index
    %c1_56 = arith.constant 1 : index
    %c0_57 = arith.constant 0 : index
    %c0_58 = arith.constant 0 : index
    %37 = vector.load %arg3[%c1_55, %c1_56, %c0_57, %c0_58] : memref<3x3x4x128xf32, #tpu.memory_space<vmem>>, vector<1x1x4x128xf32>
    %38 = vector.shape_cast %37 : vector<1x1x4x128xf32> to vector<4x128xf32>
    %cst_59 = arith.constant dense<0.000000e+00> : vector<256x128xf32>
    %39 = tpu.matmul %36, %38, %cst_59 {dimension_numbers = #tpu.dot_dimension_numbers<[1], [0], [0], [1], [0, 0, 1, 1], [], []>} : vector<256x4xf32>, vector<4x128xf32>, vector<256x128xf32> -> vector<256x128xf32>
    %c0_60 = arith.constant 0 : index
    %c0_61 = arith.constant 0 : index
    %40 = vector.load %arg6[%c0_60, %c0_61] : memref<256x128xf32, #tpu.memory_space<vmem>>, vector<256x128xf32>
    %41 = arith.addf %40, %39 : vector<256x128xf32>
    %c0_62 = arith.constant 0 : index
    %c0_63 = arith.constant 0 : index
    %42 = vector.load %arg6[%c0_62, %c0_63] : memref<256x128xf32, #tpu.memory_space<vmem>>, vector<256x128xf32>
    tpu.vector_store %arg6[%c0_62, %c0_63], %41 {strides = array<i32>} : memref<256x128xf32, #tpu.memory_space<vmem>>, vector<256x128xf32>,
    %c0_64 = arith.constant 0 : index
    %c0_65 = arith.constant 0 : index
    %c1_66 = arith.constant 1 : index
    %c2_67 = arith.constant 2 : index
    %c0_68 = arith.constant 0 : index
    %43 = vector.load %arg2[%c0_64, %c0_65, %c1_66, %c2_67, %c0_68] : memref<1x1x18x18x4xf32, #tpu.memory_space<vmem>>, vector<1x1x16x16x4xf32>
    %44 = vector.shape_cast %43 : vector<1x1x16x16x4xf32> to vector<16x16x4xf32>
    %45 = vector.shape_cast %44 : vector<16x16x4xf32> to vector<256x4xf32>
    %c1_69 = arith.constant 1 : index
    %c2_70 = arith.constant 2 : index
    %c0_71 = arith.constant 0 : index
    %c0_72 = arith.constant 0 : index
    %46 = vector.load %arg3[%c1_69, %c2_70, %c0_71, %c0_72] : memref<3x3x4x128xf32, #tpu.memory_space<vmem>>, vector<1x1x4x128xf32>
    %47 = vector.shape_cast %46 : vector<1x1x4x128xf32> to vector<4x128xf32>
    %cst_73 = arith.constant dense<0.000000e+00> : vector<256x128xf32>
    %48 = tpu.matmul %45, %47, %cst_73 {dimension_numbers = #tpu.dot_dimension_numbers<[1], [0], [0], [1], [0, 0, 1, 1], [], []>} : vector<256x4xf32>, vector<4x128xf32>, vector<256x128xf32> -> vector<256x128xf32>
    %c0_74 = arith.constant 0 : index
    %c0_75 = arith.constant 0 : index
    %49 = vector.load %arg6[%c0_74, %c0_75] : memref<256x128xf32, #tpu.memory_space<vmem>>, vector<256x128xf32>
    %50 = arith.addf %49, %48 : vector<256x128xf32>
    %c0_76 = arith.constant 0 : index
    %c0_77 = arith.constant 0 : index
    %51 = vector.load %arg6[%c0_76, %c0_77] : memref<256x128xf32, #tpu.memory_space<vmem>>, vector<256x128xf32>
    tpu.vector_store %arg6[%c0_76, %c0_77], %50 {strides = array<i32>} : memref<256x128xf32, #tpu.memory_space<vmem>>, vector<256x128xf32>,
    %c0_78 = arith.constant 0 : index
    %c0_79 = arith.constant 0 : index
    %c2_80 = arith.constant 2 : index
    %c0_81 = arith.constant 0 : index
    %c0_82 = arith.constant 0 : index
    %52 = vector.load %arg2[%c0_78, %c0_79, %c2_80, %c0_81, %c0_82] : memref<1x1x18x18x4xf32, #tpu.memory_space<vmem>>, vector<1x1x16x16x4xf32>
    %53 = vector.shape_cast %52 : vector<1x1x16x16x4xf32> to vector<16x16x4xf32>
    %54 = vector.shape_cast %53 : vector<16x16x4xf32> to vector<256x4xf32>
    %c2_83 = arith.constant 2 : index
    %c0_84 = arith.constant 0 : index
    %c0_85 = arith.constant 0 : index
    %c0_86 = arith.constant 0 : index
    %55 = vector.load %arg3[%c2_83, %c0_84, %c0_85, %c0_86] : memref<3x3x4x128xf32, #tpu.memory_space<vmem>>, vector<1x1x4x128xf32>
    %56 = vector.shape_cast %55 : vector<1x1x4x128xf32> to vector<4x128xf32>
    %cst_87 = arith.constant dense<0.000000e+00> : vector<256x128xf32>
    %57 = tpu.matmul %54, %56, %cst_87 {dimension_numbers = #tpu.dot_dimension_numbers<[1], [0], [0], [1], [0, 0, 1, 1], [], []>} : vector<256x4xf32>, vector<4x128xf32>, vector<256x128xf32> -> vector<256x128xf32>
    %c0_88 = arith.constant 0 : index
    %c0_89 = arith.constant 0 : index
    %58 = vector.load %arg6[%c0_88, %c0_89] : memref<256x128xf32, #tpu.memory_space<vmem>>, vector<256x128xf32>
    %59 = arith.addf %58, %57 : vector<256x128xf32>
    %c0_90 = arith.constant 0 : index
    %c0_91 = arith.constant 0 : index
    %60 = vector.load %arg6[%c0_90, %c0_91] : memref<256x128xf32, #tpu.memory_space<vmem>>, vector<256x128xf32>
    tpu.vector_store %arg6[%c0_90, %c0_91], %59 {strides = array<i32>} : memref<256x128xf32, #tpu.memory_space<vmem>>, vector<256x128xf32>,
    %c0_92 = arith.constant 0 : index
    %c0_93 = arith.constant 0 : index
    %c2_94 = arith.constant 2 : index
    %c1_95 = arith.constant 1 : index
    %c0_96 = arith.constant 0 : index
    %61 = vector.load %arg2[%c0_92, %c0_93, %c2_94, %c1_95, %c0_96] : memref<1x1x18x18x4xf32, #tpu.memory_space<vmem>>, vector<1x1x16x16x4xf32>
    %62 = vector.shape_cast %61 : vector<1x1x16x16x4xf32> to vector<16x16x4xf32>
    %63 = vector.shape_cast %62 : vector<16x16x4xf32> to vector<256x4xf32>
    %c2_97 = arith.constant 2 : index
    %c1_98 = arith.constant 1 : index
    %c0_99 = arith.constant 0 : index
    %c0_100 = arith.constant 0 : index
    %64 = vector.load %arg3[%c2_97, %c1_98, %c0_99, %c0_100] : memref<3x3x4x128xf32, #tpu.memory_space<vmem>>, vector<1x1x4x128xf32>
    %65 = vector.shape_cast %64 : vector<1x1x4x128xf32> to vector<4x128xf32>
    %cst_101 = arith.constant dense<0.000000e+00> : vector<256x128xf32>
    %66 = tpu.matmul %63, %65, %cst_101 {dimension_numbers = #tpu.dot_dimension_numbers<[1], [0], [0], [1], [0, 0, 1, 1], [], []>} : vector<256x4xf32>, vector<4x128xf32>, vector<256x128xf32> -> vector<256x128xf32>
    %c0_102 = arith.constant 0 : index
    %c0_103 = arith.constant 0 : index
    %67 = vector.load %arg6[%c0_102, %c0_103] : memref<256x128xf32, #tpu.memory_space<vmem>>, vector<256x128xf32>
    %68 = arith.addf %67, %66 : vector<256x128xf32>
    %c0_104 = arith.constant 0 : index
    %c0_105 = arith.constant 0 : index
    %69 = vector.load %arg6[%c0_104, %c0_105] : memref<256x128xf32, #tpu.memory_space<vmem>>, vector<256x128xf32>
    tpu.vector_store %arg6[%c0_104, %c0_105], %68 {strides = array<i32>} : memref<256x128xf32, #tpu.memory_space<vmem>>, vector<256x128xf32>,
    %c0_106 = arith.constant 0 : index
    %c0_107 = arith.constant 0 : index
    %c2_108 = arith.constant 2 : index
    %c2_109 = arith.constant 2 : index
    %c0_110 = arith.constant 0 : index
    %70 = vector.load %arg2[%c0_106, %c0_107, %c2_108, %c2_109, %c0_110] : memref<1x1x18x18x4xf32, #tpu.memory_space<vmem>>, vector<1x1x16x16x4xf32>
    %71 = vector.shape_cast %70 : vector<1x1x16x16x4xf32> to vector<16x16x4xf32>
    %72 = vector.shape_cast %71 : vector<16x16x4xf32> to vector<256x4xf32>
    %c2_111 = arith.constant 2 : index
    %c2_112 = arith.constant 2 : index
    %c0_113 = arith.constant 0 : index
    %c0_114 = arith.constant 0 : index
    %73 = vector.load %arg3[%c2_111, %c2_112, %c0_113, %c0_114] : memref<3x3x4x128xf32, #tpu.memory_space<vmem>>, vector<1x1x4x128xf32>
    %74 = vector.shape_cast %73 : vector<1x1x4x128xf32> to vector<4x128xf32>
    %cst_115 = arith.constant dense<0.000000e+00> : vector<256x128xf32>
    %75 = tpu.matmul %72, %74, %cst_115 {dimension_numbers = #tpu.dot_dimension_numbers<[1], [0], [0], [1], [0, 0, 1, 1], [], []>} : vector<256x4xf32>, vector<4x128xf32>, vector<256x128xf32> -> vector<256x128xf32>
    %c0_116 = arith.constant 0 : index
    %c0_117 = arith.constant 0 : index
    %76 = vector.load %arg6[%c0_116, %c0_117] : memref<256x128xf32, #tpu.memory_space<vmem>>, vector<256x128xf32>
    %77 = arith.addf %76, %75 : vector<256x128xf32>
    %c0_118 = arith.constant 0 : index
    %c0_119 = arith.constant 0 : index
    %78 = vector.load %arg6[%c0_118, %c0_119] : memref<256x128xf32, #tpu.memory_space<vmem>>, vector<256x128xf32>
    tpu.vector_store %arg6[%c0_118, %c0_119], %77 {strides = array<i32>} : memref<256x128xf32, #tpu.memory_space<vmem>>, vector<256x128xf32>,
    %c0_120 = arith.constant 0 : index
    %c0_121 = arith.constant 0 : index
    %79 = vector.load %arg6[%c0_120, %c0_121] : memref<256x128xf32, #tpu.memory_space<vmem>>, vector<256x128xf32>
    %c0_122 = arith.constant 0 : index
    %c0_123 = arith.constant 0 : index
    %80 = vector.load %arg4[%c0_122, %c0_123] : memref<1x128xf32, #tpu.memory_space<vmem>>, vector<1x128xf32>
    %81 = vector.broadcast %80 : vector<1x128xf32> to vector<256x128xf32>
    %82 = arith.addf %79, %81 : vector<256x128xf32>
    %cst_124 = arith.constant 0.000000e+00 : f32
    %83 = vector.broadcast %cst_124 : f32 to vector<256x128xf32>
    %84 = arith.maximumf %82, %83 : vector<256x128xf32>
    %c0_125 = arith.constant 0 : index
    %c0_126 = arith.constant 0 : index
    %c0_127 = arith.constant 0 : index
    %c0_128 = arith.constant 0 : index
    %85 = vector.load %arg5[%c0_125, %c0_126, %c0_127, %c0_128] : memref<1x1x256x128xf32, #tpu.memory_space<vmem>>, vector<1x1x256x128xf32>
    %86 = vector.shape_cast %85 : vector<1x1x256x128xf32> to vector<256x128xf32>
    %87 = vector.shape_cast %84 : vector<256x128xf32> to vector<1x1x256x128xf32>
    tpu.vector_store %arg5[%c0_125, %c0_126, %c0_127, %c0_128], %87 {strides = array<i32>} : memref<1x1x256x128xf32, #tpu.memory_space<vmem>>, vector<1x1x256x128xf32>,
    return
  }
  func.func @transform_0(%arg0: i32, %arg1: i32) -> (i32, i32, i32, i32, i32) {
    %c0_i32 = arith.constant 0 : i32
    %c0_i32_0 = arith.constant 0 : i32
    %c0_i32_1 = arith.constant 0 : i32
    %c0_i32_2 = arith.constant 0 : i32
    return %arg0, %arg1, %c0_i32, %c0_i32_0, %c0_i32_1 : i32, i32, i32, i32, i32
  }
  func.func @transform_1(%arg0: i32, %arg1: i32) -> (i32, i32, i32, i32) {
    %c0_i32 = arith.constant 0 : i32
    %c0_i32_0 = arith.constant 0 : i32
    %c0_i32_1 = arith.constant 0 : i32
    %c0_i32_2 = arith.constant 0 : i32
    %c0_i32_3 = arith.constant 0 : i32
    return %c0_i32, %c0_i32_0, %c0_i32_1, %c0_i32_2 : i32, i32, i32, i32
  }
  func.func @transform_2(%arg0: i32, %arg1: i32) -> (i32, i32) {
    %c0_i32 = arith.constant 0 : i32
    %c0_i32_0 = arith.constant 0 : i32
    %c0_i32_1 = arith.constant 0 : i32
    return %c0_i32, %c0_i32_0 : i32, i32
  }
  func.func @transform_3(%arg0: i32, %arg1: i32) -> (i32, i32, i32, i32) {
    %c0_i32 = arith.constant 0 : i32
    %c0_i32_0 = arith.constant 0 : i32
    %c0_i32_1 = arith.constant 0 : i32
    return %arg0, %arg1, %c0_i32, %c0_i32_0 : i32, i32, i32, i32
  }
}

</mosaic_0001>

<llo_original>
// kernel: basic_conv_forward.1
$region0: #{basic_conv_forward.1}
  #allocation0 [shape = 'u32[]', space=smem, size = 0x4, offset = 0x4, fixed_abs, tag = 'smem constant byte address 0x4 - core index']
  #allocation1 [shape = 'u32[144,128]{1,0:T(1,128)}', space=vmem, size = 0x12000, scoped, tag = 'internal scratch']
  #allocation2 [shape = 'f32[256,128]{1,0:T(8,128)}', space=vmem, size = 0x20000, scoped, tag = 'scratch operand']
  %s0 = inlined_call_operand.vmem [shape: f32[2,1,18,18,4], index: 0, kind: input, shape index: {}]
  %s1 = inlined_call_operand.vmem [shape: f32[3,3,4,128], index: 1, kind: input, shape index: {}]
  %s2 = inlined_call_operand.vmem [shape: f32[1,128], index: 2, kind: input, shape index: {}]
  %s3 = inlined_call_operand.vmem [shape: f32[2,1,256,128], index: 3, kind: output, shape index: {}]
  %s4 = sld [smem:[#allocation0]]
  $region45: #{basic_conv_forward.1} parent=0
    _
  %s6 = ssub.s32 1, %s4
  %s7 = scalar_select 0, %s6, %s4
  loop: start=0, step=1, limit=4
  $region2: #{basic_conv_forward.1} parent=0 // loop_pre_header
    _
  $region3: #{basic_conv_forward.1} parent=0 // loop_header
    %s9 = sphi 0, %s13
    %p10 = scmp.ge.s32.totalorder %s9, 4
    %s16 = sphi 0, %s28
    %s17 = sphi 0, %s24
    %s18 = sphi 0, %s16
    %s19 = sphi 0, %s17
    %s20 = sphi 0, %s18
    %s21 = sphi 0, %s19
    %s33 = sphi 0, %s35
    %s36 = sphi 0, %s33
    %s37 = sphi 0, %s36
    %s53 = sphi 0, %s37
    %s57 = sphi 0, %s57
    %s59 = sphi 0, %s57
    %s60 = sphi 0, %s59
    %s74 = sphi 0, %s60
    %s78 = sphi 0, %s78
    %s80 = sphi 0, %s78
    %s81 = sphi 0, %s80
    %s95 = sphi 0, %s81
    %s103 = sphi 0, %s105
    %s106 = sphi 0, %s103
    %s107 = sphi 0, %s106
    %s123 = sphi 0, %s107
  $region4: #{basic_conv_forward.1} parent=0 // loop_header_branch
    %12 = sbr.rel (%p10) target = $region8
  $region5: #{basic_conv_forward.1} parent=0 // loop_body
    %s14 = ssub.s32 %s9, 1
    %s15 = ssub.s32 %s9, 2
    %s22 = sadd.s32 1, %s17
    %p23 = scmp.ge.s32.totalorder %s22, 1
    %s24 = scalar_select %p23, 0, %s22
    %s25 = sadd.s32 1, %s16
    %s26 = scalar_select %p23, %s25, %s16
    %p27 = scmp.ge.s32.totalorder %s26, 2
    %s28 = scalar_select %p27, 0, %s26
    %s29 = ssub.s32 %s16, %s28
    %s30 = ssub.s32 %s17, %s24
    %s31 = sor.u32 %s29, %s30
    %p32 = scmp.eq.s32.totalorder %s31, 0
    %s34 = sadd.s32 %s33, 1
    %s35 = scalar_select %p32, %s33, %s34
    %p38 = pneg %p32
    %p39 = scmp.eq.s32.totalorder %s9, 1
    %p40 = por %p38, %p39
    %p41 = scmp.ne.s32.totalorder %s33, %s36
    %p42 = scmp.eq.s32.totalorder %s9, 0
    %p43 = por %p41, %p42
    %p44 = scmp.ne.s32.totalorder %s33, %s36
    %p45 = scmp.eq.s32.totalorder %s14, 1
    %p46 = por %p44, %p45
    %p47 = scmp.ne.s32.totalorder %s36, %s37
    %p48 = scmp.eq.s32.totalorder %s14, 0
    %p49 = por %p47, %p48
    %p50 = scmp.ne.s32.totalorder %s36, %s37
    %p51 = scmp.eq.s32.totalorder %s15, 1
    %p52 = por %p50, %p51
    %p54 = scmp.ne.s32.totalorder %s37, %s53
    %p55 = scmp.eq.s32.totalorder %s15, 0
    %p56 = por %p54, %p55
    %s58 = sadd.s32 %s57, 1
    %p61 = scmp.eq.s32.totalorder %s9, 1
    %p62 = scmp.ne.s32.totalorder %s57, %s59
    %p63 = scmp.eq.s32.totalorder %s9, 0
    %p64 = por %p62, %p63
    %p65 = scmp.ne.s32.totalorder %s57, %s59
    %p66 = scmp.eq.s32.totalorder %s14, 1
    %p67 = por %p65, %p66
    %p68 = scmp.ne.s32.totalorder %s59, %s60
    %p69 = scmp.eq.s32.totalorder %s14, 0
    %p70 = por %p68, %p69
    %p71 = scmp.ne.s32.totalorder %s59, %s60
    %p72 = scmp.eq.s32.totalorder %s15, 1
    %p73 = por %p71, %p72
    %p75 = scmp.ne.s32.totalorder %s60, %s74
    %p76 = scmp.eq.s32.totalorder %s15, 0
    %p77 = por %p75, %p76
    %s79 = sadd.s32 %s78, 1
    %p82 = scmp.eq.s32.totalorder %s9, 1
    %p83 = scmp.ne.s32.totalorder %s78, %s80
    %p84 = scmp.eq.s32.totalorder %s9, 0
    %p85 = por %p83, %p84
    %p86 = scmp.ne.s32.totalorder %s78, %s80
    %p87 = scmp.eq.s32.totalorder %s14, 1
    %p88 = por %p86, %p87
    %p89 = scmp.ne.s32.totalorder %s80, %s81
    %p90 = scmp.eq.s32.totalorder %s14, 0
    %p91 = por %p89, %p90
    %p92 = scmp.ne.s32.totalorder %s80, %s81
    %p93 = scmp.eq.s32.totalorder %s15, 1
    %p94 = por %p92, %p93
    %p96 = scmp.ne.s32.totalorder %s81, %s95
    %p97 = scmp.eq.s32.totalorder %s15, 0
    %p98 = por %p96, %p97
    %s99 = ssub.s32 %s16, %s28
    %s100 = ssub.s32 %s17, %s24
    %s101 = sor.u32 %s99, %s100
    %p102 = scmp.eq.s32.totalorder %s101, 0
    %s104 = sadd.s32 %s103, 1
    %s105 = scalar_select %p102, %s103, %s104
    %p108 = pneg %p102
    %p109 = scmp.eq.s32.totalorder %s9, 1
    %p110 = por %p108, %p109
    %p111 = scmp.ne.s32.totalorder %s103, %s106
    %p112 = scmp.eq.s32.totalorder %s9, 0
    %p113 = por %p111, %p112
    %p114 = scmp.ne.s32.totalorder %s103, %s106
    %p115 = scmp.eq.s32.totalorder %s14, 1
    %p116 = por %p114, %p115
    %p117 = scmp.ne.s32.totalorder %s106, %s107
    %p118 = scmp.eq.s32.totalorder %s14, 0
    %p119 = por %p117, %p118
    %p120 = scmp.ne.s32.totalorder %s106, %s107
    %p121 = scmp.eq.s32.totalorder %s15, 1
    %p122 = por %p120, %p121
    %p124 = scmp.ne.s32.totalorder %s107, %s123
    %p125 = scmp.eq.s32.totalorder %s15, 0
    %p126 = por %p124, %p125
    %p127 = scmp.le.s32.totalorder 1, %s9
    %p128 = scmp.lt.s32.totalorder %s9, 3
    %p129 = pnand %p127, %p128
    %p130 = pneg %p129
    // Predicated region
    $region9: #{basic_conv_forward.1} parent=5 // pred_check
      _
    $region10: #{basic_conv_forward.1} parent=5 // pred_check_branch
      %132 = sbr.rel (%p129) target = $region12
    $region11: #{basic_conv_forward.1} parent=5 // pred_region
      %s133 = ssub.s32 %s9, 1
      // Predicated region
      $region13: #{basic_conv_forward.1} parent=11 // pred_check
        %p134 = pneg %p70
      $region14: #{basic_conv_forward.1} parent=11 // pred_check_branch
        %136 = sbr.rel (%p134) target = $region16
      $region15: #{basic_conv_forward.1} parent=11 // pred_region
        _
      $region16: #{basic_conv_forward.1} parent=11 // pred_fallthru
        _
      // Predicated region
      $region17: #{basic_conv_forward.1} parent=11 // pred_check
        %p137 = pneg %p91
      $region18: #{basic_conv_forward.1} parent=11 // pred_check_branch
        %139 = sbr.rel (%p137) target = $region20
      $region19: #{basic_conv_forward.1} parent=11 // pred_region
        _
      $region20: #{basic_conv_forward.1} parent=11 // pred_fallthru
        _
    $region12: #{basic_conv_forward.1} parent=5 // pred_fallthru
      _
    %p140 = scmp.lt.s32.totalorder %s9, 2
    // Predicated region
    $region21: #{basic_conv_forward.1} parent=5 // pred_check
      %p141 = pneg %p140
    $region22: #{basic_conv_forward.1} parent=5 // pred_check_branch
      %143 = sbr.rel (%p141) target = $region24
    $region23: #{basic_conv_forward.1} parent=5 // pred_region
      // Predicated region
      $region25: #{basic_conv_forward.1} parent=23 // pred_check
        %p144 = pneg %p43
      $region26: #{basic_conv_forward.1} parent=23 // pred_check_branch
        %146 = sbr.rel (%p144) target = $region28
      $region27: #{basic_conv_forward.1} parent=23 // pred_region
        %p147 = scmp.lt.s32.totalorder %s16, 1
        %s148 = scalar_select %p147, %s16, 1
        %p149 = scmp.lt.s32.totalorder %s17, 0
        %s150 = scalar_select %p149, %s17, 0
        %s151 = smul.addr %s150, 54
        %s152 = smul.addr %s148, 54
        %s153 = sadd.s32 %s151, %s152
        %s154 = smul.addr %s153, 8
        %s155 = scalar_lea.vmem %s0, %s154
      $region28: #{basic_conv_forward.1} parent=23 // pred_fallthru
        _
    $region24: #{basic_conv_forward.1} parent=5 // pred_fallthru
      _
    %p156 = scmp.le.s32.totalorder 1, %s9
    %p157 = scmp.lt.s32.totalorder %s9, 3
    %p158 = pnand %p156, %p157
    %p159 = pneg %p158
    // Predicated region
    $region29: #{basic_conv_forward.1} parent=5 // pred_check
      _
    $region30: #{basic_conv_forward.1} parent=5 // pred_check_branch
      %161 = sbr.rel (%p158) target = $region32
    $region31: #{basic_conv_forward.1} parent=5 // pred_region
      %s162 = ssub.s32 %s9, 1
      %p163 = scmp.lt.s32.totalorder %s18, 1
      %s164 = scalar_select %p163, %s18, 1
      %p165 = scmp.lt.s32.totalorder %s19, 0
      %s166 = scalar_select %p165, %s19, 0
      %s167 = smul.addr %s166, 54
      %s168 = smul.addr %s164, 54
      %s169 = sadd.s32 %s167, %s168
      %s170 = smul.addr %s169, 8
      %s171 = scalar_lea.vmem %s0, %s170
      %p172 = pneg %p49
      %p173 = pneg %p46
      %p174 = pneg %p70
      %p175 = pneg %p67
      %p176 = pneg %p91
      %p177 = pneg %p88
      %p178 = pneg %p119
      %p179 = pneg %p116
      %p180 = scmp.lt.s32.totalorder %s18, 1
      %s181 = scalar_select %p180, %s18, 1
      %p182 = scmp.lt.s32.totalorder %s19, 0
      %s183 = scalar_select %p182, %s19, 0
      %s184 = smul.addr %s183, 32
      %s185 = smul.addr %s181, 32
      %s186 = sadd.s32 %s184, %s185
      %s187 = smul.addr %s186, 8
      %s188 = scalar_lea.vmem %s3, %s187
      %p189 = scmp.lt.s32.totalorder %s18, 1
      %s190 = scalar_select %p189, %s18, 1
      %p191 = scmp.lt.s32.totalorder %s19, 0
      %s192 = scalar_select %p191, %s19, 0
      %s193 = smul.addr %s192, 54
      %s194 = smul.addr %s190, 54
      %s195 = sadd.s32 %s193, %s194
      %s196 = smul.addr %s195, 8
      %s197 = scalar_lea.vmem %s0, %s196
      %p198 = scmp.lt.s32.totalorder %s18, 1
      %s199 = scalar_select %p198, %s18, 1
      %p200 = scmp.lt.s32.totalorder %s19, 0
      %s201 = scalar_select %p200, %s19, 0
      %s202 = smul.addr %s201, 32
      %s203 = smul.addr %s199, 32
      %s204 = sadd.s32 %s202, %s203
      %s205 = smul.addr %s204, 8
      %s206 = scalar_lea.vmem %s3, %s205
      %v207 = vld [vmem:[%s197] sm:$0xff]
      %v208 = vld [vmem:[%s197 + $0x8] sm:$0xff]
      %v209 = vld [vmem:[%s197 + $0x18] sm:$0xff]
      %v210 = vld [vmem:[%s197 + $0x20] sm:$0xff]
      %v211 = vld [vmem:[%s197 + $0x30] sm:$0xff]
      %v212 = vld [vmem:[%s197 + $0x38] sm:$0xff]
      %v213 = vld [vmem:[%s197 + $0x48] sm:$0xff]
      %v214 = vld [vmem:[%s197 + $0x50] sm:$0xff]
      %v215 = vld [vmem:[%s197 + $0x60] sm:$0xff]
      %v216 = vld [vmem:[%s197 + $0x68] sm:$0xff]
      %v217 = vld [vmem:[%s197 + $0x78] sm:$0xff]
      %v218 = vld [vmem:[%s197 + $0x80] sm:$0xff]
      %v219 = vld [vmem:[%s197 + $0x90] sm:$0xff]
      %v220 = vld [vmem:[%s197 + $0x98] sm:$0xff]
      %v221 = vld [vmem:[%s197 + $0xa8] sm:$0xff]
      %v222 = vld [vmem:[%s197 + $0xb0] sm:$0xff]
      %v223 = vld [vmem:[%s197 + $0xc0] sm:$0xff]
      %v224 = vld [vmem:[%s197 + $0xc8] sm:$0xff]
      %v225 = vld [vmem:[%s197 + $0xd8] sm:$0xff]
      %v226 = vld [vmem:[%s197 + $0xe0] sm:$0xff]
      %v227 = vld [vmem:[%s197 + $0xf0] sm:$0xff]
      %v228 = vld [vmem:[%s197 + $0xf8] sm:$0xff]
      %v229 = vld [vmem:[%s197 + $0x108] sm:$0xff]
      %v230 = vld [vmem:[%s197 + $0x110] sm:$0xff]
      %v231 = vld [vmem:[%s197 + $0x120] sm:$0xff]
      %v232 = vld [vmem:[%s197 + $0x128] sm:$0xff]
      %v233 = vld [vmem:[%s197 + $0x138] sm:$0xff]
      %v234 = vld [vmem:[%s197 + $0x140] sm:$0xff]
      %v235 = vld [vmem:[%s197 + $0x150] sm:$0xff]
      %v236 = vld [vmem:[%s197 + $0x158] sm:$0xff]
      %v237 = vld [vmem:[%s197 + $0x168] sm:$0xff]
      %v238 = vld [vmem:[%s197 + $0x170] sm:$0xff]
      %v239 = vld [vmem:[%s1] sm:$0xf]
      %vm240 = vcmask 31744
      %v242 = vsel %vm240, %v207, 0
      %v245 = vsel %vm240, %v208, 0
      %v248 = vsel %vm240, %v209, 0
      %v251 = vsel %vm240, %v210, 0
      %v254 = vsel %vm240, %v211, 0
      %v257 = vsel %vm240, %v212, 0
      %v260 = vsel %vm240, %v213, 0
      %v263 = vsel %vm240, %v214, 0
      %v266 = vsel %vm240, %v215, 0
      %v269 = vsel %vm240, %v216, 0
      %v272 = vsel %vm240, %v217, 0
      %v275 = vsel %vm240, %v218, 0
      %v278 = vsel %vm240, %v219, 0
      %v281 = vsel %vm240, %v220, 0
      %v284 = vsel %vm240, %v221, 0
      %v287 = vsel %vm240, %v222, 0
      %v290 = vsel %vm240, %v223, 0
      %v293 = vsel %vm240, %v224, 0
      %v296 = vsel %vm240, %v225, 0
      %v299 = vsel %vm240, %v226, 0
      %v302 = vsel %vm240, %v227, 0
      %v305 = vsel %vm240, %v228, 0
      %v308 = vsel %vm240, %v229, 0
      %v311 = vsel %vm240, %v230, 0
      %v314 = vsel %vm240, %v231, 0
      %v317 = vsel %vm240, %v232, 0
      %v320 = vsel %vm240, %v233, 0
      %v323 = vsel %vm240, %v234, 0
      %v326 = vsel %vm240, %v235, 0
      %v329 = vsel %vm240, %v236, 0
      %v332 = vsel %vm240, %v237, 0
      %v335 = vsel %vm240, %v238, 0
      %vm337 = vcmask 1043456
      %v339 = vsel %vm337, %v239, 0
      %341 = vmatprep.subr.mxu0 0.0
      %342 = vmatpush1.msra.mxu0 0.0
      %343 = vmatprep.subr.mxu0 0.0
      %344 = vmatpush1.msra.mxu0 0.0
      %345 = vmatprep.subr.mxu0 0.0
      %346 = vmatpush1.msra.mxu0 0.0
      %347 = vmatprep.subr.mxu0 0.0
      %348 = vmatpush1.msra.mxu0 0.0
      %349 = vmatprep.subr.mxu0 0.0
      %350 = vmatpush1.msra.mxu0 0.0
      %351 = vmatprep.subr.mxu0 0.0
      %352 = vmatpush1.msra.mxu0 0.0
      %353 = vmatprep.subr.mxu0 0.0
      %354 = vmatpush1.msra.mxu0 0.0
      %355 = vmatprep.subr.mxu0 0.0
      %356 = vmatpush1.msra.mxu0 0.0
      %357 = vmatprep.subr.mxu0 0.0
      %358 = vmatpush1.msra.mxu0 0.0
      %359 = vmatprep.subr.mxu0 0.0
      %360 = vmatpush1.msra.mxu0 0.0
      %361 = vmatprep.subr.mxu0 0.0
      %362 = vmatpush1.msra.mxu0 0.0
      %363 = vmatprep.subr.mxu0 0.0
      %364 = vmatpush1.msra.mxu0 0.0
      %365 = vmatprep.subr.mxu0 0.0
      %366 = vmatpush1.msra.mxu0 0.0
      %367 = vmatprep.subr.mxu0 0.0
      %368 = vmatpush1.msra.mxu0 0.0
      %369 = vmatprep.subr.mxu0 0.0
      %370 = vmatpush1.msra.mxu0 0.0
      %371 = vmatprep.subr.mxu0 0.0
      %372 = vmatpush1.msra.mxu0 %v339
      %373 = vmatprep.subr.mxu0 0.0
      %374 = vmatpush2.msra.mxu0 0.0
      %375 = vmatprep.subr.mxu0 0.0
      %376 = vmatpush2.msra.mxu0 0.0
      %377 = vmatprep.subr.mxu0 0.0
      %378 = vmatpush2.msra.mxu0 0.0
      %379 = vmatprep.subr.mxu0 0.0
      %380 = vmatpush2.msra.mxu0 0.0
      %381 = vmatprep.subr.mxu0 0.0
      %382 = vmatpush2.msra.mxu0 0.0
      %383 = vmatprep.subr.mxu0 0.0
      %384 = vmatpush2.msra.mxu0 0.0
      %385 = vmatprep.subr.mxu0 0.0
      %386 = vmatpush2.msra.mxu0 0.0
      %387 = vmatprep.subr.mxu0 0.0
      %388 = vmatpush2.msra.mxu0 0.0
      %389 = vmatprep.subr.mxu0 0.0
      %390 = vmatpush2.msra.mxu0 0.0
      %391 = vmatprep.subr.mxu0 0.0
      %392 = vmatpush2.msra.mxu0 0.0
      %393 = vmatprep.subr.mxu0 0.0
      %394 = vmatpush2.msra.mxu0 0.0
      %395 = vmatprep.subr.mxu0 0.0
      %396 = vmatpush2.msra.mxu0 0.0
      %397 = vmatprep.subr.mxu0 0.0
      %398 = vmatpush2.msra.mxu0 0.0
      %399 = vmatprep.subr.mxu0 0.0
      %400 = vmatpush2.msra.mxu0 0.0
      %401 = vmatprep.subr.mxu0 0.0
      %402 = vmatpush2.msra.mxu0 0.0
      %403 = vmatprep.subr.mxu0 0.0
      %404 = vmatpush2.msra.mxu0 0.0
      %405 = vmatprep.mubr.f32.mxu0 0.0
      %406 = vmatmul.mubr.f32.gmra.mxu0 %v242
      %v407 = vpop.f32.mrf.mxu0
      %v408 = vadd.f32 0.0, %v407
      %v409 = vpop.f32.mrf.mxu0
      %410 = vmatprep.mubr.f32.mxu0 0.0
      %411 = vmatmul.mubr.f32.gmra.mxu0 %v245
      %v412 = vpop.f32.mrf.mxu0
      %v413 = vadd.f32 0.0, %v412
      %v414 = vpop.f32.mrf.mxu0
      %415 = vmatprep.mubr.f32.mxu0 0.0
      %416 = vmatmul.mubr.f32.gmra.mxu0 %v248
      %v417 = vpop.f32.mrf.mxu0
      %v418 = vadd.f32 0.0, %v417
      %v419 = vpop.f32.mrf.mxu0
      %420 = vmatprep.mubr.f32.mxu0 0.0
      %421 = vmatmul.mubr.f32.gmra.mxu0 %v251
      %v422 = vpop.f32.mrf.mxu0
      %v423 = vadd.f32 0.0, %v422
      %v424 = vpop.f32.mrf.mxu0
      %425 = vmatprep.mubr.f32.mxu0 0.0
      %426 = vmatmul.mubr.f32.gmra.mxu0 %v254
      %v427 = vpop.f32.mrf.mxu0
      %v428 = vadd.f32 0.0, %v427
      %v429 = vpop.f32.mrf.mxu0
      %430 = vmatprep.mubr.f32.mxu0 0.0
      %431 = vmatmul.mubr.f32.gmra.mxu0 %v257
      %v432 = vpop.f32.mrf.mxu0
      %v433 = vadd.f32 0.0, %v432
      %v434 = vpop.f32.mrf.mxu0
      %435 = vmatprep.mubr.f32.mxu0 0.0
      %436 = vmatmul.mubr.f32.gmra.mxu0 %v260
      %v437 = vpop.f32.mrf.mxu0
      %v438 = vadd.f32 0.0, %v437
      %v439 = vpop.f32.mrf.mxu0
      %440 = vmatprep.mubr.f32.mxu0 0.0
      %441 = vmatmul.mubr.f32.gmra.mxu0 %v263
      %v442 = vpop.f32.mrf.mxu0
      %v443 = vadd.f32 0.0, %v442
      %v444 = vpop.f32.mrf.mxu0
      %445 = vmatprep.mubr.f32.mxu0 0.0
      %446 = vmatmul.mubr.f32.gmra.mxu0 %v266
      %v447 = vpop.f32.mrf.mxu0
      %v448 = vadd.f32 0.0, %v447
      %v449 = vpop.f32.mrf.mxu0
      %450 = vmatprep.mubr.f32.mxu0 0.0
      %451 = vmatmul.mubr.f32.gmra.mxu0 %v269
      %v452 = vpop.f32.mrf.mxu0
      %v453 = vadd.f32 0.0, %v452
      %v454 = vpop.f32.mrf.mxu0
      %455 = vmatprep.mubr.f32.mxu0 0.0
      %456 = vmatmul.mubr.f32.gmra.mxu0 %v272
      %v457 = vpop.f32.mrf.mxu0
      %v458 = vadd.f32 0.0, %v457
      %v459 = vpop.f32.mrf.mxu0
      %460 = vmatprep.mubr.f32.mxu0 0.0
      %461 = vmatmul.mubr.f32.gmra.mxu0 %v275
      %v462 = vpop.f32.mrf.mxu0
      %v463 = vadd.f32 0.0, %v462
      %v464 = vpop.f32.mrf.mxu0
      %465 = vmatprep.mubr.f32.mxu0 0.0
      %466 = vmatmul.mubr.f32.gmra.mxu0 %v278
      %v467 = vpop.f32.mrf.mxu0
      %v468 = vadd.f32 0.0, %v467
      %v469 = vpop.f32.mrf.mxu0
      %470 = vmatprep.mubr.f32.mxu0 0.0
      %471 = vmatmul.mubr.f32.gmra.mxu0 %v281
      %v472 = vpop.f32.mrf.mxu0
      %v473 = vadd.f32 0.0, %v472
      %v474 = vpop.f32.mrf.mxu0
      %475 = vmatprep.mubr.f32.mxu0 0.0
      %476 = vmatmul.mubr.f32.gmra.mxu0 %v284
      %v477 = vpop.f32.mrf.mxu0
      %v478 = vadd.f32 0.0, %v477
      %v479 = vpop.f32.mrf.mxu0
      %480 = vmatprep.mubr.f32.mxu0 0.0
      %481 = vmatmul.mubr.f32.gmra.mxu0 %v287
      %v482 = vpop.f32.mrf.mxu0
      %v483 = vadd.f32 0.0, %v482
      %v484 = vpop.f32.mrf.mxu0
      %485 = vmatprep.mubr.f32.mxu0 0.0
      %486 = vmatmul.mubr.f32.gmra.mxu0 %v290
      %v487 = vpop.f32.mrf.mxu0
      %v488 = vadd.f32 0.0, %v487
      %v489 = vpop.f32.mrf.mxu0
      %490 = vmatprep.mubr.f32.mxu0 0.0
      %491 = vmatmul.mubr.f32.gmra.mxu0 %v293
      %v492 = vpop.f32.mrf.mxu0
      %v493 = vadd.f32 0.0, %v492
      %v494 = vpop.f32.mrf.mxu0
      %495 = vmatprep.mubr.f32.mxu0 0.0
      %496 = vmatmul.mubr.f32.gmra.mxu0 %v296
      %v497 = vpop.f32.mrf.mxu0
      %v498 = vadd.f32 0.0, %v497
      %v499 = vpop.f32.mrf.mxu0
      %500 = vmatprep.mubr.f32.mxu0 0.0
      %501 = vmatmul.mubr.f32.gmra.mxu0 %v299
      %v502 = vpop.f32.mrf.mxu0
      %v503 = vadd.f32 0.0, %v502
      %v504 = vpop.f32.mrf.mxu0
      %505 = vmatprep.mubr.f32.mxu0 0.0
      %506 = vmatmul.mubr.f32.gmra.mxu0 %v302
      %v507 = vpop.f32.mrf.mxu0
      %v508 = vadd.f32 0.0, %v507
      %v509 = vpop.f32.mrf.mxu0
      %510 = vmatprep.mubr.f32.mxu0 0.0
      %511 = vmatmul.mubr.f32.gmra.mxu0 %v305
      %v512 = vpop.f32.mrf.mxu0
      %v513 = vadd.f32 0.0, %v512
      %v514 = vpop.f32.mrf.mxu0
      %515 = vmatprep.mubr.f32.mxu0 0.0
      %516 = vmatmul.mubr.f32.gmra.mxu0 %v308
      %v517 = vpop.f32.mrf.mxu0
      %v518 = vadd.f32 0.0, %v517
      %v519 = vpop.f32.mrf.mxu0
      %520 = vmatprep.mubr.f32.mxu0 0.0
      %521 = vmatmul.mubr.f32.gmra.mxu0 %v311
      %v522 = vpop.f32.mrf.mxu0
      %v523 = vadd.f32 0.0, %v522
      %v524 = vpop.f32.mrf.mxu0
      %525 = vmatprep.mubr.f32.mxu0 0.0
      %526 = vmatmul.mubr.f32.gmra.mxu0 %v314
      %v527 = vpop.f32.mrf.mxu0
      %v528 = vadd.f32 0.0, %v527
      %v529 = vpop.f32.mrf.mxu0
      %530 = vmatprep.mubr.f32.mxu0 0.0
      %531 = vmatmul.mubr.f32.gmra.mxu0 %v317
      %v532 = vpop.f32.mrf.mxu0
      %v533 = vadd.f32 0.0, %v532
      %v534 = vpop.f32.mrf.mxu0
      %535 = vmatprep.mubr.f32.mxu0 0.0
      %536 = vmatmul.mubr.f32.gmra.mxu0 %v320
      %v537 = vpop.f32.mrf.mxu0
      %v538 = vadd.f32 0.0, %v537
      %v539 = vpop.f32.mrf.mxu0
      %540 = vmatprep.mubr.f32.mxu0 0.0
      %541 = vmatmul.mubr.f32.gmra.mxu0 %v323
      %v542 = vpop.f32.mrf.mxu0
      %v543 = vadd.f32 0.0, %v542
      %v544 = vpop.f32.mrf.mxu0
      %545 = vmatprep.mubr.f32.mxu0 0.0
      %546 = vmatmul.mubr.f32.gmra.mxu0 %v326
      %v547 = vpop.f32.mrf.mxu0
      %v548 = vadd.f32 0.0, %v547
      %v549 = vpop.f32.mrf.mxu0
      %550 = vmatprep.mubr.f32.mxu0 0.0
      %551 = vmatmul.mubr.f32.gmra.mxu0 %v329
      %v552 = vpop.f32.mrf.mxu0
      %v553 = vadd.f32 0.0, %v552
      %v554 = vpop.f32.mrf.mxu0
      %555 = vmatprep.mubr.f32.mxu0 0.0
      %556 = vmatmul.mubr.f32.gmra.mxu0 %v332
      %v557 = vpop.f32.mrf.mxu0
      %v558 = vadd.f32 0.0, %v557
      %v559 = vpop.f32.mrf.mxu0
      %560 = vmatprep.mubr.f32.mxu0 0.0
      %561 = vmatmul.mubr.f32.gmra.mxu0 %v335
      %v562 = vpop.f32.mrf.mxu0
      %v563 = vadd.f32 0.0, %v562
      %v564 = vpop.f32.mrf.mxu0
      %565 = vdwg.mxu0
      %566 = vst [vmem:[#allocation2] sm:$0xff] %v408
      %567 = vst [vmem:[#allocation2 + $0x8] sm:$0xff] %v413
      %568 = vst [vmem:[#allocation2 + $0x10] sm:$0xff] %v418
      %569 = vst [vmem:[#allocation2 + $0x18] sm:$0xff] %v423
      %570 = vst [vmem:[#allocation2 + $0x20] sm:$0xff] %v428
      %571 = vst [vmem:[#allocation2 + $0x28] sm:$0xff] %v433
      %572 = vst [vmem:[#allocation2 + $0x30] sm:$0xff] %v438
      %573 = vst [vmem:[#allocation2 + $0x38] sm:$0xff] %v443
      %574 = vst [vmem:[#allocation2 + $0x40] sm:$0xff] %v448
      %575 = vst [vmem:[#allocation2 + $0x48] sm:$0xff] %v453
      %576 = vst [vmem:[#allocation2 + $0x50] sm:$0xff] %v458
      %577 = vst [vmem:[#allocation2 + $0x58] sm:$0xff] %v463
      %578 = vst [vmem:[#allocation2 + $0x60] sm:$0xff] %v468
      %579 = vst [vmem:[#allocation2 + $0x68] sm:$0xff] %v473
      %580 = vst [vmem:[#allocation2 + $0x70] sm:$0xff] %v478
      %581 = vst [vmem:[#allocation2 + $0x78] sm:$0xff] %v483
      %582 = vst [vmem:[#allocation2 + $0x80] sm:$0xff] %v488
      %583 = vst [vmem:[#allocation2 + $0x88] sm:$0xff] %v493
      %584 = vst [vmem:[#allocation2 + $0x90] sm:$0xff] %v498
      %585 = vst [vmem:[#allocation2 + $0x98] sm:$0xff] %v503
      %586 = vst [vmem:[#allocation2 + $0xa0] sm:$0xff] %v508
      %587 = vst [vmem:[#allocation2 + $0xa8] sm:$0xff] %v513
      %588 = vst [vmem:[#allocation2 + $0xb0] sm:$0xff] %v518
      %589 = vst [vmem:[#allocation2 + $0xb8] sm:$0xff] %v523
      %590 = vst [vmem:[#allocation2 + $0xc0] sm:$0xff] %v528
      %591 = vst [vmem:[#allocation2 + $0xc8] sm:$0xff] %v533
      %592 = vst [vmem:[#allocation2 + $0xd0] sm:$0xff] %v538
      %593 = vst [vmem:[#allocation2 + $0xd8] sm:$0xff] %v543
      %594 = vst [vmem:[#allocation2 + $0xe0] sm:$0xff] %v548
      %595 = vst [vmem:[#allocation2 + $0xe8] sm:$0xff] %v553
      %596 = vst [vmem:[#allocation2 + $0xf0] sm:$0xff] %v558
      %597 = vst [vmem:[#allocation2 + $0xf8] sm:$0xff] %v563
      %v598 = vld [vmem:[%s197 + $0x1] sm:$0xff]
      %v599 = vld [vmem:[%s197 + $0x9] sm:$0xff]
      %v600 = vld [vmem:[%s197 + $0x19] sm:$0xff]
      %v601 = vld [vmem:[%s197 + $0x21] sm:$0xff]
      %v602 = vld [vmem:[%s197 + $0x31] sm:$0xff]
      %v603 = vld [vmem:[%s197 + $0x39] sm:$0xff]
      %v604 = vld [vmem:[%s197 + $0x49] sm:$0xff]
      %v605 = vld [vmem:[%s197 + $0x51] sm:$0xff]
      %v606 = vld [vmem:[%s197 + $0x61] sm:$0xff]
      %v607 = vld [vmem:[%s197 + $0x69] sm:$0xff]
      %v608 = vld [vmem:[%s197 + $0x79] sm:$0xff]
      %v609 = vld [vmem:[%s197 + $0x81] sm:$0xff]
      %v610 = vld [vmem:[%s197 + $0x91] sm:$0xff]
      %v611 = vld [vmem:[%s197 + $0x99] sm:$0xff]
      %v612 = vld [vmem:[%s197 + $0xa9] sm:$0xff]
      %v613 = vld [vmem:[%s197 + $0xb1] sm:$0xff]
      %v614 = vld [vmem:[%s197 + $0xc1] sm:$0xff]
      %v615 = vld [vmem:[%s197 + $0xc9] sm:$0xff]
      %v616 = vld [vmem:[%s197 + $0xd9] sm:$0xff]
      %v617 = vld [vmem:[%s197 + $0xe1] sm:$0xff]
      %v618 = vld [vmem:[%s197 + $0xf1] sm:$0xff]
      %v619 = vld [vmem:[%s197 + $0xf9] sm:$0xff]
      %v620 = vld [vmem:[%s197 + $0x109] sm:$0xff]
      %v621 = vld [vmem:[%s197 + $0x111] sm:$0xff]
      %v622 = vld [vmem:[%s197 + $0x121] sm:$0xff]
      %v623 = vld [vmem:[%s197 + $0x129] sm:$0xff]
      %v624 = vld [vmem:[%s197 + $0x139] sm:$0xff]
      %v625 = vld [vmem:[%s197 + $0x141] sm:$0xff]
      %v626 = vld [vmem:[%s197 + $0x151] sm:$0xff]
      %v627 = vld [vmem:[%s197 + $0x159] sm:$0xff]
      %v628 = vld [vmem:[%s197 + $0x169] sm:$0xff]
      %v629 = vld [vmem:[%s197 + $0x171] sm:$0xff]
      %s630 = scalar_lea.vmem %s1, 4
      %v631 = vld [vmem:[%s630] sm:$0xf]
      %v633 = vsel %vm240, %v598, 0
      %v636 = vsel %vm240, %v599, 0
      %v639 = vsel %vm240, %v600, 0
      %v642 = vsel %vm240, %v601, 0
      %v645 = vsel %vm240, %v602, 0
      %v648 = vsel %vm240, %v603, 0
      %v651 = vsel %vm240, %v604, 0
      %v654 = vsel %vm240, %v605, 0
      %v657 = vsel %vm240, %v606, 0
      %v660 = vsel %vm240, %v607, 0
      %v663 = vsel %vm240, %v608, 0
      %v666 = vsel %vm240, %v609, 0
      %v669 = vsel %vm240, %v610, 0
      %v672 = vsel %vm240, %v611, 0
      %v675 = vsel %vm240, %v612, 0
      %v678 = vsel %vm240, %v613, 0
      %v681 = vsel %vm240, %v614, 0
      %v684 = vsel %vm240, %v615, 0
      %v687 = vsel %vm240, %v616, 0
      %v690 = vsel %vm240, %v617, 0
      %v693 = vsel %vm240, %v618, 0
      %v696 = vsel %vm240, %v619, 0
      %v699 = vsel %vm240, %v620, 0
      %v702 = vsel %vm240, %v621, 0
      %v705 = vsel %vm240, %v622, 0
      %v708 = vsel %vm240, %v623, 0
      %v711 = vsel %vm240, %v624, 0
      %v714 = vsel %vm240, %v625, 0
      %v717 = vsel %vm240, %v626, 0
      %v720 = vsel %vm240, %v627, 0
      %v723 = vsel %vm240, %v628, 0
      %v726 = vsel %vm240, %v629, 0
      %v729 = vsel %vm337, %v631, 0
      %731 = vmatprep.subr.mxu0 0.0
      %732 = vmatpush1.msra.mxu0 0.0
      %733 = vmatprep.subr.mxu0 0.0
      %734 = vmatpush1.msra.mxu0 0.0
      %735 = vmatprep.subr.mxu0 0.0
      %736 = vmatpush1.msra.mxu0 0.0
      %737 = vmatprep.subr.mxu0 0.0
      %738 = vmatpush1.msra.mxu0 0.0
      %739 = vmatprep.subr.mxu0 0.0
      %740 = vmatpush1.msra.mxu0 0.0
      %741 = vmatprep.subr.mxu0 0.0
      %742 = vmatpush1.msra.mxu0 0.0
      %743 = vmatprep.subr.mxu0 0.0
      %744 = vmatpush1.msra.mxu0 0.0
      %745 = vmatprep.subr.mxu0 0.0
      %746 = vmatpush1.msra.mxu0 0.0
      %747 = vmatprep.subr.mxu0 0.0
      %748 = vmatpush1.msra.mxu0 0.0
      %749 = vmatprep.subr.mxu0 0.0
      %750 = vmatpush1.msra.mxu0 0.0
      %751 = vmatprep.subr.mxu0 0.0
      %752 = vmatpush1.msra.mxu0 0.0
      %753 = vmatprep.subr.mxu0 0.0
      %754 = vmatpush1.msra.mxu0 0.0
      %755 = vmatprep.subr.mxu0 0.0
      %756 = vmatpush1.msra.mxu0 0.0
      %757 = vmatprep.subr.mxu0 0.0
      %758 = vmatpush1.msra.mxu0 0.0
      %759 = vmatprep.subr.mxu0 0.0
      %760 = vmatpush1.msra.mxu0 0.0
      %761 = vmatprep.subr.mxu0 0.0
      %762 = vmatpush1.msra.mxu0 %v729
      %763 = vmatprep.subr.mxu0 0.0
      %764 = vmatpush2.msra.mxu0 0.0
      %765 = vmatprep.subr.mxu0 0.0
      %766 = vmatpush2.msra.mxu0 0.0
      %767 = vmatprep.subr.mxu0 0.0
      %768 = vmatpush2.msra.mxu0 0.0
      %769 = vmatprep.subr.mxu0 0.0
      %770 = vmatpush2.msra.mxu0 0.0
      %771 = vmatprep.subr.mxu0 0.0
      %772 = vmatpush2.msra.mxu0 0.0
      %773 = vmatprep.subr.mxu0 0.0
      %774 = vmatpush2.msra.mxu0 0.0
      %775 = vmatprep.subr.mxu0 0.0
      %776 = vmatpush2.msra.mxu0 0.0
      %777 = vmatprep.subr.mxu0 0.0
      %778 = vmatpush2.msra.mxu0 0.0
      %779 = vmatprep.subr.mxu0 0.0
      %780 = vmatpush2.msra.mxu0 0.0
      %781 = vmatprep.subr.mxu0 0.0
      %782 = vmatpush2.msra.mxu0 0.0
      %783 = vmatprep.subr.mxu0 0.0
      %784 = vmatpush2.msra.mxu0 0.0
      %785 = vmatprep.subr.mxu0 0.0
      %786 = vmatpush2.msra.mxu0 0.0
      %787 = vmatprep.subr.mxu0 0.0
      %788 = vmatpush2.msra.mxu0 0.0
      %789 = vmatprep.subr.mxu0 0.0
      %790 = vmatpush2.msra.mxu0 0.0
      %791 = vmatprep.subr.mxu0 0.0
      %792 = vmatpush2.msra.mxu0 0.0
      %793 = vmatprep.subr.mxu0 0.0
      %794 = vmatpush2.msra.mxu0 0.0
      %795 = vmatprep.mubr.f32.mxu0 0.0
      %796 = vmatmul.mubr.f32.gmra.mxu0 %v633
      %v797 = vpop.f32.mrf.mxu0
      %v798 = vadd.f32 0.0, %v797
      %v799 = vpop.f32.mrf.mxu0
      %800 = vmatprep.mubr.f32.mxu0 0.0
      %801 = vmatmul.mubr.f32.gmra.mxu0 %v636
      %v802 = vpop.f32.mrf.mxu0
      %v803 = vadd.f32 0.0, %v802
      %v804 = vpop.f32.mrf.mxu0
      %805 = vmatprep.mubr.f32.mxu0 0.0
      %806 = vmatmul.mubr.f32.gmra.mxu0 %v639
      %v807 = vpop.f32.mrf.mxu0
      %v808 = vadd.f32 0.0, %v807
      %v809 = vpop.f32.mrf.mxu0
      %810 = vmatprep.mubr.f32.mxu0 0.0
      %811 = vmatmul.mubr.f32.gmra.mxu0 %v642
      %v812 = vpop.f32.mrf.mxu0
      %v813 = vadd.f32 0.0, %v812
      %v814 = vpop.f32.mrf.mxu0
      %815 = vmatprep.mubr.f32.mxu0 0.0
      %816 = vmatmul.mubr.f32.gmra.mxu0 %v645
      %v817 = vpop.f32.mrf.mxu0
      %v818 = vadd.f32 0.0, %v817
      %v819 = vpop.f32.mrf.mxu0
      %820 = vmatprep.mubr.f32.mxu0 0.0
      %821 = vmatmul.mubr.f32.gmra.mxu0 %v648
      %v822 = vpop.f32.mrf.mxu0
      %v823 = vadd.f32 0.0, %v822
      %v824 = vpop.f32.mrf.mxu0
      %825 = vmatprep.mubr.f32.mxu0 0.0
      %826 = vmatmul.mubr.f32.gmra.mxu0 %v651
      %v827 = vpop.f32.mrf.mxu0
      %v828 = vadd.f32 0.0, %v827
      %v829 = vpop.f32.mrf.mxu0
      %830 = vmatprep.mubr.f32.mxu0 0.0
      %831 = vmatmul.mubr.f32.gmra.mxu0 %v654
      %v832 = vpop.f32.mrf.mxu0
      %v833 = vadd.f32 0.0, %v832
      %v834 = vpop.f32.mrf.mxu0
      %835 = vmatprep.mubr.f32.mxu0 0.0
      %836 = vmatmul.mubr.f32.gmra.mxu0 %v657
      %v837 = vpop.f32.mrf.mxu0
      %v838 = vadd.f32 0.0, %v837
      %v839 = vpop.f32.mrf.mxu0
      %840 = vmatprep.mubr.f32.mxu0 0.0
      %841 = vmatmul.mubr.f32.gmra.mxu0 %v660
      %v842 = vpop.f32.mrf.mxu0
      %v843 = vadd.f32 0.0, %v842
      %v844 = vpop.f32.mrf.mxu0
      %845 = vmatprep.mubr.f32.mxu0 0.0
      %846 = vmatmul.mubr.f32.gmra.mxu0 %v663
      %v847 = vpop.f32.mrf.mxu0
      %v848 = vadd.f32 0.0, %v847
      %v849 = vpop.f32.mrf.mxu0
      %850 = vmatprep.mubr.f32.mxu0 0.0
      %851 = vmatmul.mubr.f32.gmra.mxu0 %v666
      %v852 = vpop.f32.mrf.mxu0
      %v853 = vadd.f32 0.0, %v852
      %v854 = vpop.f32.mrf.mxu0
      %855 = vmatprep.mubr.f32.mxu0 0.0
      %856 = vmatmul.mubr.f32.gmra.mxu0 %v669
      %v857 = vpop.f32.mrf.mxu0
      %v858 = vadd.f32 0.0, %v857
      %v859 = vpop.f32.mrf.mxu0
      %860 = vmatprep.mubr.f32.mxu0 0.0
      %861 = vmatmul.mubr.f32.gmra.mxu0 %v672
      %v862 = vpop.f32.mrf.mxu0
      %v863 = vadd.f32 0.0, %v862
      %v864 = vpop.f32.mrf.mxu0
      %865 = vmatprep.mubr.f32.mxu0 0.0
      %866 = vmatmul.mubr.f32.gmra.mxu0 %v675
      %v867 = vpop.f32.mrf.mxu0
      %v868 = vadd.f32 0.0, %v867
      %v869 = vpop.f32.mrf.mxu0
      %870 = vmatprep.mubr.f32.mxu0 0.0
      %871 = vmatmul.mubr.f32.gmra.mxu0 %v678
      %v872 = vpop.f32.mrf.mxu0
      %v873 = vadd.f32 0.0, %v872
      %v874 = vpop.f32.mrf.mxu0
      %875 = vmatprep.mubr.f32.mxu0 0.0
      %876 = vmatmul.mubr.f32.gmra.mxu0 %v681
      %v877 = vpop.f32.mrf.mxu0
      %v878 = vadd.f32 0.0, %v877
      %v879 = vpop.f32.mrf.mxu0
      %880 = vmatprep.mubr.f32.mxu0 0.0
      %881 = vmatmul.mubr.f32.gmra.mxu0 %v684
      %v882 = vpop.f32.mrf.mxu0
      %v883 = vadd.f32 0.0, %v882
      %v884 = vpop.f32.mrf.mxu0
      %885 = vmatprep.mubr.f32.mxu0 0.0
      %886 = vmatmul.mubr.f32.gmra.mxu0 %v687
      %v887 = vpop.f32.mrf.mxu0
      %v888 = vadd.f32 0.0, %v887
      %v889 = vpop.f32.mrf.mxu0
      %890 = vmatprep.mubr.f32.mxu0 0.0
      %891 = vmatmul.mubr.f32.gmra.mxu0 %v690
      %v892 = vpop.f32.mrf.mxu0
      %v893 = vadd.f32 0.0, %v892
      %v894 = vpop.f32.mrf.mxu0
      %895 = vmatprep.mubr.f32.mxu0 0.0
      %896 = vmatmul.mubr.f32.gmra.mxu0 %v693
      %v897 = vpop.f32.mrf.mxu0
      %v898 = vadd.f32 0.0, %v897
      %v899 = vpop.f32.mrf.mxu0
      %900 = vmatprep.mubr.f32.mxu0 0.0
      %901 = vmatmul.mubr.f32.gmra.mxu0 %v696
      %v902 = vpop.f32.mrf.mxu0
      %v903 = vadd.f32 0.0, %v902
      %v904 = vpop.f32.mrf.mxu0
      %905 = vmatprep.mubr.f32.mxu0 0.0
      %906 = vmatmul.mubr.f32.gmra.mxu0 %v699
      %v907 = vpop.f32.mrf.mxu0
      %v908 = vadd.f32 0.0, %v907
      %v909 = vpop.f32.mrf.mxu0
      %910 = vmatprep.mubr.f32.mxu0 0.0
      %911 = vmatmul.mubr.f32.gmra.mxu0 %v702
      %v912 = vpop.f32.mrf.mxu0
      %v913 = vadd.f32 0.0, %v912
      %v914 = vpop.f32.mrf.mxu0
      %915 = vmatprep.mubr.f32.mxu0 0.0
      %916 = vmatmul.mubr.f32.gmra.mxu0 %v705
      %v917 = vpop.f32.mrf.mxu0
      %v918 = vadd.f32 0.0, %v917
      %v919 = vpop.f32.mrf.mxu0
      %920 = vmatprep.mubr.f32.mxu0 0.0
      %921 = vmatmul.mubr.f32.gmra.mxu0 %v708
      %v922 = vpop.f32.mrf.mxu0
      %v923 = vadd.f32 0.0, %v922
      %v924 = vpop.f32.mrf.mxu0
      %925 = vmatprep.mubr.f32.mxu0 0.0
      %926 = vmatmul.mubr.f32.gmra.mxu0 %v711
      %v927 = vpop.f32.mrf.mxu0
      %v928 = vadd.f32 0.0, %v927
      %v929 = vpop.f32.mrf.mxu0
      %930 = vmatprep.mubr.f32.mxu0 0.0
      %931 = vmatmul.mubr.f32.gmra.mxu0 %v714
      %v932 = vpop.f32.mrf.mxu0
      %v933 = vadd.f32 0.0, %v932
      %v934 = vpop.f32.mrf.mxu0
      %935 = vmatprep.mubr.f32.mxu0 0.0
      %936 = vmatmul.mubr.f32.gmra.mxu0 %v717
      %v937 = vpop.f32.mrf.mxu0
      %v938 = vadd.f32 0.0, %v937
      %v939 = vpop.f32.mrf.mxu0
      %940 = vmatprep.mubr.f32.mxu0 0.0
      %941 = vmatmul.mubr.f32.gmra.mxu0 %v720
      %v942 = vpop.f32.mrf.mxu0
      %v943 = vadd.f32 0.0, %v942
      %v944 = vpop.f32.mrf.mxu0
      %945 = vmatprep.mubr.f32.mxu0 0.0
      %946 = vmatmul.mubr.f32.gmra.mxu0 %v723
      %v947 = vpop.f32.mrf.mxu0
      %v948 = vadd.f32 0.0, %v947
      %v949 = vpop.f32.mrf.mxu0
      %950 = vmatprep.mubr.f32.mxu0 0.0
      %951 = vmatmul.mubr.f32.gmra.mxu0 %v726
      %v952 = vpop.f32.mrf.mxu0
      %v953 = vadd.f32 0.0, %v952
      %v954 = vpop.f32.mrf.mxu0
      %955 = vdwg.mxu0
      %v956 = vld [vmem:[#allocation2] sm:$0xff]
      %v957 = vld [vmem:[#allocation2 + $0x8] sm:$0xff]
      %v958 = vld [vmem:[#allocation2 + $0x10] sm:$0xff]
      %v959 = vld [vmem:[#allocation2 + $0x18] sm:$0xff]
      %v960 = vld [vmem:[#allocation2 + $0x20] sm:$0xff]
      %v961 = vld [vmem:[#allocation2 + $0x28] sm:$0xff]
      %v962 = vld [vmem:[#allocation2 + $0x30] sm:$0xff]
      %v963 = vld [vmem:[#allocation2 + $0x38] sm:$0xff]
      %v964 = vld [vmem:[#allocation2 + $0x40] sm:$0xff]
      %v965 = vld [vmem:[#allocation2 + $0x48] sm:$0xff]
      %v966 = vld [vmem:[#allocation2 + $0x50] sm:$0xff]
      %v967 = vld [vmem:[#allocation2 + $0x58] sm:$0xff]
      %v968 = vld [vmem:[#allocation2 + $0x60] sm:$0xff]
      %v969 = vld [vmem:[#allocation2 + $0x68] sm:$0xff]
      %v970 = vld [vmem:[#allocation2 + $0x70] sm:$0xff]
      %v971 = vld [vmem:[#allocation2 + $0x78] sm:$0xff]
      %v972 = vld [vmem:[#allocation2 + $0x80] sm:$0xff]
      %v973 = vld [vmem:[#allocation2 + $0x88] sm:$0xff]
      %v974 = vld [vmem:[#allocation2 + $0x90] sm:$0xff]
      %v975 = vld [vmem:[#allocation2 + $0x98] sm:$0xff]
      %v976 = vld [vmem:[#allocation2 + $0xa0] sm:$0xff]
      %v977 = vld [vmem:[#allocation2 + $0xa8] sm:$0xff]
      %v978 = vld [vmem:[#allocation2 + $0xb0] sm:$0xff]
      %v979 = vld [vmem:[#allocation2 + $0xb8] sm:$0xff]
      %v980 = vld [vmem:[#allocation2 + $0xc0] sm:$0xff]
      %v981 = vld [vmem:[#allocation2 + $0xc8] sm:$0xff]
      %v982 = vld [vmem:[#allocation2 + $0xd0] sm:$0xff]
      %v983 = vld [vmem:[#allocation2 + $0xd8] sm:$0xff]
      %v984 = vld [vmem:[#allocation2 + $0xe0] sm:$0xff]
      %v985 = vld [vmem:[#allocation2 + $0xe8] sm:$0xff]
      %v986 = vld [vmem:[#allocation2 + $0xf0] sm:$0xff]
      %v987 = vld [vmem:[#allocation2 + $0xf8] sm:$0xff]
      %v988 = vadd.f32 %v956, %v798
      %v989 = vadd.f32 %v957, %v803
      %v990 = vadd.f32 %v958, %v808
      %v991 = vadd.f32 %v959, %v813
      %v992 = vadd.f32 %v960, %v818
      %v993 = vadd.f32 %v961, %v823
      %v994 = vadd.f32 %v962, %v828
      %v995 = vadd.f32 %v963, %v833
      %v996 = vadd.f32 %v964, %v838
      %v997 = vadd.f32 %v965, %v843
      %v998 = vadd.f32 %v966, %v848
      %v999 = vadd.f32 %v967, %v853
      %v1000 = vadd.f32 %v968, %v858
      %v1001 = vadd.f32 %v969, %v863
      %v1002 = vadd.f32 %v970, %v868
      %v1003 = vadd.f32 %v971, %v873
      %v1004 = vadd.f32 %v972, %v878
      %v1005 = vadd.f32 %v973, %v883
      %v1006 = vadd.f32 %v974, %v888
      %v1007 = vadd.f32 %v975, %v893
      %v1008 = vadd.f32 %v976, %v898
      %v1009 = vadd.f32 %v977, %v903
      %v1010 = vadd.f32 %v978, %v908
      %v1011 = vadd.f32 %v979, %v913
      %v1012 = vadd.f32 %v980, %v918
      %v1013 = vadd.f32 %v981, %v923
      %v1014 = vadd.f32 %v982, %v928
      %v1015 = vadd.f32 %v983, %v933
      %v1016 = vadd.f32 %v984, %v938
      %v1017 = vadd.f32 %v985, %v943
      %v1018 = vadd.f32 %v986, %v948
      %v1019 = vadd.f32 %v987, %v953
      %1020 = vst [vmem:[#allocation2] sm:$0xff] %v988
      %1021 = vst [vmem:[#allocation2 + $0x8] sm:$0xff] %v989
      %1022 = vst [vmem:[#allocation2 + $0x10] sm:$0xff] %v990
      %1023 = vst [vmem:[#allocation2 + $0x18] sm:$0xff] %v991
      %1024 = vst [vmem:[#allocation2 + $0x20] sm:$0xff] %v992
      %1025 = vst [vmem:[#allocation2 + $0x28] sm:$0xff] %v993
      %1026 = vst [vmem:[#allocation2 + $0x30] sm:$0xff] %v994
      %1027 = vst [vmem:[#allocation2 + $0x38] sm:$0xff] %v995
      %1028 = vst [vmem:[#allocation2 + $0x40] sm:$0xff] %v996
      %1029 = vst [vmem:[#allocation2 + $0x48] sm:$0xff] %v997
      %1030 = vst [vmem:[#allocation2 + $0x50] sm:$0xff] %v998
      %1031 = vst [vmem:[#allocation2 + $0x58] sm:$0xff] %v999
      %1032 = vst [vmem:[#allocation2 + $0x60] sm:$0xff] %v1000
      %1033 = vst [vmem:[#allocation2 + $0x68] sm:$0xff] %v1001
      %1034 = vst [vmem:[#allocation2 + $0x70] sm:$0xff] %v1002
      %1035 = vst [vmem:[#allocation2 + $0x78] sm:$0xff] %v1003
      %1036 = vst [vmem:[#allocation2 + $0x80] sm:$0xff] %v1004
      %1037 = vst [vmem:[#allocation2 + $0x88] sm:$0xff] %v1005
      %1038 = vst [vmem:[#allocation2 + $0x90] sm:$0xff] %v1006
      %1039 = vst [vmem:[#allocation2 + $0x98] sm:$0xff] %v1007
      %1040 = vst [vmem:[#allocation2 + $0xa0] sm:$0xff] %v1008
      %1041 = vst [vmem:[#allocation2 + $0xa8] sm:$0xff] %v1009
      %1042 = vst [vmem:[#allocation2 + $0xb0] sm:$0xff] %v1010
      %1043 = vst [vmem:[#allocation2 + $0xb8] sm:$0xff] %v1011
      %1044 = vst [vmem:[#allocation2 + $0xc0] sm:$0xff] %v1012
      %1045 = vst [vmem:[#allocation2 + $0xc8] sm:$0xff] %v1013
      %1046 = vst [vmem:[#allocation2 + $0xd0] sm:$0xff] %v1014
      %1047 = vst [vmem:[#allocation2 + $0xd8] sm:$0xff] %v1015
      %1048 = vst [vmem:[#allocation2 + $0xe0] sm:$0xff] %v1016
      %1049 = vst [vmem:[#allocation2 + $0xe8] sm:$0xff] %v1017
      %1050 = vst [vmem:[#allocation2 + $0xf0] sm:$0xff] %v1018
      %1051 = vst [vmem:[#allocation2 + $0xf8] sm:$0xff] %v1019
      %v1052 = vld [vmem:[%s197 + $0x2] sm:$0xff]
      %v1053 = vld [vmem:[%s197 + $0xa] sm:$0xff]
      %v1054 = vld [vmem:[%s197 + $0x1a] sm:$0xff]
      %v1055 = vld [vmem:[%s197 + $0x22] sm:$0xff]
      %v1056 = vld [vmem:[%s197 + $0x32] sm:$0xff]
      %v1057 = vld [vmem:[%s197 + $0x3a] sm:$0xff]
      %v1058 = vld [vmem:[%s197 + $0x4a] sm:$0xff]
      %v1059 = vld [vmem:[%s197 + $0x52] sm:$0xff]
      %v1060 = vld [vmem:[%s197 + $0x62] sm:$0xff]
      %v1061 = vld [vmem:[%s197 + $0x6a] sm:$0xff]
      %v1062 = vld [vmem:[%s197 + $0x7a] sm:$0xff]
      %v1063 = vld [vmem:[%s197 + $0x82] sm:$0xff]
      %v1064 = vld [vmem:[%s197 + $0x92] sm:$0xff]
      %v1065 = vld [vmem:[%s197 + $0x9a] sm:$0xff]
      %v1066 = vld [vmem:[%s197 + $0xaa] sm:$0xff]
      %v1067 = vld [vmem:[%s197 + $0xb2] sm:$0xff]
      %v1068 = vld [vmem:[%s197 + $0xc2] sm:$0xff]
      %v1069 = vld [vmem:[%s197 + $0xca] sm:$0xff]
      %v1070 = vld [vmem:[%s197 + $0xda] sm:$0xff]
      %v1071 = vld [vmem:[%s197 + $0xe2] sm:$0xff]
      %v1072 = vld [vmem:[%s197 + $0xf2] sm:$0xff]
      %v1073 = vld [vmem:[%s197 + $0xfa] sm:$0xff]
      %v1074 = vld [vmem:[%s197 + $0x10a] sm:$0xff]
      %v1075 = vld [vmem:[%s197 + $0x112] sm:$0xff]
      %v1076 = vld [vmem:[%s197 + $0x122] sm:$0xff]
      %v1077 = vld [vmem:[%s197 + $0x12a] sm:$0xff]
      %v1078 = vld [vmem:[%s197 + $0x13a] sm:$0xff]
      %v1079 = vld [vmem:[%s197 + $0x142] sm:$0xff]
      %v1080 = vld [vmem:[%s197 + $0x152] sm:$0xff]
      %v1081 = vld [vmem:[%s197 + $0x15a] sm:$0xff]
      %v1082 = vld [vmem:[%s197 + $0x16a] sm:$0xff]
      %v1083 = vld [vmem:[%s197 + $0x172] sm:$0xff]
      %s1084 = scalar_lea.vmem %s1, 8
      %v1085 = vld [vmem:[%s1084] sm:$0xf]
      %v1087 = vsel %vm240, %v1052, 0
      %v1090 = vsel %vm240, %v1053, 0
      %v1093 = vsel %vm240, %v1054, 0
      %v1096 = vsel %vm240, %v1055, 0
      %v1099 = vsel %vm240, %v1056, 0
      %v1102 = vsel %vm240, %v1057, 0
      %v1105 = vsel %vm240, %v1058, 0
      %v1108 = vsel %vm240, %v1059, 0
      %v1111 = vsel %vm240, %v1060, 0
      %v1114 = vsel %vm240, %v1061, 0
      %v1117 = vsel %vm240, %v1062, 0
      %v1120 = vsel %vm240, %v1063, 0
      %v1123 = vsel %vm240, %v1064, 0
      %v1126 = vsel %vm240, %v1065, 0
      %v1129 = vsel %vm240, %v1066, 0
      %v1132 = vsel %vm240, %v1067, 0
      %v1135 = vsel %vm240, %v1068, 0
      %v1138 = vsel %vm240, %v1069, 0
      %v1141 = vsel %vm240, %v1070, 0
      %v1144 = vsel %vm240, %v1071, 0
      %v1147 = vsel %vm240, %v1072, 0
      %v1150 = vsel %vm240, %v1073, 0
      %v1153 = vsel %vm240, %v1074, 0
      %v1156 = vsel %vm240, %v1075, 0
      %v1159 = vsel %vm240, %v1076, 0
      %v1162 = vsel %vm240, %v1077, 0
      %v1165 = vsel %vm240, %v1078, 0
      %v1168 = vsel %vm240, %v1079, 0
      %v1171 = vsel %vm240, %v1080, 0
      %v1174 = vsel %vm240, %v1081, 0
      %v1177 = vsel %vm240, %v1082, 0
      %v1180 = vsel %vm240, %v1083, 0
      %v1183 = vsel %vm337, %v1085, 0
      %1185 = vmatprep.subr.mxu0 0.0
      %1186 = vmatpush1.msra.mxu0 0.0
      %1187 = vmatprep.subr.mxu0 0.0
      %1188 = vmatpush1.msra.mxu0 0.0
      %1189 = vmatprep.subr.mxu0 0.0
      %1190 = vmatpush1.msra.mxu0 0.0
      %1191 = vmatprep.subr.mxu0 0.0
      %1192 = vmatpush1.msra.mxu0 0.0
      %1193 = vmatprep.subr.mxu0 0.0
      %1194 = vmatpush1.msra.mxu0 0.0
      %1195 = vmatprep.subr.mxu0 0.0
      %1196 = vmatpush1.msra.mxu0 0.0
      %1197 = vmatprep.subr.mxu0 0.0
      %1198 = vmatpush1.msra.mxu0 0.0
      %1199 = vmatprep.subr.mxu0 0.0
      %1200 = vmatpush1.msra.mxu0 0.0
      %1201 = vmatprep.subr.mxu0 0.0
      %1202 = vmatpush1.msra.mxu0 0.0
      %1203 = vmatprep.subr.mxu0 0.0
      %1204 = vmatpush1.msra.mxu0 0.0
      %1205 = vmatprep.subr.mxu0 0.0
      %1206 = vmatpush1.msra.mxu0 0.0
      %1207 = vmatprep.subr.mxu0 0.0
      %1208 = vmatpush1.msra.mxu0 0.0
      %1209 = vmatprep.subr.mxu0 0.0
      %1210 = vmatpush1.msra.mxu0 0.0
      %1211 = vmatprep.subr.mxu0 0.0
      %1212 = vmatpush1.msra.mxu0 0.0
      %1213 = vmatprep.subr.mxu0 0.0
      %1214 = vmatpush1.msra.mxu0 0.0
      %1215 = vmatprep.subr.mxu0 0.0
      %1216 = vmatpush1.msra.mxu0 %v1183
      %1217 = vmatprep.subr.mxu0 0.0
      %1218 = vmatpush2.msra.mxu0 0.0
      %1219 = vmatprep.subr.mxu0 0.0
      %1220 = vmatpush2.msra.mxu0 0.0
      %1221 = vmatprep.subr.mxu0 0.0
      %1222 = vmatpush2.msra.mxu0 0.0
      %1223 = vmatprep.subr.mxu0 0.0
      %1224 = vmatpush2.msra.mxu0 0.0
      %1225 = vmatprep.subr.mxu0 0.0
      %1226 = vmatpush2.msra.mxu0 0.0
      %1227 = vmatprep.subr.mxu0 0.0
      %1228 = vmatpush2.msra.mxu0 0.0
      %1229 = vmatprep.subr.mxu0 0.0
      %1230 = vmatpush2.msra.mxu0 0.0
      %1231 = vmatprep.subr.mxu0 0.0
      %1232 = vmatpush2.msra.mxu0 0.0
      %1233 = vmatprep.subr.mxu0 0.0
      %1234 = vmatpush2.msra.mxu0 0.0
      %1235 = vmatprep.subr.mxu0 0.0
      %1236 = vmatpush2.msra.mxu0 0.0
      %1237 = vmatprep.subr.mxu0 0.0
      %1238 = vmatpush2.msra.mxu0 0.0
      %1239 = vmatprep.subr.mxu0 0.0
      %1240 = vmatpush2.msra.mxu0 0.0
      %1241 = vmatprep.subr.mxu0 0.0
      %1242 = vmatpush2.msra.mxu0 0.0
      %1243 = vmatprep.subr.mxu0 0.0
      %1244 = vmatpush2.msra.mxu0 0.0
      %1245 = vmatprep.subr.mxu0 0.0
      %1246 = vmatpush2.msra.mxu0 0.0
      %1247 = vmatprep.subr.mxu0 0.0
      %1248 = vmatpush2.msra.mxu0 0.0
      %1249 = vmatprep.mubr.f32.mxu0 0.0
      %1250 = vmatmul.mubr.f32.gmra.mxu0 %v1087
      %v1251 = vpop.f32.mrf.mxu0
      %v1252 = vadd.f32 0.0, %v1251
      %v1253 = vpop.f32.mrf.mxu0
      %1254 = vmatprep.mubr.f32.mxu0 0.0
      %1255 = vmatmul.mubr.f32.gmra.mxu0 %v1090
      %v1256 = vpop.f32.mrf.mxu0
      %v1257 = vadd.f32 0.0, %v1256
      %v1258 = vpop.f32.mrf.mxu0
      %1259 = vmatprep.mubr.f32.mxu0 0.0
      %1260 = vmatmul.mubr.f32.gmra.mxu0 %v1093
      %v1261 = vpop.f32.mrf.mxu0
      %v1262 = vadd.f32 0.0, %v1261
      %v1263 = vpop.f32.mrf.mxu0
      %1264 = vmatprep.mubr.f32.mxu0 0.0
      %1265 = vmatmul.mubr.f32.gmra.mxu0 %v1096
      %v1266 = vpop.f32.mrf.mxu0
      %v1267 = vadd.f32 0.0, %v1266
      %v1268 = vpop.f32.mrf.mxu0
      %1269 = vmatprep.mubr.f32.mxu0 0.0
      %1270 = vmatmul.mubr.f32.gmra.mxu0 %v1099
      %v1271 = vpop.f32.mrf.mxu0
      %v1272 = vadd.f32 0.0, %v1271
      %v1273 = vpop.f32.mrf.mxu0
      %1274 = vmatprep.mubr.f32.mxu0 0.0
      %1275 = vmatmul.mubr.f32.gmra.mxu0 %v1102
      %v1276 = vpop.f32.mrf.mxu0
      %v1277 = vadd.f32 0.0, %v1276
      %v1278 = vpop.f32.mrf.mxu0
      %1279 = vmatprep.mubr.f32.mxu0 0.0
      %1280 = vmatmul.mubr.f32.gmra.mxu0 %v1105
      %v1281 = vpop.f32.mrf.mxu0
      %v1282 = vadd.f32 0.0, %v1281
      %v1283 = vpop.f32.mrf.mxu0
      %1284 = vmatprep.mubr.f32.mxu0 0.0
      %1285 = vmatmul.mubr.f32.gmra.mxu0 %v1108
      %v1286 = vpop.f32.mrf.mxu0
      %v1287 = vadd.f32 0.0, %v1286
      %v1288 = vpop.f32.mrf.mxu0
      %1289 = vmatprep.mubr.f32.mxu0 0.0
      %1290 = vmatmul.mubr.f32.gmra.mxu0 %v1111
      %v1291 = vpop.f32.mrf.mxu0
      %v1292 = vadd.f32 0.0, %v1291
      %v1293 = vpop.f32.mrf.mxu0
      %1294 = vmatprep.mubr.f32.mxu0 0.0
      %1295 = vmatmul.mubr.f32.gmra.mxu0 %v1114
      %v1296 = vpop.f32.mrf.mxu0
      %v1297 = vadd.f32 0.0, %v1296
      %v1298 = vpop.f32.mrf.mxu0
      %1299 = vmatprep.mubr.f32.mxu0 0.0
      %1300 = vmatmul.mubr.f32.gmra.mxu0 %v1117
      %v1301 = vpop.f32.mrf.mxu0
      %v1302 = vadd.f32 0.0, %v1301
      %v1303 = vpop.f32.mrf.mxu0
      %1304 = vmatprep.mubr.f32.mxu0 0.0
      %1305 = vmatmul.mubr.f32.gmra.mxu0 %v1120
      %v1306 = vpop.f32.mrf.mxu0
      %v1307 = vadd.f32 0.0, %v1306
      %v1308 = vpop.f32.mrf.mxu0
      %1309 = vmatprep.mubr.f32.mxu0 0.0
      %1310 = vmatmul.mubr.f32.gmra.mxu0 %v1123
      %v1311 = vpop.f32.mrf.mxu0
      %v1312 = vadd.f32 0.0, %v1311
      %v1313 = vpop.f32.mrf.mxu0
      %1314 = vmatprep.mubr.f32.mxu0 0.0
      %1315 = vmatmul.mubr.f32.gmra.mxu0 %v1126
      %v1316 = vpop.f32.mrf.mxu0
      %v1317 = vadd.f32 0.0, %v1316
      %v1318 = vpop.f32.mrf.mxu0
      %1319 = vmatprep.mubr.f32.mxu0 0.0
      %1320 = vmatmul.mubr.f32.gmra.mxu0 %v1129
      %v1321 = vpop.f32.mrf.mxu0
      %v1322 = vadd.f32 0.0, %v1321
      %v1323 = vpop.f32.mrf.mxu0
      %1324 = vmatprep.mubr.f32.mxu0 0.0
      %1325 = vmatmul.mubr.f32.gmra.mxu0 %v1132
      %v1326 = vpop.f32.mrf.mxu0
      %v1327 = vadd.f32 0.0, %v1326
      %v1328 = vpop.f32.mrf.mxu0
      %1329 = vmatprep.mubr.f32.mxu0 0.0
      %1330 = vmatmul.mubr.f32.gmra.mxu0 %v1135
      %v1331 = vpop.f32.mrf.mxu0
      %v1332 = vadd.f32 0.0, %v1331
      %v1333 = vpop.f32.mrf.mxu0
      %1334 = vmatprep.mubr.f32.mxu0 0.0
      %1335 = vmatmul.mubr.f32.gmra.mxu0 %v1138
      %v1336 = vpop.f32.mrf.mxu0
      %v1337 = vadd.f32 0.0, %v1336
      %v1338 = vpop.f32.mrf.mxu0
      %1339 = vmatprep.mubr.f32.mxu0 0.0
      %1340 = vmatmul.mubr.f32.gmra.mxu0 %v1141
      %v1341 = vpop.f32.mrf.mxu0
      %v1342 = vadd.f32 0.0, %v1341
      %v1343 = vpop.f32.mrf.mxu0
      %1344 = vmatprep.mubr.f32.mxu0 0.0
      %1345 = vmatmul.mubr.f32.gmra.mxu0 %v1144
      %v1346 = vpop.f32.mrf.mxu0
      %v1347 = vadd.f32 0.0, %v1346
      %v1348 = vpop.f32.mrf.mxu0
      %1349 = vmatprep.mubr.f32.mxu0 0.0
      %1350 = vmatmul.mubr.f32.gmra.mxu0 %v1147
      %v1351 = vpop.f32.mrf.mxu0
      %v1352 = vadd.f32 0.0, %v1351
      %v1353 = vpop.f32.mrf.mxu0
      %1354 = vmatprep.mubr.f32.mxu0 0.0
      %1355 = vmatmul.mubr.f32.gmra.mxu0 %v1150
      %v1356 = vpop.f32.mrf.mxu0
      %v1357 = vadd.f32 0.0, %v1356
      %v1358 = vpop.f32.mrf.mxu0
      %1359 = vmatprep.mubr.f32.mxu0 0.0
      %1360 = vmatmul.mubr.f32.gmra.mxu0 %v1153
      %v1361 = vpop.f32.mrf.mxu0
      %v1362 = vadd.f32 0.0, %v1361
      %v1363 = vpop.f32.mrf.mxu0
      %1364 = vmatprep.mubr.f32.mxu0 0.0
      %1365 = vmatmul.mubr.f32.gmra.mxu0 %v1156
      %v1366 = vpop.f32.mrf.mxu0
      %v1367 = vadd.f32 0.0, %v1366
      %v1368 = vpop.f32.mrf.mxu0
      %1369 = vmatprep.mubr.f32.mxu0 0.0
      %1370 = vmatmul.mubr.f32.gmra.mxu0 %v1159
      %v1371 = vpop.f32.mrf.mxu0
      %v1372 = vadd.f32 0.0, %v1371
      %v1373 = vpop.f32.mrf.mxu0
      %1374 = vmatprep.mubr.f32.mxu0 0.0
      %1375 = vmatmul.mubr.f32.gmra.mxu0 %v1162
      %v1376 = vpop.f32.mrf.mxu0
      %v1377 = vadd.f32 0.0, %v1376
      %v1378 = vpop.f32.mrf.mxu0
      %1379 = vmatprep.mubr.f32.mxu0 0.0
      %1380 = vmatmul.mubr.f32.gmra.mxu0 %v1165
      %v1381 = vpop.f32.mrf.mxu0
      %v1382 = vadd.f32 0.0, %v1381
      %v1383 = vpop.f32.mrf.mxu0
      %1384 = vmatprep.mubr.f32.mxu0 0.0
      %1385 = vmatmul.mubr.f32.gmra.mxu0 %v1168
      %v1386 = vpop.f32.mrf.mxu0
      %v1387 = vadd.f32 0.0, %v1386
      %v1388 = vpop.f32.mrf.mxu0
      %1389 = vmatprep.mubr.f32.mxu0 0.0
      %1390 = vmatmul.mubr.f32.gmra.mxu0 %v1171
      %v1391 = vpop.f32.mrf.mxu0
      %v1392 = vadd.f32 0.0, %v1391
      %v1393 = vpop.f32.mrf.mxu0
      %1394 = vmatprep.mubr.f32.mxu0 0.0
      %1395 = vmatmul.mubr.f32.gmra.mxu0 %v1174
      %v1396 = vpop.f32.mrf.mxu0
      %v1397 = vadd.f32 0.0, %v1396
      %v1398 = vpop.f32.mrf.mxu0
      %1399 = vmatprep.mubr.f32.mxu0 0.0
      %1400 = vmatmul.mubr.f32.gmra.mxu0 %v1177
      %v1401 = vpop.f32.mrf.mxu0
      %v1402 = vadd.f32 0.0, %v1401
      %v1403 = vpop.f32.mrf.mxu0
      %1404 = vmatprep.mubr.f32.mxu0 0.0
      %1405 = vmatmul.mubr.f32.gmra.mxu0 %v1180
      %v1406 = vpop.f32.mrf.mxu0
      %v1407 = vadd.f32 0.0, %v1406
      %v1408 = vpop.f32.mrf.mxu0
      %1409 = vdwg.mxu0
      %v1410 = vld [vmem:[#allocation2] sm:$0xff]
      %v1411 = vld [vmem:[#allocation2 + $0x8] sm:$0xff]
      %v1412 = vld [vmem:[#allocation2 + $0x10] sm:$0xff]
      %v1413 = vld [vmem:[#allocation2 + $0x18] sm:$0xff]
      %v1414 = vld [vmem:[#allocation2 + $0x20] sm:$0xff]
      %v1415 = vld [vmem:[#allocation2 + $0x28] sm:$0xff]
      %v1416 = vld [vmem:[#allocation2 + $0x30] sm:$0xff]
      %v1417 = vld [vmem:[#allocation2 + $0x38] sm:$0xff]
      %v1418 = vld [vmem:[#allocation2 + $0x40] sm:$0xff]
      %v1419 = vld [vmem:[#allocation2 + $0x48] sm:$0xff]
      %v1420 = vld [vmem:[#allocation2 + $0x50] sm:$0xff]
      %v1421 = vld [vmem:[#allocation2 + $0x58] sm:$0xff]
      %v1422 = vld [vmem:[#allocation2 + $0x60] sm:$0xff]
      %v1423 = vld [vmem:[#allocation2 + $0x68] sm:$0xff]
      %v1424 = vld [vmem:[#allocation2 + $0x70] sm:$0xff]
      %v1425 = vld [vmem:[#allocation2 + $0x78] sm:$0xff]
      %v1426 = vld [vmem:[#allocation2 + $0x80] sm:$0xff]
      %v1427 = vld [vmem:[#allocation2 + $0x88] sm:$0xff]
      %v1428 = vld [vmem:[#allocation2 + $0x90] sm:$0xff]
      %v1429 = vld [vmem:[#allocation2 + $0x98] sm:$0xff]
      %v1430 = vld [vmem:[#allocation2 + $0xa0] sm:$0xff]
      %v1431 = vld [vmem:[#allocation2 + $0xa8] sm:$0xff]
      %v1432 = vld [vmem:[#allocation2 + $0xb0] sm:$0xff]
      %v1433 = vld [vmem:[#allocation2 + $0xb8] sm:$0xff]
      %v1434 = vld [vmem:[#allocation2 + $0xc0] sm:$0xff]
      %v1435 = vld [vmem:[#allocation2 + $0xc8] sm:$0xff]
      %v1436 = vld [vmem:[#allocation2 + $0xd0] sm:$0xff]
      %v1437 = vld [vmem:[#allocation2 + $0xd8] sm:$0xff]
      %v1438 = vld [vmem:[#allocation2 + $0xe0] sm:$0xff]
      %v1439 = vld [vmem:[#allocation2 + $0xe8] sm:$0xff]
      %v1440 = vld [vmem:[#allocation2 + $0xf0] sm:$0xff]
      %v1441 = vld [vmem:[#allocation2 + $0xf8] sm:$0xff]
      %v1442 = vadd.f32 %v1410, %v1252
      %v1443 = vadd.f32 %v1411, %v1257
      %v1444 = vadd.f32 %v1412, %v1262
      %v1445 = vadd.f32 %v1413, %v1267
      %v1446 = vadd.f32 %v1414, %v1272
      %v1447 = vadd.f32 %v1415, %v1277
      %v1448 = vadd.f32 %v1416, %v1282
      %v1449 = vadd.f32 %v1417, %v1287
      %v1450 = vadd.f32 %v1418, %v1292
      %v1451 = vadd.f32 %v1419, %v1297
      %v1452 = vadd.f32 %v1420, %v1302
      %v1453 = vadd.f32 %v1421, %v1307
      %v1454 = vadd.f32 %v1422, %v1312
      %v1455 = vadd.f32 %v1423, %v1317
      %v1456 = vadd.f32 %v1424, %v1322
      %v1457 = vadd.f32 %v1425, %v1327
      %v1458 = vadd.f32 %v1426, %v1332
      %v1459 = vadd.f32 %v1427, %v1337
      %v1460 = vadd.f32 %v1428, %v1342
      %v1461 = vadd.f32 %v1429, %v1347
      %v1462 = vadd.f32 %v1430, %v1352
      %v1463 = vadd.f32 %v1431, %v1357
      %v1464 = vadd.f32 %v1432, %v1362
      %v1465 = vadd.f32 %v1433, %v1367
      %v1466 = vadd.f32 %v1434, %v1372
      %v1467 = vadd.f32 %v1435, %v1377
      %v1468 = vadd.f32 %v1436, %v1382
      %v1469 = vadd.f32 %v1437, %v1387
      %v1470 = vadd.f32 %v1438, %v1392
      %v1471 = vadd.f32 %v1439, %v1397
      %v1472 = vadd.f32 %v1440, %v1402
      %v1473 = vadd.f32 %v1441, %v1407
      %1474 = vst [vmem:[#allocation2] sm:$0xff] %v1442
      %1475 = vst [vmem:[#allocation2 + $0x8] sm:$0xff] %v1443
      %1476 = vst [vmem:[#allocation2 + $0x10] sm:$0xff] %v1444
      %1477 = vst [vmem:[#allocation2 + $0x18] sm:$0xff] %v1445
      %1478 = vst [vmem:[#allocation2 + $0x20] sm:$0xff] %v1446
      %1479 = vst [vmem:[#allocation2 + $0x28] sm:$0xff] %v1447
      %1480 = vst [vmem:[#allocation2 + $0x30] sm:$0xff] %v1448
      %1481 = vst [vmem:[#allocation2 + $0x38] sm:$0xff] %v1449
      %1482 = vst [vmem:[#allocation2 + $0x40] sm:$0xff] %v1450
      %1483 = vst [vmem:[#allocation2 + $0x48] sm:$0xff] %v1451
      %1484 = vst [vmem:[#allocation2 + $0x50] sm:$0xff] %v1452
      %1485 = vst [vmem:[#allocation2 + $0x58] sm:$0xff] %v1453
      %1486 = vst [vmem:[#allocation2 + $0x60] sm:$0xff] %v1454
      %1487 = vst [vmem:[#allocation2 + $0x68] sm:$0xff] %v1455
      %1488 = vst [vmem:[#allocation2 + $0x70] sm:$0xff] %v1456
      %1489 = vst [vmem:[#allocation2 + $0x78] sm:$0xff] %v1457
      %1490 = vst [vmem:[#allocation2 + $0x80] sm:$0xff] %v1458
      %1491 = vst [vmem:[#allocation2 + $0x88] sm:$0xff] %v1459
      %1492 = vst [vmem:[#allocation2 + $0x90] sm:$0xff] %v1460
      %1493 = vst [vmem:[#allocation2 + $0x98] sm:$0xff] %v1461
      %1494 = vst [vmem:[#allocation2 + $0xa0] sm:$0xff] %v1462
      %1495 = vst [vmem:[#allocation2 + $0xa8] sm:$0xff] %v1463
      %1496 = vst [vmem:[#allocation2 + $0xb0] sm:$0xff] %v1464
      %1497 = vst [vmem:[#allocation2 + $0xb8] sm:$0xff] %v1465
      %1498 = vst [vmem:[#allocation2 + $0xc0] sm:$0xff] %v1466
      %1499 = vst [vmem:[#allocation2 + $0xc8] sm:$0xff] %v1467
      %1500 = vst [vmem:[#allocation2 + $0xd0] sm:$0xff] %v1468
      %1501 = vst [vmem:[#allocation2 + $0xd8] sm:$0xff] %v1469
      %1502 = vst [vmem:[#allocation2 + $0xe0] sm:$0xff] %v1470
      %1503 = vst [vmem:[#allocation2 + $0xe8] sm:$0xff] %v1471
      %1504 = vst [vmem:[#allocation2 + $0xf0] sm:$0xff] %v1472
      %1505 = vst [vmem:[#allocation2 + $0xf8] sm:$0xff] %v1473
      %s1506 = scalar_lea.vmem %s197, 24
      %v1507 = vld [vmem:[%s1506] sm:$0xff]
      %v1508 = vld [vmem:[%s1506 + $0x8] sm:$0xff]
      %v1509 = vld [vmem:[%s1506 + $0x18] sm:$0xff]
      %v1510 = vld [vmem:[%s1506 + $0x20] sm:$0xff]
      %v1511 = vld [vmem:[%s1506 + $0x30] sm:$0xff]
      %v1512 = vld [vmem:[%s1506 + $0x38] sm:$0xff]
      %v1513 = vld [vmem:[%s1506 + $0x48] sm:$0xff]
      %v1514 = vld [vmem:[%s1506 + $0x50] sm:$0xff]
      %v1515 = vld [vmem:[%s1506 + $0x60] sm:$0xff]
      %v1516 = vld [vmem:[%s1506 + $0x68] sm:$0xff]
      %v1517 = vld [vmem:[%s1506 + $0x78] sm:$0xff]
      %v1518 = vld [vmem:[%s1506 + $0x80] sm:$0xff]
      %v1519 = vld [vmem:[%s1506 + $0x90] sm:$0xff]
      %v1520 = vld [vmem:[%s1506 + $0x98] sm:$0xff]
      %v1521 = vld [vmem:[%s1506 + $0xa8] sm:$0xff]
      %v1522 = vld [vmem:[%s1506 + $0xb0] sm:$0xff]
      %v1523 = vld [vmem:[%s1506 + $0xc0] sm:$0xff]
      %v1524 = vld [vmem:[%s1506 + $0xc8] sm:$0xff]
      %v1525 = vld [vmem:[%s1506 + $0xd8] sm:$0xff]
      %v1526 = vld [vmem:[%s1506 + $0xe0] sm:$0xff]
      %v1527 = vld [vmem:[%s1506 + $0xf0] sm:$0xff]
      %v1528 = vld [vmem:[%s1506 + $0xf8] sm:$0xff]
      %v1529 = vld [vmem:[%s1506 + $0x108] sm:$0xff]
      %v1530 = vld [vmem:[%s1506 + $0x110] sm:$0xff]
      %v1531 = vld [vmem:[%s1506 + $0x120] sm:$0xff]
      %v1532 = vld [vmem:[%s1506 + $0x128] sm:$0xff]
      %v1533 = vld [vmem:[%s1506 + $0x138] sm:$0xff]
      %v1534 = vld [vmem:[%s1506 + $0x140] sm:$0xff]
      %v1535 = vld [vmem:[%s1506 + $0x150] sm:$0xff]
      %v1536 = vld [vmem:[%s1506 + $0x158] sm:$0xff]
      %v1537 = vld [vmem:[%s1506 + $0x168] sm:$0xff]
      %v1538 = vld [vmem:[%s1506 + $0x170] sm:$0xff]
      %s1539 = scalar_lea.vmem %s1, 12
      %v1540 = vld [vmem:[%s1539] sm:$0xf]
      %v1542 = vsel %vm240, %v1507, 0
      %v1545 = vsel %vm240, %v1508, 0
      %v1548 = vsel %vm240, %v1509, 0
      %v1551 = vsel %vm240, %v1510, 0
      %v1554 = vsel %vm240, %v1511, 0
      %v1557 = vsel %vm240, %v1512, 0
      %v1560 = vsel %vm240, %v1513, 0
      %v1563 = vsel %vm240, %v1514, 0
      %v1566 = vsel %vm240, %v1515, 0
      %v1569 = vsel %vm240, %v1516, 0
      %v1572 = vsel %vm240, %v1517, 0
      %v1575 = vsel %vm240, %v1518, 0
      %v1578 = vsel %vm240, %v1519, 0
      %v1581 = vsel %vm240, %v1520, 0
      %v1584 = vsel %vm240, %v1521, 0
      %v1587 = vsel %vm240, %v1522, 0
      %v1590 = vsel %vm240, %v1523, 0
      %v1593 = vsel %vm240, %v1524, 0
      %v1596 = vsel %vm240, %v1525, 0
      %v1599 = vsel %vm240, %v1526, 0
      %v1602 = vsel %vm240, %v1527, 0
      %v1605 = vsel %vm240, %v1528, 0
      %v1608 = vsel %vm240, %v1529, 0
      %v1611 = vsel %vm240, %v1530, 0
      %v1614 = vsel %vm240, %v1531, 0
      %v1617 = vsel %vm240, %v1532, 0
      %v1620 = vsel %vm240, %v1533, 0
      %v1623 = vsel %vm240, %v1534, 0
      %v1626 = vsel %vm240, %v1535, 0
      %v1629 = vsel %vm240, %v1536, 0
      %v1632 = vsel %vm240, %v1537, 0
      %v1635 = vsel %vm240, %v1538, 0
      %v1638 = vsel %vm337, %v1540, 0
      %1640 = vmatprep.subr.mxu0 0.0
      %1641 = vmatpush1.msra.mxu0 0.0
      %1642 = vmatprep.subr.mxu0 0.0
      %1643 = vmatpush1.msra.mxu0 0.0
      %1644 = vmatprep.subr.mxu0 0.0
      %1645 = vmatpush1.msra.mxu0 0.0
      %1646 = vmatprep.subr.mxu0 0.0
      %1647 = vmatpush1.msra.mxu0 0.0
      %1648 = vmatprep.subr.mxu0 0.0
      %1649 = vmatpush1.msra.mxu0 0.0
      %1650 = vmatprep.subr.mxu0 0.0
      %1651 = vmatpush1.msra.mxu0 0.0
      %1652 = vmatprep.subr.mxu0 0.0
      %1653 = vmatpush1.msra.mxu0 0.0
      %1654 = vmatprep.subr.mxu0 0.0
      %1655 = vmatpush1.msra.mxu0 0.0
      %1656 = vmatprep.subr.mxu0 0.0
      %1657 = vmatpush1.msra.mxu0 0.0
      %1658 = vmatprep.subr.mxu0 0.0
      %1659 = vmatpush1.msra.mxu0 0.0
      %1660 = vmatprep.subr.mxu0 0.0
      %1661 = vmatpush1.msra.mxu0 0.0
      %1662 = vmatprep.subr.mxu0 0.0
      %1663 = vmatpush1.msra.mxu0 0.0
      %1664 = vmatprep.subr.mxu0 0.0
      %1665 = vmatpush1.msra.mxu0 0.0
      %1666 = vmatprep.subr.mxu0 0.0
      %1667 = vmatpush1.msra.mxu0 0.0
      %1668 = vmatprep.subr.mxu0 0.0
      %1669 = vmatpush1.msra.mxu0 0.0
      %1670 = vmatprep.subr.mxu0 0.0
      %1671 = vmatpush1.msra.mxu0 %v1638
      %1672 = vmatprep.subr.mxu0 0.0
      %1673 = vmatpush2.msra.mxu0 0.0
      %1674 = vmatprep.subr.mxu0 0.0
      %1675 = vmatpush2.msra.mxu0 0.0
      %1676 = vmatprep.subr.mxu0 0.0
      %1677 = vmatpush2.msra.mxu0 0.0
      %1678 = vmatprep.subr.mxu0 0.0
      %1679 = vmatpush2.msra.mxu0 0.0
      %1680 = vmatprep.subr.mxu0 0.0
      %1681 = vmatpush2.msra.mxu0 0.0
      %1682 = vmatprep.subr.mxu0 0.0
      %1683 = vmatpush2.msra.mxu0 0.0
      %1684 = vmatprep.subr.mxu0 0.0
      %1685 = vmatpush2.msra.mxu0 0.0
      %1686 = vmatprep.subr.mxu0 0.0
      %1687 = vmatpush2.msra.mxu0 0.0
      %1688 = vmatprep.subr.mxu0 0.0
      %1689 = vmatpush2.msra.mxu0 0.0
      %1690 = vmatprep.subr.mxu0 0.0
      %1691 = vmatpush2.msra.mxu0 0.0
      %1692 = vmatprep.subr.mxu0 0.0
      %1693 = vmatpush2.msra.mxu0 0.0
      %1694 = vmatprep.subr.mxu0 0.0
      %1695 = vmatpush2.msra.mxu0 0.0
      %1696 = vmatprep.subr.mxu0 0.0
      %1697 = vmatpush2.msra.mxu0 0.0
      %1698 = vmatprep.subr.mxu0 0.0
      %1699 = vmatpush2.msra.mxu0 0.0
      %1700 = vmatprep.subr.mxu0 0.0
      %1701 = vmatpush2.msra.mxu0 0.0
      %1702 = vmatprep.subr.mxu0 0.0
      %1703 = vmatpush2.msra.mxu0 0.0
      %1704 = vmatprep.mubr.f32.mxu0 0.0
      %1705 = vmatmul.mubr.f32.gmra.mxu0 %v1542
      %v1706 = vpop.f32.mrf.mxu0
      %v1707 = vadd.f32 0.0, %v1706
      %v1708 = vpop.f32.mrf.mxu0
      %1709 = vmatprep.mubr.f32.mxu0 0.0
      %1710 = vmatmul.mubr.f32.gmra.mxu0 %v1545
      %v1711 = vpop.f32.mrf.mxu0
      %v1712 = vadd.f32 0.0, %v1711
      %v1713 = vpop.f32.mrf.mxu0
      %1714 = vmatprep.mubr.f32.mxu0 0.0
      %1715 = vmatmul.mubr.f32.gmra.mxu0 %v1548
      %v1716 = vpop.f32.mrf.mxu0
      %v1717 = vadd.f32 0.0, %v1716
      %v1718 = vpop.f32.mrf.mxu0
      %1719 = vmatprep.mubr.f32.mxu0 0.0
      %1720 = vmatmul.mubr.f32.gmra.mxu0 %v1551
      %v1721 = vpop.f32.mrf.mxu0
      %v1722 = vadd.f32 0.0, %v1721
      %v1723 = vpop.f32.mrf.mxu0
      %1724 = vmatprep.mubr.f32.mxu0 0.0
      %1725 = vmatmul.mubr.f32.gmra.mxu0 %v1554
      %v1726 = vpop.f32.mrf.mxu0
      %v1727 = vadd.f32 0.0, %v1726
      %v1728 = vpop.f32.mrf.mxu0
      %1729 = vmatprep.mubr.f32.mxu0 0.0
      %1730 = vmatmul.mubr.f32.gmra.mxu0 %v1557
      %v1731 = vpop.f32.mrf.mxu0
      %v1732 = vadd.f32 0.0, %v1731
      %v1733 = vpop.f32.mrf.mxu0
      %1734 = vmatprep.mubr.f32.mxu0 0.0
      %1735 = vmatmul.mubr.f32.gmra.mxu0 %v1560
      %v1736 = vpop.f32.mrf.mxu0
      %v1737 = vadd.f32 0.0, %v1736
      %v1738 = vpop.f32.mrf.mxu0
      %1739 = vmatprep.mubr.f32.mxu0 0.0
      %1740 = vmatmul.mubr.f32.gmra.mxu0 %v1563
      %v1741 = vpop.f32.mrf.mxu0
      %v1742 = vadd.f32 0.0, %v1741
      %v1743 = vpop.f32.mrf.mxu0
      %1744 = vmatprep.mubr.f32.mxu0 0.0
      %1745 = vmatmul.mubr.f32.gmra.mxu0 %v1566
      %v1746 = vpop.f32.mrf.mxu0
      %v1747 = vadd.f32 0.0, %v1746
      %v1748 = vpop.f32.mrf.mxu0
      %1749 = vmatprep.mubr.f32.mxu0 0.0
      %1750 = vmatmul.mubr.f32.gmra.mxu0 %v1569
      %v1751 = vpop.f32.mrf.mxu0
      %v1752 = vadd.f32 0.0, %v1751
      %v1753 = vpop.f32.mrf.mxu0
      %1754 = vmatprep.mubr.f32.mxu0 0.0
      %1755 = vmatmul.mubr.f32.gmra.mxu0 %v1572
      %v1756 = vpop.f32.mrf.mxu0
      %v1757 = vadd.f32 0.0, %v1756
      %v1758 = vpop.f32.mrf.mxu0
      %1759 = vmatprep.mubr.f32.mxu0 0.0
      %1760 = vmatmul.mubr.f32.gmra.mxu0 %v1575
      %v1761 = vpop.f32.mrf.mxu0
      %v1762 = vadd.f32 0.0, %v1761
      %v1763 = vpop.f32.mrf.mxu0
      %1764 = vmatprep.mubr.f32.mxu0 0.0
      %1765 = vmatmul.mubr.f32.gmra.mxu0 %v1578
      %v1766 = vpop.f32.mrf.mxu0
      %v1767 = vadd.f32 0.0, %v1766
      %v1768 = vpop.f32.mrf.mxu0
      %1769 = vmatprep.mubr.f32.mxu0 0.0
      %1770 = vmatmul.mubr.f32.gmra.mxu0 %v1581
      %v1771 = vpop.f32.mrf.mxu0
      %v1772 = vadd.f32 0.0, %v1771
      %v1773 = vpop.f32.mrf.mxu0
      %1774 = vmatprep.mubr.f32.mxu0 0.0
      %1775 = vmatmul.mubr.f32.gmra.mxu0 %v1584
      %v1776 = vpop.f32.mrf.mxu0
      %v1777 = vadd.f32 0.0, %v1776
      %v1778 = vpop.f32.mrf.mxu0
      %1779 = vmatprep.mubr.f32.mxu0 0.0
      %1780 = vmatmul.mubr.f32.gmra.mxu0 %v1587
      %v1781 = vpop.f32.mrf.mxu0
      %v1782 = vadd.f32 0.0, %v1781
      %v1783 = vpop.f32.mrf.mxu0
      %1784 = vmatprep.mubr.f32.mxu0 0.0
      %1785 = vmatmul.mubr.f32.gmra.mxu0 %v1590
      %v1786 = vpop.f32.mrf.mxu0
      %v1787 = vadd.f32 0.0, %v1786
      %v1788 = vpop.f32.mrf.mxu0
      %1789 = vmatprep.mubr.f32.mxu0 0.0
      %1790 = vmatmul.mubr.f32.gmra.mxu0 %v1593
      %v1791 = vpop.f32.mrf.mxu0
      %v1792 = vadd.f32 0.0, %v1791
      %v1793 = vpop.f32.mrf.mxu0
      %1794 = vmatprep.mubr.f32.mxu0 0.0
      %1795 = vmatmul.mubr.f32.gmra.mxu0 %v1596
      %v1796 = vpop.f32.mrf.mxu0
      %v1797 = vadd.f32 0.0, %v1796
      %v1798 = vpop.f32.mrf.mxu0
      %1799 = vmatprep.mubr.f32.mxu0 0.0
      %1800 = vmatmul.mubr.f32.gmra.mxu0 %v1599
      %v1801 = vpop.f32.mrf.mxu0
      %v1802 = vadd.f32 0.0, %v1801
      %v1803 = vpop.f32.mrf.mxu0
      %1804 = vmatprep.mubr.f32.mxu0 0.0
      %1805 = vmatmul.mubr.f32.gmra.mxu0 %v1602
      %v1806 = vpop.f32.mrf.mxu0
      %v1807 = vadd.f32 0.0, %v1806
      %v1808 = vpop.f32.mrf.mxu0
      %1809 = vmatprep.mubr.f32.mxu0 0.0
      %1810 = vmatmul.mubr.f32.gmra.mxu0 %v1605
      %v1811 = vpop.f32.mrf.mxu0
      %v1812 = vadd.f32 0.0, %v1811
      %v1813 = vpop.f32.mrf.mxu0
      %1814 = vmatprep.mubr.f32.mxu0 0.0
      %1815 = vmatmul.mubr.f32.gmra.mxu0 %v1608
      %v1816 = vpop.f32.mrf.mxu0
      %v1817 = vadd.f32 0.0, %v1816
      %v1818 = vpop.f32.mrf.mxu0
      %1819 = vmatprep.mubr.f32.mxu0 0.0
      %1820 = vmatmul.mubr.f32.gmra.mxu0 %v1611
      %v1821 = vpop.f32.mrf.mxu0
      %v1822 = vadd.f32 0.0, %v1821
      %v1823 = vpop.f32.mrf.mxu0
      %1824 = vmatprep.mubr.f32.mxu0 0.0
      %1825 = vmatmul.mubr.f32.gmra.mxu0 %v1614
      %v1826 = vpop.f32.mrf.mxu0
      %v1827 = vadd.f32 0.0, %v1826
      %v1828 = vpop.f32.mrf.mxu0
      %1829 = vmatprep.mubr.f32.mxu0 0.0
      %1830 = vmatmul.mubr.f32.gmra.mxu0 %v1617
      %v1831 = vpop.f32.mrf.mxu0
      %v1832 = vadd.f32 0.0, %v1831
      %v1833 = vpop.f32.mrf.mxu0
      %1834 = vmatprep.mubr.f32.mxu0 0.0
      %1835 = vmatmul.mubr.f32.gmra.mxu0 %v1620
      %v1836 = vpop.f32.mrf.mxu0
      %v1837 = vadd.f32 0.0, %v1836
      %v1838 = vpop.f32.mrf.mxu0
      %1839 = vmatprep.mubr.f32.mxu0 0.0
      %1840 = vmatmul.mubr.f32.gmra.mxu0 %v1623
      %v1841 = vpop.f32.mrf.mxu0
      %v1842 = vadd.f32 0.0, %v1841
      %v1843 = vpop.f32.mrf.mxu0
      %1844 = vmatprep.mubr.f32.mxu0 0.0
      %1845 = vmatmul.mubr.f32.gmra.mxu0 %v1626
      %v1846 = vpop.f32.mrf.mxu0
      %v1847 = vadd.f32 0.0, %v1846
      %v1848 = vpop.f32.mrf.mxu0
      %1849 = vmatprep.mubr.f32.mxu0 0.0
      %1850 = vmatmul.mubr.f32.gmra.mxu0 %v1629
      %v1851 = vpop.f32.mrf.mxu0
      %v1852 = vadd.f32 0.0, %v1851
      %v1853 = vpop.f32.mrf.mxu0
      %1854 = vmatprep.mubr.f32.mxu0 0.0
      %1855 = vmatmul.mubr.f32.gmra.mxu0 %v1632
      %v1856 = vpop.f32.mrf.mxu0
      %v1857 = vadd.f32 0.0, %v1856
      %v1858 = vpop.f32.mrf.mxu0
      %1859 = vmatprep.mubr.f32.mxu0 0.0
      %1860 = vmatmul.mubr.f32.gmra.mxu0 %v1635
      %v1861 = vpop.f32.mrf.mxu0
      %v1862 = vadd.f32 0.0, %v1861
      %v1863 = vpop.f32.mrf.mxu0
      %1864 = vdwg.mxu0
      %v1865 = vld [vmem:[#allocation2] sm:$0xff]
      %v1866 = vld [vmem:[#allocation2 + $0x8] sm:$0xff]
      %v1867 = vld [vmem:[#allocation2 + $0x10] sm:$0xff]
      %v1868 = vld [vmem:[#allocation2 + $0x18] sm:$0xff]
      %v1869 = vld [vmem:[#allocation2 + $0x20] sm:$0xff]
      %v1870 = vld [vmem:[#allocation2 + $0x28] sm:$0xff]
      %v1871 = vld [vmem:[#allocation2 + $0x30] sm:$0xff]
      %v1872 = vld [vmem:[#allocation2 + $0x38] sm:$0xff]
      %v1873 = vld [vmem:[#allocation2 + $0x40] sm:$0xff]
      %v1874 = vld [vmem:[#allocation2 + $0x48] sm:$0xff]
      %v1875 = vld [vmem:[#allocation2 + $0x50] sm:$0xff]
      %v1876 = vld [vmem:[#allocation2 + $0x58] sm:$0xff]
      %v1877 = vld [vmem:[#allocation2 + $0x60] sm:$0xff]
      %v1878 = vld [vmem:[#allocation2 + $0x68] sm:$0xff]
      %v1879 = vld [vmem:[#allocation2 + $0x70] sm:$0xff]
      %v1880 = vld [vmem:[#allocation2 + $0x78] sm:$0xff]
      %v1881 = vld [vmem:[#allocation2 + $0x80] sm:$0xff]
      %v1882 = vld [vmem:[#allocation2 + $0x88] sm:$0xff]
      %v1883 = vld [vmem:[#allocation2 + $0x90] sm:$0xff]
      %v1884 = vld [vmem:[#allocation2 + $0x98] sm:$0xff]
      %v1885 = vld [vmem:[#allocation2 + $0xa0] sm:$0xff]
      %v1886 = vld [vmem:[#allocation2 + $0xa8] sm:$0xff]
      %v1887 = vld [vmem:[#allocation2 + $0xb0] sm:$0xff]
      %v1888 = vld [vmem:[#allocation2 + $0xb8] sm:$0xff]
      %v1889 = vld [vmem:[#allocation2 + $0xc0] sm:$0xff]
      %v1890 = vld [vmem:[#allocation2 + $0xc8] sm:$0xff]
      %v1891 = vld [vmem:[#allocation2 + $0xd0] sm:$0xff]
      %v1892 = vld [vmem:[#allocation2 + $0xd8] sm:$0xff]
      %v1893 = vld [vmem:[#allocation2 + $0xe0] sm:$0xff]
      %v1894 = vld [vmem:[#allocation2 + $0xe8] sm:$0xff]
      %v1895 = vld [vmem:[#allocation2 + $0xf0] sm:$0xff]
      %v1896 = vld [vmem:[#allocation2 + $0xf8] sm:$0xff]
      %v1897 = vadd.f32 %v1865, %v1707
      %v1898 = vadd.f32 %v1866, %v1712
      %v1899 = vadd.f32 %v1867, %v1717
      %v1900 = vadd.f32 %v1868, %v1722
      %v1901 = vadd.f32 %v1869, %v1727
      %v1902 = vadd.f32 %v1870, %v1732
      %v1903 = vadd.f32 %v1871, %v1737
      %v1904 = vadd.f32 %v1872, %v1742
      %v1905 = vadd.f32 %v1873, %v1747
      %v1906 = vadd.f32 %v1874, %v1752
      %v1907 = vadd.f32 %v1875, %v1757
      %v1908 = vadd.f32 %v1876, %v1762
      %v1909 = vadd.f32 %v1877, %v1767
      %v1910 = vadd.f32 %v1878, %v1772
      %v1911 = vadd.f32 %v1879, %v1777
      %v1912 = vadd.f32 %v1880, %v1782
      %v1913 = vadd.f32 %v1881, %v1787
      %v1914 = vadd.f32 %v1882, %v1792
      %v1915 = vadd.f32 %v1883, %v1797
      %v1916 = vadd.f32 %v1884, %v1802
      %v1917 = vadd.f32 %v1885, %v1807
      %v1918 = vadd.f32 %v1886, %v1812
      %v1919 = vadd.f32 %v1887, %v1817
      %v1920 = vadd.f32 %v1888, %v1822
      %v1921 = vadd.f32 %v1889, %v1827
      %v1922 = vadd.f32 %v1890, %v1832
      %v1923 = vadd.f32 %v1891, %v1837
      %v1924 = vadd.f32 %v1892, %v1842
      %v1925 = vadd.f32 %v1893, %v1847
      %v1926 = vadd.f32 %v1894, %v1852
      %v1927 = vadd.f32 %v1895, %v1857
      %v1928 = vadd.f32 %v1896, %v1862
      %1929 = vst [vmem:[#allocation2] sm:$0xff] %v1897
      %1930 = vst [vmem:[#allocation2 + $0x8] sm:$0xff] %v1898
      %1931 = vst [vmem:[#allocation2 + $0x10] sm:$0xff] %v1899
      %1932 = vst [vmem:[#allocation2 + $0x18] sm:$0xff] %v1900
      %1933 = vst [vmem:[#allocation2 + $0x20] sm:$0xff] %v1901
      %1934 = vst [vmem:[#allocation2 + $0x28] sm:$0xff] %v1902
      %1935 = vst [vmem:[#allocation2 + $0x30] sm:$0xff] %v1903
      %1936 = vst [vmem:[#allocation2 + $0x38] sm:$0xff] %v1904
      %1937 = vst [vmem:[#allocation2 + $0x40] sm:$0xff] %v1905
      %1938 = vst [vmem:[#allocation2 + $0x48] sm:$0xff] %v1906
      %1939 = vst [vmem:[#allocation2 + $0x50] sm:$0xff] %v1907
      %1940 = vst [vmem:[#allocation2 + $0x58] sm:$0xff] %v1908
      %1941 = vst [vmem:[#allocation2 + $0x60] sm:$0xff] %v1909
      %1942 = vst [vmem:[#allocation2 + $0x68] sm:$0xff] %v1910
      %1943 = vst [vmem:[#allocation2 + $0x70] sm:$0xff] %v1911
      %1944 = vst [vmem:[#allocation2 + $0x78] sm:$0xff] %v1912
      %1945 = vst [vmem:[#allocation2 + $0x80] sm:$0xff] %v1913
      %1946 = vst [vmem:[#allocation2 + $0x88] sm:$0xff] %v1914
      %1947 = vst [vmem:[#allocation2 + $0x90] sm:$0xff] %v1915
      %1948 = vst [vmem:[#allocation2 + $0x98] sm:$0xff] %v1916
      %1949 = vst [vmem:[#allocation2 + $0xa0] sm:$0xff] %v1917
      %1950 = vst [vmem:[#allocation2 + $0xa8] sm:$0xff] %v1918
      %1951 = vst [vmem:[#allocation2 + $0xb0] sm:$0xff] %v1919
      %1952 = vst [vmem:[#allocation2 + $0xb8] sm:$0xff] %v1920
      %1953 = vst [vmem:[#allocation2 + $0xc0] sm:$0xff] %v1921
      %1954 = vst [vmem:[#allocation2 + $0xc8] sm:$0xff] %v1922
      %1955 = vst [vmem:[#allocation2 + $0xd0] sm:$0xff] %v1923
      %1956 = vst [vmem:[#allocation2 + $0xd8] sm:$0xff] %v1924
      %1957 = vst [vmem:[#allocation2 + $0xe0] sm:$0xff] %v1925
      %1958 = vst [vmem:[#allocation2 + $0xe8] sm:$0xff] %v1926
      %1959 = vst [vmem:[#allocation2 + $0xf0] sm:$0xff] %v1927
      %1960 = vst [vmem:[#allocation2 + $0xf8] sm:$0xff] %v1928
      %v1961 = vld [vmem:[%s1506 + $0x1] sm:$0xff]
      %v1962 = vld [vmem:[%s1506 + $0x9] sm:$0xff]
      %v1963 = vld [vmem:[%s1506 + $0x19] sm:$0xff]
      %v1964 = vld [vmem:[%s1506 + $0x21] sm:$0xff]
      %v1965 = vld [vmem:[%s1506 + $0x31] sm:$0xff]
      %v1966 = vld [vmem:[%s1506 + $0x39] sm:$0xff]
      %v1967 = vld [vmem:[%s1506 + $0x49] sm:$0xff]
      %v1968 = vld [vmem:[%s1506 + $0x51] sm:$0xff]
      %v1969 = vld [vmem:[%s1506 + $0x61] sm:$0xff]
      %v1970 = vld [vmem:[%s1506 + $0x69] sm:$0xff]
      %v1971 = vld [vmem:[%s1506 + $0x79] sm:$0xff]
      %v1972 = vld [vmem:[%s1506 + $0x81] sm:$0xff]
      %v1973 = vld [vmem:[%s1506 + $0x91] sm:$0xff]
      %v1974 = vld [vmem:[%s1506 + $0x99] sm:$0xff]
      %v1975 = vld [vmem:[%s1506 + $0xa9] sm:$0xff]
      %v1976 = vld [vmem:[%s1506 + $0xb1] sm:$0xff]
      %v1977 = vld [vmem:[%s1506 + $0xc1] sm:$0xff]
      %v1978 = vld [vmem:[%s1506 + $0xc9] sm:$0xff]
      %v1979 = vld [vmem:[%s1506 + $0xd9] sm:$0xff]
      %v1980 = vld [vmem:[%s1506 + $0xe1] sm:$0xff]
      %v1981 = vld [vmem:[%s1506 + $0xf1] sm:$0xff]
      %v1982 = vld [vmem:[%s1506 + $0xf9] sm:$0xff]
      %v1983 = vld [vmem:[%s1506 + $0x109] sm:$0xff]
      %v1984 = vld [vmem:[%s1506 + $0x111] sm:$0xff]
      %v1985 = vld [vmem:[%s1506 + $0x121] sm:$0xff]
      %v1986 = vld [vmem:[%s1506 + $0x129] sm:$0xff]
      %v1987 = vld [vmem:[%s1506 + $0x139] sm:$0xff]
      %v1988 = vld [vmem:[%s1506 + $0x141] sm:$0xff]
      %v1989 = vld [vmem:[%s1506 + $0x151] sm:$0xff]
      %v1990 = vld [vmem:[%s1506 + $0x159] sm:$0xff]
      %v1991 = vld [vmem:[%s1506 + $0x169] sm:$0xff]
      %v1992 = vld [vmem:[%s1506 + $0x171] sm:$0xff]
      %s1993 = scalar_lea.vmem %s1, 16
      %v1994 = vld [vmem:[%s1993] sm:$0xf]
      %v1996 = vsel %vm240, %v1961, 0
      %v1999 = vsel %vm240, %v1962, 0
      %v2002 = vsel %vm240, %v1963, 0
      %v2005 = vsel %vm240, %v1964, 0
      %v2008 = vsel %vm240, %v1965, 0
      %v2011 = vsel %vm240, %v1966, 0
      %v2014 = vsel %vm240, %v1967, 0
      %v2017 = vsel %vm240, %v1968, 0
      %v2020 = vsel %vm240, %v1969, 0
      %v2023 = vsel %vm240, %v1970, 0
      %v2026 = vsel %vm240, %v1971, 0
      %v2029 = vsel %vm240, %v1972, 0
      %v2032 = vsel %vm240, %v1973, 0
      %v2035 = vsel %vm240, %v1974, 0
      %v2038 = vsel %vm240, %v1975, 0
      %v2041 = vsel %vm240, %v1976, 0
      %v2044 = vsel %vm240, %v1977, 0
      %v2047 = vsel %vm240, %v1978, 0
      %v2050 = vsel %vm240, %v1979, 0
      %v2053 = vsel %vm240, %v1980, 0
      %v2056 = vsel %vm240, %v1981, 0
      %v2059 = vsel %vm240, %v1982, 0
      %v2062 = vsel %vm240, %v1983, 0
      %v2065 = vsel %vm240, %v1984, 0
      %v2068 = vsel %vm240, %v1985, 0
      %v2071 = vsel %vm240, %v1986, 0
      %v2074 = vsel %vm240, %v1987, 0
      %v2077 = vsel %vm240, %v1988, 0
      %v2080 = vsel %vm240, %v1989, 0
      %v2083 = vsel %vm240, %v1990, 0
      %v2086 = vsel %vm240, %v1991, 0
      %v2089 = vsel %vm240, %v1992, 0
      %v2092 = vsel %vm337, %v1994, 0
      %2094 = vmatprep.subr.mxu0 0.0
      %2095 = vmatpush1.msra.mxu0 0.0
      %2096 = vmatprep.subr.mxu0 0.0
      %2097 = vmatpush1.msra.mxu0 0.0
      %2098 = vmatprep.subr.mxu0 0.0
      %2099 = vmatpush1.msra.mxu0 0.0
      %2100 = vmatprep.subr.mxu0 0.0
      %2101 = vmatpush1.msra.mxu0 0.0
      %2102 = vmatprep.subr.mxu0 0.0
      %2103 = vmatpush1.msra.mxu0 0.0
      %2104 = vmatprep.subr.mxu0 0.0
      %2105 = vmatpush1.msra.mxu0 0.0
      %2106 = vmatprep.subr.mxu0 0.0
      %2107 = vmatpush1.msra.mxu0 0.0
      %2108 = vmatprep.subr.mxu0 0.0
      %2109 = vmatpush1.msra.mxu0 0.0
      %2110 = vmatprep.subr.mxu0 0.0
      %2111 = vmatpush1.msra.mxu0 0.0
      %2112 = vmatprep.subr.mxu0 0.0
      %2113 = vmatpush1.msra.mxu0 0.0
      %2114 = vmatprep.subr.mxu0 0.0
      %2115 = vmatpush1.msra.mxu0 0.0
      %2116 = vmatprep.subr.mxu0 0.0
      %2117 = vmatpush1.msra.mxu0 0.0
      %2118 = vmatprep.subr.mxu0 0.0
      %2119 = vmatpush1.msra.mxu0 0.0
      %2120 = vmatprep.subr.mxu0 0.0
      %2121 = vmatpush1.msra.mxu0 0.0
      %2122 = vmatprep.subr.mxu0 0.0
      %2123 = vmatpush1.msra.mxu0 0.0
      %2124 = vmatprep.subr.mxu0 0.0
      %2125 = vmatpush1.msra.mxu0 %v2092
      %2126 = vmatprep.subr.mxu0 0.0
      %2127 = vmatpush2.msra.mxu0 0.0
      %2128 = vmatprep.subr.mxu0 0.0
      %2129 = vmatpush2.msra.mxu0 0.0
      %2130 = vmatprep.subr.mxu0 0.0
      %2131 = vmatpush2.msra.mxu0 0.0
      %2132 = vmatprep.subr.mxu0 0.0
      %2133 = vmatpush2.msra.mxu0 0.0
      %2134 = vmatprep.subr.mxu0 0.0
      %2135 = vmatpush2.msra.mxu0 0.0
      %2136 = vmatprep.subr.mxu0 0.0
      %2137 = vmatpush2.msra.mxu0 0.0
      %2138 = vmatprep.subr.mxu0 0.0
      %2139 = vmatpush2.msra.mxu0 0.0
      %2140 = vmatprep.subr.mxu0 0.0
      %2141 = vmatpush2.msra.mxu0 0.0
      %2142 = vmatprep.subr.mxu0 0.0
      %2143 = vmatpush2.msra.mxu0 0.0
      %2144 = vmatprep.subr.mxu0 0.0
      %2145 = vmatpush2.msra.mxu0 0.0
      %2146 = vmatprep.subr.mxu0 0.0
      %2147 = vmatpush2.msra.mxu0 0.0
      %2148 = vmatprep.subr.mxu0 0.0
      %2149 = vmatpush2.msra.mxu0 0.0
      %2150 = vmatprep.subr.mxu0 0.0
      %2151 = vmatpush2.msra.mxu0 0.0
      %2152 = vmatprep.subr.mxu0 0.0
      %2153 = vmatpush2.msra.mxu0 0.0
      %2154 = vmatprep.subr.mxu0 0.0
      %2155 = vmatpush2.msra.mxu0 0.0
      %2156 = vmatprep.subr.mxu0 0.0
      %2157 = vmatpush2.msra.mxu0 0.0
      %2158 = vmatprep.mubr.f32.mxu0 0.0
      %2159 = vmatmul.mubr.f32.gmra.mxu0 %v1996
      %v2160 = vpop.f32.mrf.mxu0
      %v2161 = vadd.f32 0.0, %v2160
      %v2162 = vpop.f32.mrf.mxu0
      %2163 = vmatprep.mubr.f32.mxu0 0.0
      %2164 = vmatmul.mubr.f32.gmra.mxu0 %v1999
      %v2165 = vpop.f32.mrf.mxu0
      %v2166 = vadd.f32 0.0, %v2165
      %v2167 = vpop.f32.mrf.mxu0
      %2168 = vmatprep.mubr.f32.mxu0 0.0
      %2169 = vmatmul.mubr.f32.gmra.mxu0 %v2002
      %v2170 = vpop.f32.mrf.mxu0
      %v2171 = vadd.f32 0.0, %v2170
      %v2172 = vpop.f32.mrf.mxu0
      %2173 = vmatprep.mubr.f32.mxu0 0.0
      %2174 = vmatmul.mubr.f32.gmra.mxu0 %v2005
      %v2175 = vpop.f32.mrf.mxu0
      %v2176 = vadd.f32 0.0, %v2175
      %v2177 = vpop.f32.mrf.mxu0
      %2178 = vmatprep.mubr.f32.mxu0 0.0
      %2179 = vmatmul.mubr.f32.gmra.mxu0 %v2008
      %v2180 = vpop.f32.mrf.mxu0
      %v2181 = vadd.f32 0.0, %v2180
      %v2182 = vpop.f32.mrf.mxu0
      %2183 = vmatprep.mubr.f32.mxu0 0.0
      %2184 = vmatmul.mubr.f32.gmra.mxu0 %v2011
      %v2185 = vpop.f32.mrf.mxu0
      %v2186 = vadd.f32 0.0, %v2185
      %v2187 = vpop.f32.mrf.mxu0
      %2188 = vmatprep.mubr.f32.mxu0 0.0
      %2189 = vmatmul.mubr.f32.gmra.mxu0 %v2014
      %v2190 = vpop.f32.mrf.mxu0
      %v2191 = vadd.f32 0.0, %v2190
      %v2192 = vpop.f32.mrf.mxu0
      %2193 = vmatprep.mubr.f32.mxu0 0.0
      %2194 = vmatmul.mubr.f32.gmra.mxu0 %v2017
      %v2195 = vpop.f32.mrf.mxu0
      %v2196 = vadd.f32 0.0, %v2195
      %v2197 = vpop.f32.mrf.mxu0
      %2198 = vmatprep.mubr.f32.mxu0 0.0
      %2199 = vmatmul.mubr.f32.gmra.mxu0 %v2020
      %v2200 = vpop.f32.mrf.mxu0
      %v2201 = vadd.f32 0.0, %v2200
      %v2202 = vpop.f32.mrf.mxu0
      %2203 = vmatprep.mubr.f32.mxu0 0.0
      %2204 = vmatmul.mubr.f32.gmra.mxu0 %v2023
      %v2205 = vpop.f32.mrf.mxu0
      %v2206 = vadd.f32 0.0, %v2205
      %v2207 = vpop.f32.mrf.mxu0
      %2208 = vmatprep.mubr.f32.mxu0 0.0
      %2209 = vmatmul.mubr.f32.gmra.mxu0 %v2026
      %v2210 = vpop.f32.mrf.mxu0
      %v2211 = vadd.f32 0.0, %v2210
      %v2212 = vpop.f32.mrf.mxu0
      %2213 = vmatprep.mubr.f32.mxu0 0.0
      %2214 = vmatmul.mubr.f32.gmra.mxu0 %v2029
      %v2215 = vpop.f32.mrf.mxu0
      %v2216 = vadd.f32 0.0, %v2215
      %v2217 = vpop.f32.mrf.mxu0
      %2218 = vmatprep.mubr.f32.mxu0 0.0
      %2219 = vmatmul.mubr.f32.gmra.mxu0 %v2032
      %v2220 = vpop.f32.mrf.mxu0
      %v2221 = vadd.f32 0.0, %v2220
      %v2222 = vpop.f32.mrf.mxu0
      %2223 = vmatprep.mubr.f32.mxu0 0.0
      %2224 = vmatmul.mubr.f32.gmra.mxu0 %v2035
      %v2225 = vpop.f32.mrf.mxu0
      %v2226 = vadd.f32 0.0, %v2225
      %v2227 = vpop.f32.mrf.mxu0
      %2228 = vmatprep.mubr.f32.mxu0 0.0
      %2229 = vmatmul.mubr.f32.gmra.mxu0 %v2038
      %v2230 = vpop.f32.mrf.mxu0
      %v2231 = vadd.f32 0.0, %v2230
      %v2232 = vpop.f32.mrf.mxu0
      %2233 = vmatprep.mubr.f32.mxu0 0.0
      %2234 = vmatmul.mubr.f32.gmra.mxu0 %v2041
      %v2235 = vpop.f32.mrf.mxu0
      %v2236 = vadd.f32 0.0, %v2235
      %v2237 = vpop.f32.mrf.mxu0
      %2238 = vmatprep.mubr.f32.mxu0 0.0
      %2239 = vmatmul.mubr.f32.gmra.mxu0 %v2044
      %v2240 = vpop.f32.mrf.mxu0
      %v2241 = vadd.f32 0.0, %v2240
      %v2242 = vpop.f32.mrf.mxu0
      %2243 = vmatprep.mubr.f32.mxu0 0.0
      %2244 = vmatmul.mubr.f32.gmra.mxu0 %v2047
      %v2245 = vpop.f32.mrf.mxu0
      %v2246 = vadd.f32 0.0, %v2245
      %v2247 = vpop.f32.mrf.mxu0
      %2248 = vmatprep.mubr.f32.mxu0 0.0
      %2249 = vmatmul.mubr.f32.gmra.mxu0 %v2050
      %v2250 = vpop.f32.mrf.mxu0
      %v2251 = vadd.f32 0.0, %v2250
      %v2252 = vpop.f32.mrf.mxu0
      %2253 = vmatprep.mubr.f32.mxu0 0.0
      %2254 = vmatmul.mubr.f32.gmra.mxu0 %v2053
      %v2255 = vpop.f32.mrf.mxu0
      %v2256 = vadd.f32 0.0, %v2255
      %v2257 = vpop.f32.mrf.mxu0
      %2258 = vmatprep.mubr.f32.mxu0 0.0
      %2259 = vmatmul.mubr.f32.gmra.mxu0 %v2056
      %v2260 = vpop.f32.mrf.mxu0
      %v2261 = vadd.f32 0.0, %v2260
      %v2262 = vpop.f32.mrf.mxu0
      %2263 = vmatprep.mubr.f32.mxu0 0.0
      %2264 = vmatmul.mubr.f32.gmra.mxu0 %v2059
      %v2265 = vpop.f32.mrf.mxu0
      %v2266 = vadd.f32 0.0, %v2265
      %v2267 = vpop.f32.mrf.mxu0
      %2268 = vmatprep.mubr.f32.mxu0 0.0
      %2269 = vmatmul.mubr.f32.gmra.mxu0 %v2062
      %v2270 = vpop.f32.mrf.mxu0
      %v2271 = vadd.f32 0.0, %v2270
      %v2272 = vpop.f32.mrf.mxu0
      %2273 = vmatprep.mubr.f32.mxu0 0.0
      %2274 = vmatmul.mubr.f32.gmra.mxu0 %v2065
      %v2275 = vpop.f32.mrf.mxu0
      %v2276 = vadd.f32 0.0, %v2275
      %v2277 = vpop.f32.mrf.mxu0
      %2278 = vmatprep.mubr.f32.mxu0 0.0
      %2279 = vmatmul.mubr.f32.gmra.mxu0 %v2068
      %v2280 = vpop.f32.mrf.mxu0
      %v2281 = vadd.f32 0.0, %v2280
      %v2282 = vpop.f32.mrf.mxu0
      %2283 = vmatprep.mubr.f32.mxu0 0.0
      %2284 = vmatmul.mubr.f32.gmra.mxu0 %v2071
      %v2285 = vpop.f32.mrf.mxu0
      %v2286 = vadd.f32 0.0, %v2285
      %v2287 = vpop.f32.mrf.mxu0
      %2288 = vmatprep.mubr.f32.mxu0 0.0
      %2289 = vmatmul.mubr.f32.gmra.mxu0 %v2074
      %v2290 = vpop.f32.mrf.mxu0
      %v2291 = vadd.f32 0.0, %v2290
      %v2292 = vpop.f32.mrf.mxu0
      %2293 = vmatprep.mubr.f32.mxu0 0.0
      %2294 = vmatmul.mubr.f32.gmra.mxu0 %v2077
      %v2295 = vpop.f32.mrf.mxu0
      %v2296 = vadd.f32 0.0, %v2295
      %v2297 = vpop.f32.mrf.mxu0
      %2298 = vmatprep.mubr.f32.mxu0 0.0
      %2299 = vmatmul.mubr.f32.gmra.mxu0 %v2080
      %v2300 = vpop.f32.mrf.mxu0
      %v2301 = vadd.f32 0.0, %v2300
      %v2302 = vpop.f32.mrf.mxu0
      %2303 = vmatprep.mubr.f32.mxu0 0.0
      %2304 = vmatmul.mubr.f32.gmra.mxu0 %v2083
      %v2305 = vpop.f32.mrf.mxu0
      %v2306 = vadd.f32 0.0, %v2305
      %v2307 = vpop.f32.mrf.mxu0
      %2308 = vmatprep.mubr.f32.mxu0 0.0
      %2309 = vmatmul.mubr.f32.gmra.mxu0 %v2086
      %v2310 = vpop.f32.mrf.mxu0
      %v2311 = vadd.f32 0.0, %v2310
      %v2312 = vpop.f32.mrf.mxu0
      %2313 = vmatprep.mubr.f32.mxu0 0.0
      %2314 = vmatmul.mubr.f32.gmra.mxu0 %v2089
      %v2315 = vpop.f32.mrf.mxu0
      %v2316 = vadd.f32 0.0, %v2315
      %v2317 = vpop.f32.mrf.mxu0
      %2318 = vdwg.mxu0
      %v2319 = vld [vmem:[#allocation2] sm:$0xff]
      %v2320 = vld [vmem:[#allocation2 + $0x8] sm:$0xff]
      %v2321 = vld [vmem:[#allocation2 + $0x10] sm:$0xff]
      %v2322 = vld [vmem:[#allocation2 + $0x18] sm:$0xff]
      %v2323 = vld [vmem:[#allocation2 + $0x20] sm:$0xff]
      %v2324 = vld [vmem:[#allocation2 + $0x28] sm:$0xff]
      %v2325 = vld [vmem:[#allocation2 + $0x30] sm:$0xff]
      %v2326 = vld [vmem:[#allocation2 + $0x38] sm:$0xff]
      %v2327 = vld [vmem:[#allocation2 + $0x40] sm:$0xff]
      %v2328 = vld [vmem:[#allocation2 + $0x48] sm:$0xff]
      %v2329 = vld [vmem:[#allocation2 + $0x50] sm:$0xff]
      %v2330 = vld [vmem:[#allocation2 + $0x58] sm:$0xff]
      %v2331 = vld [vmem:[#allocation2 + $0x60] sm:$0xff]
      %v2332 = vld [vmem:[#allocation2 + $0x68] sm:$0xff]
      %v2333 = vld [vmem:[#allocation2 + $0x70] sm:$0xff]
      %v2334 = vld [vmem:[#allocation2 + $0x78] sm:$0xff]
      %v2335 = vld [vmem:[#allocation2 + $0x80] sm:$0xff]
      %v2336 = vld [vmem:[#allocation2 + $0x88] sm:$0xff]
      %v2337 = vld [vmem:[#allocation2 + $0x90] sm:$0xff]
      %v2338 = vld [vmem:[#allocation2 + $0x98] sm:$0xff]
      %v2339 = vld [vmem:[#allocation2 + $0xa0] sm:$0xff]
      %v2340 = vld [vmem:[#allocation2 + $0xa8] sm:$0xff]
      %v2341 = vld [vmem:[#allocation2 + $0xb0] sm:$0xff]
      %v2342 = vld [vmem:[#allocation2 + $0xb8] sm:$0xff]
      %v2343 = vld [vmem:[#allocation2 + $0xc0] sm:$0xff]
      %v2344 = vld [vmem:[#allocation2 + $0xc8] sm:$0xff]
      %v2345 = vld [vmem:[#allocation2 + $0xd0] sm:$0xff]
      %v2346 = vld [vmem:[#allocation2 + $0xd8] sm:$0xff]
      %v2347 = vld [vmem:[#allocation2 + $0xe0] sm:$0xff]
      %v2348 = vld [vmem:[#allocation2 + $0xe8] sm:$0xff]
      %v2349 = vld [vmem:[#allocation2 + $0xf0] sm:$0xff]
      %v2350 = vld [vmem:[#allocation2 + $0xf8] sm:$0xff]
      %v2351 = vadd.f32 %v2319, %v2161
      %v2352 = vadd.f32 %v2320, %v2166
      %v2353 = vadd.f32 %v2321, %v2171
      %v2354 = vadd.f32 %v2322, %v2176
      %v2355 = vadd.f32 %v2323, %v2181
      %v2356 = vadd.f32 %v2324, %v2186
      %v2357 = vadd.f32 %v2325, %v2191
      %v2358 = vadd.f32 %v2326, %v2196
      %v2359 = vadd.f32 %v2327, %v2201
      %v2360 = vadd.f32 %v2328, %v2206
      %v2361 = vadd.f32 %v2329, %v2211
      %v2362 = vadd.f32 %v2330, %v2216
      %v2363 = vadd.f32 %v2331, %v2221
      %v2364 = vadd.f32 %v2332, %v2226
      %v2365 = vadd.f32 %v2333, %v2231
      %v2366 = vadd.f32 %v2334, %v2236
      %v2367 = vadd.f32 %v2335, %v2241
      %v2368 = vadd.f32 %v2336, %v2246
      %v2369 = vadd.f32 %v2337, %v2251
      %v2370 = vadd.f32 %v2338, %v2256
      %v2371 = vadd.f32 %v2339, %v2261
      %v2372 = vadd.f32 %v2340, %v2266
      %v2373 = vadd.f32 %v2341, %v2271
      %v2374 = vadd.f32 %v2342, %v2276
      %v2375 = vadd.f32 %v2343, %v2281
      %v2376 = vadd.f32 %v2344, %v2286
      %v2377 = vadd.f32 %v2345, %v2291
      %v2378 = vadd.f32 %v2346, %v2296
      %v2379 = vadd.f32 %v2347, %v2301
      %v2380 = vadd.f32 %v2348, %v2306
      %v2381 = vadd.f32 %v2349, %v2311
      %v2382 = vadd.f32 %v2350, %v2316
      %2383 = vst [vmem:[#allocation2] sm:$0xff] %v2351
      %2384 = vst [vmem:[#allocation2 + $0x8] sm:$0xff] %v2352
      %2385 = vst [vmem:[#allocation2 + $0x10] sm:$0xff] %v2353
      %2386 = vst [vmem:[#allocation2 + $0x18] sm:$0xff] %v2354
      %2387 = vst [vmem:[#allocation2 + $0x20] sm:$0xff] %v2355
      %2388 = vst [vmem:[#allocation2 + $0x28] sm:$0xff] %v2356
      %2389 = vst [vmem:[#allocation2 + $0x30] sm:$0xff] %v2357
      %2390 = vst [vmem:[#allocation2 + $0x38] sm:$0xff] %v2358
      %2391 = vst [vmem:[#allocation2 + $0x40] sm:$0xff] %v2359
      %2392 = vst [vmem:[#allocation2 + $0x48] sm:$0xff] %v2360
      %2393 = vst [vmem:[#allocation2 + $0x50] sm:$0xff] %v2361
      %2394 = vst [vmem:[#allocation2 + $0x58] sm:$0xff] %v2362
      %2395 = vst [vmem:[#allocation2 + $0x60] sm:$0xff] %v2363
      %2396 = vst [vmem:[#allocation2 + $0x68] sm:$0xff] %v2364
      %2397 = vst [vmem:[#allocation2 + $0x70] sm:$0xff] %v2365
      %2398 = vst [vmem:[#allocation2 + $0x78] sm:$0xff] %v2366
      %2399 = vst [vmem:[#allocation2 + $0x80] sm:$0xff] %v2367
      %2400 = vst [vmem:[#allocation2 + $0x88] sm:$0xff] %v2368
      %2401 = vst [vmem:[#allocation2 + $0x90] sm:$0xff] %v2369
      %2402 = vst [vmem:[#allocation2 + $0x98] sm:$0xff] %v2370
      %2403 = vst [vmem:[#allocation2 + $0xa0] sm:$0xff] %v2371
      %2404 = vst [vmem:[#allocation2 + $0xa8] sm:$0xff] %v2372
      %2405 = vst [vmem:[#allocation2 + $0xb0] sm:$0xff] %v2373
      %2406 = vst [vmem:[#allocation2 + $0xb8] sm:$0xff] %v2374
      %2407 = vst [vmem:[#allocation2 + $0xc0] sm:$0xff] %v2375
      %2408 = vst [vmem:[#allocation2 + $0xc8] sm:$0xff] %v2376
      %2409 = vst [vmem:[#allocation2 + $0xd0] sm:$0xff] %v2377
      %2410 = vst [vmem:[#allocation2 + $0xd8] sm:$0xff] %v2378
      %2411 = vst [vmem:[#allocation2 + $0xe0] sm:$0xff] %v2379
      %2412 = vst [vmem:[#allocation2 + $0xe8] sm:$0xff] %v2380
      %2413 = vst [vmem:[#allocation2 + $0xf0] sm:$0xff] %v2381
      %2414 = vst [vmem:[#allocation2 + $0xf8] sm:$0xff] %v2382
      %v2415 = vld [vmem:[%s1506 + $0x2] sm:$0xff]
      %v2416 = vld [vmem:[%s1506 + $0xa] sm:$0xff]
      %v2417 = vld [vmem:[%s1506 + $0x1a] sm:$0xff]
      %v2418 = vld [vmem:[%s1506 + $0x22] sm:$0xff]
      %v2419 = vld [vmem:[%s1506 + $0x32] sm:$0xff]
      %v2420 = vld [vmem:[%s1506 + $0x3a] sm:$0xff]
      %v2421 = vld [vmem:[%s1506 + $0x4a] sm:$0xff]
      %v2422 = vld [vmem:[%s1506 + $0x52] sm:$0xff]
      %v2423 = vld [vmem:[%s1506 + $0x62] sm:$0xff]
      %v2424 = vld [vmem:[%s1506 + $0x6a] sm:$0xff]
      %v2425 = vld [vmem:[%s1506 + $0x7a] sm:$0xff]
      %v2426 = vld [vmem:[%s1506 + $0x82] sm:$0xff]
      %v2427 = vld [vmem:[%s1506 + $0x92] sm:$0xff]
      %v2428 = vld [vmem:[%s1506 + $0x9a] sm:$0xff]
      %v2429 = vld [vmem:[%s1506 + $0xaa] sm:$0xff]
      %v2430 = vld [vmem:[%s1506 + $0xb2] sm:$0xff]
      %v2431 = vld [vmem:[%s1506 + $0xc2] sm:$0xff]
      %v2432 = vld [vmem:[%s1506 + $0xca] sm:$0xff]
      %v2433 = vld [vmem:[%s1506 + $0xda] sm:$0xff]
      %v2434 = vld [vmem:[%s1506 + $0xe2] sm:$0xff]
      %v2435 = vld [vmem:[%s1506 + $0xf2] sm:$0xff]
      %v2436 = vld [vmem:[%s1506 + $0xfa] sm:$0xff]
      %v2437 = vld [vmem:[%s1506 + $0x10a] sm:$0xff]
      %v2438 = vld [vmem:[%s1506 + $0x112] sm:$0xff]
      %v2439 = vld [vmem:[%s1506 + $0x122] sm:$0xff]
      %v2440 = vld [vmem:[%s1506 + $0x12a] sm:$0xff]
      %v2441 = vld [vmem:[%s1506 + $0x13a] sm:$0xff]
      %v2442 = vld [vmem:[%s1506 + $0x142] sm:$0xff]
      %v2443 = vld [vmem:[%s1506 + $0x152] sm:$0xff]
      %v2444 = vld [vmem:[%s1506 + $0x15a] sm:$0xff]
      %v2445 = vld [vmem:[%s1506 + $0x16a] sm:$0xff]
      %v2446 = vld [vmem:[%s1506 + $0x172] sm:$0xff]
      %s2447 = scalar_lea.vmem %s1, 20
      %v2448 = vld [vmem:[%s2447] sm:$0xf]
      %v2450 = vsel %vm240, %v2415, 0
      %v2453 = vsel %vm240, %v2416, 0
      %v2456 = vsel %vm240, %v2417, 0
      %v2459 = vsel %vm240, %v2418, 0
      %v2462 = vsel %vm240, %v2419, 0
      %v2465 = vsel %vm240, %v2420, 0
      %v2468 = vsel %vm240, %v2421, 0
      %v2471 = vsel %vm240, %v2422, 0
      %v2474 = vsel %vm240, %v2423, 0
      %v2477 = vsel %vm240, %v2424, 0
      %v2480 = vsel %vm240, %v2425, 0
      %v2483 = vsel %vm240, %v2426, 0
      %v2486 = vsel %vm240, %v2427, 0
      %v2489 = vsel %vm240, %v2428, 0
      %v2492 = vsel %vm240, %v2429, 0
      %v2495 = vsel %vm240, %v2430, 0
      %v2498 = vsel %vm240, %v2431, 0
      %v2501 = vsel %vm240, %v2432, 0
      %v2504 = vsel %vm240, %v2433, 0
      %v2507 = vsel %vm240, %v2434, 0
      %v2510 = vsel %vm240, %v2435, 0
      %v2513 = vsel %vm240, %v2436, 0
      %v2516 = vsel %vm240, %v2437, 0
      %v2519 = vsel %vm240, %v2438, 0
      %v2522 = vsel %vm240, %v2439, 0
      %v2525 = vsel %vm240, %v2440, 0
      %v2528 = vsel %vm240, %v2441, 0
      %v2531 = vsel %vm240, %v2442, 0
      %v2534 = vsel %vm240, %v2443, 0
      %v2537 = vsel %vm240, %v2444, 0
      %v2540 = vsel %vm240, %v2445, 0
      %v2543 = vsel %vm240, %v2446, 0
      %v2546 = vsel %vm337, %v2448, 0
      %2548 = vmatprep.subr.mxu0 0.0
      %2549 = vmatpush1.msra.mxu0 0.0
      %2550 = vmatprep.subr.mxu0 0.0
      %2551 = vmatpush1.msra.mxu0 0.0
      %2552 = vmatprep.subr.mxu0 0.0
      %2553 = vmatpush1.msra.mxu0 0.0
      %2554 = vmatprep.subr.mxu0 0.0
      %2555 = vmatpush1.msra.mxu0 0.0
      %2556 = vmatprep.subr.mxu0 0.0
      %2557 = vmatpush1.msra.mxu0 0.0
      %2558 = vmatprep.subr.mxu0 0.0
      %2559 = vmatpush1.msra.mxu0 0.0
      %2560 = vmatprep.subr.mxu0 0.0
      %2561 = vmatpush1.msra.mxu0 0.0
      %2562 = vmatprep.subr.mxu0 0.0
      %2563 = vmatpush1.msra.mxu0 0.0
      %2564 = vmatprep.subr.mxu0 0.0
      %2565 = vmatpush1.msra.mxu0 0.0
      %2566 = vmatprep.subr.mxu0 0.0
      %2567 = vmatpush1.msra.mxu0 0.0
      %2568 = vmatprep.subr.mxu0 0.0
      %2569 = vmatpush1.msra.mxu0 0.0
      %2570 = vmatprep.subr.mxu0 0.0
      %2571 = vmatpush1.msra.mxu0 0.0
      %2572 = vmatprep.subr.mxu0 0.0
      %2573 = vmatpush1.msra.mxu0 0.0
      %2574 = vmatprep.subr.mxu0 0.0
      %2575 = vmatpush1.msra.mxu0 0.0
      %2576 = vmatprep.subr.mxu0 0.0
      %2577 = vmatpush1.msra.mxu0 0.0
      %2578 = vmatprep.subr.mxu0 0.0
      %2579 = vmatpush1.msra.mxu0 %v2546
      %2580 = vmatprep.subr.mxu0 0.0
      %2581 = vmatpush2.msra.mxu0 0.0
      %2582 = vmatprep.subr.mxu0 0.0
      %2583 = vmatpush2.msra.mxu0 0.0
      %2584 = vmatprep.subr.mxu0 0.0
      %2585 = vmatpush2.msra.mxu0 0.0
      %2586 = vmatprep.subr.mxu0 0.0
      %2587 = vmatpush2.msra.mxu0 0.0
      %2588 = vmatprep.subr.mxu0 0.0
      %2589 = vmatpush2.msra.mxu0 0.0
      %2590 = vmatprep.subr.mxu0 0.0
      %2591 = vmatpush2.msra.mxu0 0.0
      %2592 = vmatprep.subr.mxu0 0.0
      %2593 = vmatpush2.msra.mxu0 0.0
      %2594 = vmatprep.subr.mxu0 0.0
      %2595 = vmatpush2.msra.mxu0 0.0
      %2596 = vmatprep.subr.mxu0 0.0
      %2597 = vmatpush2.msra.mxu0 0.0
      %2598 = vmatprep.subr.mxu0 0.0
      %2599 = vmatpush2.msra.mxu0 0.0
      %2600 = vmatprep.subr.mxu0 0.0
      %2601 = vmatpush2.msra.mxu0 0.0
      %2602 = vmatprep.subr.mxu0 0.0
      %2603 = vmatpush2.msra.mxu0 0.0
      %2604 = vmatprep.subr.mxu0 0.0
      %2605 = vmatpush2.msra.mxu0 0.0
      %2606 = vmatprep.subr.mxu0 0.0
      %2607 = vmatpush2.msra.mxu0 0.0
      %2608 = vmatprep.subr.mxu0 0.0
      %2609 = vmatpush2.msra.mxu0 0.0
      %2610 = vmatprep.subr.mxu0 0.0
      %2611 = vmatpush2.msra.mxu0 0.0
      %2612 = vmatprep.mubr.f32.mxu0 0.0
      %2613 = vmatmul.mubr.f32.gmra.mxu0 %v2450
      %v2614 = vpop.f32.mrf.mxu0
      %v2615 = vadd.f32 0.0, %v2614
      %v2616 = vpop.f32.mrf.mxu0
      %2617 = vmatprep.mubr.f32.mxu0 0.0
      %2618 = vmatmul.mubr.f32.gmra.mxu0 %v2453
      %v2619 = vpop.f32.mrf.mxu0
      %v2620 = vadd.f32 0.0, %v2619
      %v2621 = vpop.f32.mrf.mxu0
      %2622 = vmatprep.mubr.f32.mxu0 0.0
      %2623 = vmatmul.mubr.f32.gmra.mxu0 %v2456
      %v2624 = vpop.f32.mrf.mxu0
      %v2625 = vadd.f32 0.0, %v2624
      %v2626 = vpop.f32.mrf.mxu0
      %2627 = vmatprep.mubr.f32.mxu0 0.0
      %2628 = vmatmul.mubr.f32.gmra.mxu0 %v2459
      %v2629 = vpop.f32.mrf.mxu0
      %v2630 = vadd.f32 0.0, %v2629
      %v2631 = vpop.f32.mrf.mxu0
      %2632 = vmatprep.mubr.f32.mxu0 0.0
      %2633 = vmatmul.mubr.f32.gmra.mxu0 %v2462
      %v2634 = vpop.f32.mrf.mxu0
      %v2635 = vadd.f32 0.0, %v2634
      %v2636 = vpop.f32.mrf.mxu0
      %2637 = vmatprep.mubr.f32.mxu0 0.0
      %2638 = vmatmul.mubr.f32.gmra.mxu0 %v2465
      %v2639 = vpop.f32.mrf.mxu0
      %v2640 = vadd.f32 0.0, %v2639
      %v2641 = vpop.f32.mrf.mxu0
      %2642 = vmatprep.mubr.f32.mxu0 0.0
      %2643 = vmatmul.mubr.f32.gmra.mxu0 %v2468
      %v2644 = vpop.f32.mrf.mxu0
      %v2645 = vadd.f32 0.0, %v2644
      %v2646 = vpop.f32.mrf.mxu0
      %2647 = vmatprep.mubr.f32.mxu0 0.0
      %2648 = vmatmul.mubr.f32.gmra.mxu0 %v2471
      %v2649 = vpop.f32.mrf.mxu0
      %v2650 = vadd.f32 0.0, %v2649
      %v2651 = vpop.f32.mrf.mxu0
      %2652 = vmatprep.mubr.f32.mxu0 0.0
      %2653 = vmatmul.mubr.f32.gmra.mxu0 %v2474
      %v2654 = vpop.f32.mrf.mxu0
      %v2655 = vadd.f32 0.0, %v2654
      %v2656 = vpop.f32.mrf.mxu0
      %2657 = vmatprep.mubr.f32.mxu0 0.0
      %2658 = vmatmul.mubr.f32.gmra.mxu0 %v2477
      %v2659 = vpop.f32.mrf.mxu0
      %v2660 = vadd.f32 0.0, %v2659
      %v2661 = vpop.f32.mrf.mxu0
      %2662 = vmatprep.mubr.f32.mxu0 0.0
      %2663 = vmatmul.mubr.f32.gmra.mxu0 %v2480
      %v2664 = vpop.f32.mrf.mxu0
      %v2665 = vadd.f32 0.0, %v2664
      %v2666 = vpop.f32.mrf.mxu0
      %2667 = vmatprep.mubr.f32.mxu0 0.0
      %2668 = vmatmul.mubr.f32.gmra.mxu0 %v2483
      %v2669 = vpop.f32.mrf.mxu0
      %v2670 = vadd.f32 0.0, %v2669
      %v2671 = vpop.f32.mrf.mxu0
      %2672 = vmatprep.mubr.f32.mxu0 0.0
      %2673 = vmatmul.mubr.f32.gmra.mxu0 %v2486
      %v2674 = vpop.f32.mrf.mxu0
      %v2675 = vadd.f32 0.0, %v2674
      %v2676 = vpop.f32.mrf.mxu0
      %2677 = vmatprep.mubr.f32.mxu0 0.0
      %2678 = vmatmul.mubr.f32.gmra.mxu0 %v2489
      %v2679 = vpop.f32.mrf.mxu0
      %v2680 = vadd.f32 0.0, %v2679
      %v2681 = vpop.f32.mrf.mxu0
      %2682 = vmatprep.mubr.f32.mxu0 0.0
      %2683 = vmatmul.mubr.f32.gmra.mxu0 %v2492
      %v2684 = vpop.f32.mrf.mxu0
      %v2685 = vadd.f32 0.0, %v2684
      %v2686 = vpop.f32.mrf.mxu0
      %2687 = vmatprep.mubr.f32.mxu0 0.0
      %2688 = vmatmul.mubr.f32.gmra.mxu0 %v2495
      %v2689 = vpop.f32.mrf.mxu0
      %v2690 = vadd.f32 0.0, %v2689
      %v2691 = vpop.f32.mrf.mxu0
      %2692 = vmatprep.mubr.f32.mxu0 0.0
      %2693 = vmatmul.mubr.f32.gmra.mxu0 %v2498
      %v2694 = vpop.f32.mrf.mxu0
      %v2695 = vadd.f32 0.0, %v2694
      %v2696 = vpop.f32.mrf.mxu0
      %2697 = vmatprep.mubr.f32.mxu0 0.0
      %2698 = vmatmul.mubr.f32.gmra.mxu0 %v2501
      %v2699 = vpop.f32.mrf.mxu0
      %v2700 = vadd.f32 0.0, %v2699
      %v2701 = vpop.f32.mrf.mxu0
      %2702 = vmatprep.mubr.f32.mxu0 0.0
      %2703 = vmatmul.mubr.f32.gmra.mxu0 %v2504
      %v2704 = vpop.f32.mrf.mxu0
      %v2705 = vadd.f32 0.0, %v2704
      %v2706 = vpop.f32.mrf.mxu0
      %2707 = vmatprep.mubr.f32.mxu0 0.0
      %2708 = vmatmul.mubr.f32.gmra.mxu0 %v2507
      %v2709 = vpop.f32.mrf.mxu0
      %v2710 = vadd.f32 0.0, %v2709
      %v2711 = vpop.f32.mrf.mxu0
      %2712 = vmatprep.mubr.f32.mxu0 0.0
      %2713 = vmatmul.mubr.f32.gmra.mxu0 %v2510
      %v2714 = vpop.f32.mrf.mxu0
      %v2715 = vadd.f32 0.0, %v2714
      %v2716 = vpop.f32.mrf.mxu0
      %2717 = vmatprep.mubr.f32.mxu0 0.0
      %2718 = vmatmul.mubr.f32.gmra.mxu0 %v2513
      %v2719 = vpop.f32.mrf.mxu0
      %v2720 = vadd.f32 0.0, %v2719
      %v2721 = vpop.f32.mrf.mxu0
      %2722 = vmatprep.mubr.f32.mxu0 0.0
      %2723 = vmatmul.mubr.f32.gmra.mxu0 %v2516
      %v2724 = vpop.f32.mrf.mxu0
      %v2725 = vadd.f32 0.0, %v2724
      %v2726 = vpop.f32.mrf.mxu0
      %2727 = vmatprep.mubr.f32.mxu0 0.0
      %2728 = vmatmul.mubr.f32.gmra.mxu0 %v2519
      %v2729 = vpop.f32.mrf.mxu0
      %v2730 = vadd.f32 0.0, %v2729
      %v2731 = vpop.f32.mrf.mxu0
      %2732 = vmatprep.mubr.f32.mxu0 0.0
      %2733 = vmatmul.mubr.f32.gmra.mxu0 %v2522
      %v2734 = vpop.f32.mrf.mxu0
      %v2735 = vadd.f32 0.0, %v2734
      %v2736 = vpop.f32.mrf.mxu0
      %2737 = vmatprep.mubr.f32.mxu0 0.0
      %2738 = vmatmul.mubr.f32.gmra.mxu0 %v2525
      %v2739 = vpop.f32.mrf.mxu0
      %v2740 = vadd.f32 0.0, %v2739
      %v2741 = vpop.f32.mrf.mxu0
      %2742 = vmatprep.mubr.f32.mxu0 0.0
      %2743 = vmatmul.mubr.f32.gmra.mxu0 %v2528
      %v2744 = vpop.f32.mrf.mxu0
      %v2745 = vadd.f32 0.0, %v2744
      %v2746 = vpop.f32.mrf.mxu0
      %2747 = vmatprep.mubr.f32.mxu0 0.0
      %2748 = vmatmul.mubr.f32.gmra.mxu0 %v2531
      %v2749 = vpop.f32.mrf.mxu0
      %v2750 = vadd.f32 0.0, %v2749
      %v2751 = vpop.f32.mrf.mxu0
      %2752 = vmatprep.mubr.f32.mxu0 0.0
      %2753 = vmatmul.mubr.f32.gmra.mxu0 %v2534
      %v2754 = vpop.f32.mrf.mxu0
      %v2755 = vadd.f32 0.0, %v2754
      %v2756 = vpop.f32.mrf.mxu0
      %2757 = vmatprep.mubr.f32.mxu0 0.0
      %2758 = vmatmul.mubr.f32.gmra.mxu0 %v2537
      %v2759 = vpop.f32.mrf.mxu0
      %v2760 = vadd.f32 0.0, %v2759
      %v2761 = vpop.f32.mrf.mxu0
      %2762 = vmatprep.mubr.f32.mxu0 0.0
      %2763 = vmatmul.mubr.f32.gmra.mxu0 %v2540
      %v2764 = vpop.f32.mrf.mxu0
      %v2765 = vadd.f32 0.0, %v2764
      %v2766 = vpop.f32.mrf.mxu0
      %2767 = vmatprep.mubr.f32.mxu0 0.0
      %2768 = vmatmul.mubr.f32.gmra.mxu0 %v2543
      %v2769 = vpop.f32.mrf.mxu0
      %v2770 = vadd.f32 0.0, %v2769
      %v2771 = vpop.f32.mrf.mxu0
      %2772 = vdwg.mxu0
      %v2773 = vld [vmem:[#allocation2] sm:$0xff]
      %v2774 = vld [vmem:[#allocation2 + $0x8] sm:$0xff]
      %v2775 = vld [vmem:[#allocation2 + $0x10] sm:$0xff]
      %v2776 = vld [vmem:[#allocation2 + $0x18] sm:$0xff]
      %v2777 = vld [vmem:[#allocation2 + $0x20] sm:$0xff]
      %v2778 = vld [vmem:[#allocation2 + $0x28] sm:$0xff]
      %v2779 = vld [vmem:[#allocation2 + $0x30] sm:$0xff]
      %v2780 = vld [vmem:[#allocation2 + $0x38] sm:$0xff]
      %v2781 = vld [vmem:[#allocation2 + $0x40] sm:$0xff]
      %v2782 = vld [vmem:[#allocation2 + $0x48] sm:$0xff]
      %v2783 = vld [vmem:[#allocation2 + $0x50] sm:$0xff]
      %v2784 = vld [vmem:[#allocation2 + $0x58] sm:$0xff]
      %v2785 = vld [vmem:[#allocation2 + $0x60] sm:$0xff]
      %v2786 = vld [vmem:[#allocation2 + $0x68] sm:$0xff]
      %v2787 = vld [vmem:[#allocation2 + $0x70] sm:$0xff]
      %v2788 = vld [vmem:[#allocation2 + $0x78] sm:$0xff]
      %v2789 = vld [vmem:[#allocation2 + $0x80] sm:$0xff]
      %v2790 = vld [vmem:[#allocation2 + $0x88] sm:$0xff]
      %v2791 = vld [vmem:[#allocation2 + $0x90] sm:$0xff]
      %v2792 = vld [vmem:[#allocation2 + $0x98] sm:$0xff]
      %v2793 = vld [vmem:[#allocation2 + $0xa0] sm:$0xff]
      %v2794 = vld [vmem:[#allocation2 + $0xa8] sm:$0xff]
      %v2795 = vld [vmem:[#allocation2 + $0xb0] sm:$0xff]
      %v2796 = vld [vmem:[#allocation2 + $0xb8] sm:$0xff]
      %v2797 = vld [vmem:[#allocation2 + $0xc0] sm:$0xff]
      %v2798 = vld [vmem:[#allocation2 + $0xc8] sm:$0xff]
      %v2799 = vld [vmem:[#allocation2 + $0xd0] sm:$0xff]
      %v2800 = vld [vmem:[#allocation2 + $0xd8] sm:$0xff]
      %v2801 = vld [vmem:[#allocation2 + $0xe0] sm:$0xff]
      %v2802 = vld [vmem:[#allocation2 + $0xe8] sm:$0xff]
      %v2803 = vld [vmem:[#allocation2 + $0xf0] sm:$0xff]
      %v2804 = vld [vmem:[#allocation2 + $0xf8] sm:$0xff]
      %v2805 = vadd.f32 %v2773, %v2615
      %v2806 = vadd.f32 %v2774, %v2620
      %v2807 = vadd.f32 %v2775, %v2625
      %v2808 = vadd.f32 %v2776, %v2630
      %v2809 = vadd.f32 %v2777, %v2635
      %v2810 = vadd.f32 %v2778, %v2640
      %v2811 = vadd.f32 %v2779, %v2645
      %v2812 = vadd.f32 %v2780, %v2650
      %v2813 = vadd.f32 %v2781, %v2655
      %v2814 = vadd.f32 %v2782, %v2660
      %v2815 = vadd.f32 %v2783, %v2665
      %v2816 = vadd.f32 %v2784, %v2670
      %v2817 = vadd.f32 %v2785, %v2675
      %v2818 = vadd.f32 %v2786, %v2680
      %v2819 = vadd.f32 %v2787, %v2685
      %v2820 = vadd.f32 %v2788, %v2690
      %v2821 = vadd.f32 %v2789, %v2695
      %v2822 = vadd.f32 %v2790, %v2700
      %v2823 = vadd.f32 %v2791, %v2705
      %v2824 = vadd.f32 %v2792, %v2710
      %v2825 = vadd.f32 %v2793, %v2715
      %v2826 = vadd.f32 %v2794, %v2720
      %v2827 = vadd.f32 %v2795, %v2725
      %v2828 = vadd.f32 %v2796, %v2730
      %v2829 = vadd.f32 %v2797, %v2735
      %v2830 = vadd.f32 %v2798, %v2740
      %v2831 = vadd.f32 %v2799, %v2745
      %v2832 = vadd.f32 %v2800, %v2750
      %v2833 = vadd.f32 %v2801, %v2755
      %v2834 = vadd.f32 %v2802, %v2760
      %v2835 = vadd.f32 %v2803, %v2765
      %v2836 = vadd.f32 %v2804, %v2770
      %2837 = vst [vmem:[#allocation2] sm:$0xff] %v2805
      %2838 = vst [vmem:[#allocation2 + $0x8] sm:$0xff] %v2806
      %2839 = vst [vmem:[#allocation2 + $0x10] sm:$0xff] %v2807
      %2840 = vst [vmem:[#allocation2 + $0x18] sm:$0xff] %v2808
      %2841 = vst [vmem:[#allocation2 + $0x20] sm:$0xff] %v2809
      %2842 = vst [vmem:[#allocation2 + $0x28] sm:$0xff] %v2810
      %2843 = vst [vmem:[#allocation2 + $0x30] sm:$0xff] %v2811
      %2844 = vst [vmem:[#allocation2 + $0x38] sm:$0xff] %v2812
      %2845 = vst [vmem:[#allocation2 + $0x40] sm:$0xff] %v2813
      %2846 = vst [vmem:[#allocation2 + $0x48] sm:$0xff] %v2814
      %2847 = vst [vmem:[#allocation2 + $0x50] sm:$0xff] %v2815
      %2848 = vst [vmem:[#allocation2 + $0x58] sm:$0xff] %v2816
      %2849 = vst [vmem:[#allocation2 + $0x60] sm:$0xff] %v2817
      %2850 = vst [vmem:[#allocation2 + $0x68] sm:$0xff] %v2818
      %2851 = vst [vmem:[#allocation2 + $0x70] sm:$0xff] %v2819
      %2852 = vst [vmem:[#allocation2 + $0x78] sm:$0xff] %v2820
      %2853 = vst [vmem:[#allocation2 + $0x80] sm:$0xff] %v2821
      %2854 = vst [vmem:[#allocation2 + $0x88] sm:$0xff] %v2822
      %2855 = vst [vmem:[#allocation2 + $0x90] sm:$0xff] %v2823
      %2856 = vst [vmem:[#allocation2 + $0x98] sm:$0xff] %v2824
      %2857 = vst [vmem:[#allocation2 + $0xa0] sm:$0xff] %v2825
      %2858 = vst [vmem:[#allocation2 + $0xa8] sm:$0xff] %v2826
      %2859 = vst [vmem:[#allocation2 + $0xb0] sm:$0xff] %v2827
      %2860 = vst [vmem:[#allocation2 + $0xb8] sm:$0xff] %v2828
      %2861 = vst [vmem:[#allocation2 + $0xc0] sm:$0xff] %v2829
      %2862 = vst [vmem:[#allocation2 + $0xc8] sm:$0xff] %v2830
      %2863 = vst [vmem:[#allocation2 + $0xd0] sm:$0xff] %v2831
      %2864 = vst [vmem:[#allocation2 + $0xd8] sm:$0xff] %v2832
      %2865 = vst [vmem:[#allocation2 + $0xe0] sm:$0xff] %v2833
      %2866 = vst [vmem:[#allocation2 + $0xe8] sm:$0xff] %v2834
      %2867 = vst [vmem:[#allocation2 + $0xf0] sm:$0xff] %v2835
      %2868 = vst [vmem:[#allocation2 + $0xf8] sm:$0xff] %v2836
      %s2869 = scalar_lea.vmem %s197, 48
      %v2870 = vld [vmem:[%s2869] sm:$0xff]
      %v2871 = vld [vmem:[%s2869 + $0x8] sm:$0xff]
      %v2872 = vld [vmem:[%s2869 + $0x18] sm:$0xff]
      %v2873 = vld [vmem:[%s2869 + $0x20] sm:$0xff]
      %v2874 = vld [vmem:[%s2869 + $0x30] sm:$0xff]
      %v2875 = vld [vmem:[%s2869 + $0x38] sm:$0xff]
      %v2876 = vld [vmem:[%s2869 + $0x48] sm:$0xff]
      %v2877 = vld [vmem:[%s2869 + $0x50] sm:$0xff]
      %v2878 = vld [vmem:[%s2869 + $0x60] sm:$0xff]
      %v2879 = vld [vmem:[%s2869 + $0x68] sm:$0xff]
      %v2880 = vld [vmem:[%s2869 + $0x78] sm:$0xff]
      %v2881 = vld [vmem:[%s2869 + $0x80] sm:$0xff]
      %v2882 = vld [vmem:[%s2869 + $0x90] sm:$0xff]
      %v2883 = vld [vmem:[%s2869 + $0x98] sm:$0xff]
      %v2884 = vld [vmem:[%s2869 + $0xa8] sm:$0xff]
      %v2885 = vld [vmem:[%s2869 + $0xb0] sm:$0xff]
      %v2886 = vld [vmem:[%s2869 + $0xc0] sm:$0xff]
      %v2887 = vld [vmem:[%s2869 + $0xc8] sm:$0xff]
      %v2888 = vld [vmem:[%s2869 + $0xd8] sm:$0xff]
      %v2889 = vld [vmem:[%s2869 + $0xe0] sm:$0xff]
      %v2890 = vld [vmem:[%s2869 + $0xf0] sm:$0xff]
      %v2891 = vld [vmem:[%s2869 + $0xf8] sm:$0xff]
      %v2892 = vld [vmem:[%s2869 + $0x108] sm:$0xff]
      %v2893 = vld [vmem:[%s2869 + $0x110] sm:$0xff]
      %v2894 = vld [vmem:[%s2869 + $0x120] sm:$0xff]
      %v2895 = vld [vmem:[%s2869 + $0x128] sm:$0xff]
      %v2896 = vld [vmem:[%s2869 + $0x138] sm:$0xff]
      %v2897 = vld [vmem:[%s2869 + $0x140] sm:$0xff]
      %v2898 = vld [vmem:[%s2869 + $0x150] sm:$0xff]
      %v2899 = vld [vmem:[%s2869 + $0x158] sm:$0xff]
      %v2900 = vld [vmem:[%s2869 + $0x168] sm:$0xff]
      %v2901 = vld [vmem:[%s2869 + $0x170] sm:$0xff]
      %s2902 = scalar_lea.vmem %s1, 24
      %v2903 = vld [vmem:[%s2902] sm:$0xf]
      %v2905 = vsel %vm240, %v2870, 0
      %v2908 = vsel %vm240, %v2871, 0
      %v2911 = vsel %vm240, %v2872, 0
      %v2914 = vsel %vm240, %v2873, 0
      %v2917 = vsel %vm240, %v2874, 0
      %v2920 = vsel %vm240, %v2875, 0
      %v2923 = vsel %vm240, %v2876, 0
      %v2926 = vsel %vm240, %v2877, 0
      %v2929 = vsel %vm240, %v2878, 0
      %v2932 = vsel %vm240, %v2879, 0
      %v2935 = vsel %vm240, %v2880, 0
      %v2938 = vsel %vm240, %v2881, 0
      %v2941 = vsel %vm240, %v2882, 0
      %v2944 = vsel %vm240, %v2883, 0
      %v2947 = vsel %vm240, %v2884, 0
      %v2950 = vsel %vm240, %v2885, 0
      %v2953 = vsel %vm240, %v2886, 0
      %v2956 = vsel %vm240, %v2887, 0
      %v2959 = vsel %vm240, %v2888, 0
      %v2962 = vsel %vm240, %v2889, 0
      %v2965 = vsel %vm240, %v2890, 0
      %v2968 = vsel %vm240, %v2891, 0
      %v2971 = vsel %vm240, %v2892, 0
      %v2974 = vsel %vm240, %v2893, 0
      %v2977 = vsel %vm240, %v2894, 0
      %v2980 = vsel %vm240, %v2895, 0
      %v2983 = vsel %vm240, %v2896, 0
      %v2986 = vsel %vm240, %v2897, 0
      %v2989 = vsel %vm240, %v2898, 0
      %v2992 = vsel %vm240, %v2899, 0
      %v2995 = vsel %vm240, %v2900, 0
      %v2998 = vsel %vm240, %v2901, 0
      %v3001 = vsel %vm337, %v2903, 0
      %3003 = vmatprep.subr.mxu0 0.0
      %3004 = vmatpush1.msra.mxu0 0.0
      %3005 = vmatprep.subr.mxu0 0.0
      %3006 = vmatpush1.msra.mxu0 0.0
      %3007 = vmatprep.subr.mxu0 0.0
      %3008 = vmatpush1.msra.mxu0 0.0
      %3009 = vmatprep.subr.mxu0 0.0
      %3010 = vmatpush1.msra.mxu0 0.0
      %3011 = vmatprep.subr.mxu0 0.0
      %3012 = vmatpush1.msra.mxu0 0.0
      %3013 = vmatprep.subr.mxu0 0.0
      %3014 = vmatpush1.msra.mxu0 0.0
      %3015 = vmatprep.subr.mxu0 0.0
      %3016 = vmatpush1.msra.mxu0 0.0
      %3017 = vmatprep.subr.mxu0 0.0
      %3018 = vmatpush1.msra.mxu0 0.0
      %3019 = vmatprep.subr.mxu0 0.0
      %3020 = vmatpush1.msra.mxu0 0.0
      %3021 = vmatprep.subr.mxu0 0.0
      %3022 = vmatpush1.msra.mxu0 0.0
      %3023 = vmatprep.subr.mxu0 0.0
      %3024 = vmatpush1.msra.mxu0 0.0
      %3025 = vmatprep.subr.mxu0 0.0
      %3026 = vmatpush1.msra.mxu0 0.0
      %3027 = vmatprep.subr.mxu0 0.0
      %3028 = vmatpush1.msra.mxu0 0.0
      %3029 = vmatprep.subr.mxu0 0.0
      %3030 = vmatpush1.msra.mxu0 0.0
      %3031 = vmatprep.subr.mxu0 0.0
      %3032 = vmatpush1.msra.mxu0 0.0
      %3033 = vmatprep.subr.mxu0 0.0
      %3034 = vmatpush1.msra.mxu0 %v3001
      %3035 = vmatprep.subr.mxu0 0.0
      %3036 = vmatpush2.msra.mxu0 0.0
      %3037 = vmatprep.subr.mxu0 0.0
      %3038 = vmatpush2.msra.mxu0 0.0
      %3039 = vmatprep.subr.mxu0 0.0
      %3040 = vmatpush2.msra.mxu0 0.0
      %3041 = vmatprep.subr.mxu0 0.0
      %3042 = vmatpush2.msra.mxu0 0.0
      %3043 = vmatprep.subr.mxu0 0.0
      %3044 = vmatpush2.msra.mxu0 0.0
      %3045 = vmatprep.subr.mxu0 0.0
      %3046 = vmatpush2.msra.mxu0 0.0
      %3047 = vmatprep.subr.mxu0 0.0
      %3048 = vmatpush2.msra.mxu0 0.0
      %3049 = vmatprep.subr.mxu0 0.0
      %3050 = vmatpush2.msra.mxu0 0.0
      %3051 = vmatprep.subr.mxu0 0.0
      %3052 = vmatpush2.msra.mxu0 0.0
      %3053 = vmatprep.subr.mxu0 0.0
      %3054 = vmatpush2.msra.mxu0 0.0
      %3055 = vmatprep.subr.mxu0 0.0
      %3056 = vmatpush2.msra.mxu0 0.0
      %3057 = vmatprep.subr.mxu0 0.0
      %3058 = vmatpush2.msra.mxu0 0.0
      %3059 = vmatprep.subr.mxu0 0.0
      %3060 = vmatpush2.msra.mxu0 0.0
      %3061 = vmatprep.subr.mxu0 0.0
      %3062 = vmatpush2.msra.mxu0 0.0
      %3063 = vmatprep.subr.mxu0 0.0
      %3064 = vmatpush2.msra.mxu0 0.0
      %3065 = vmatprep.subr.mxu0 0.0
      %3066 = vmatpush2.msra.mxu0 0.0
      %3067 = vmatprep.mubr.f32.mxu0 0.0
      %3068 = vmatmul.mubr.f32.gmra.mxu0 %v2905
      %v3069 = vpop.f32.mrf.mxu0
      %v3070 = vadd.f32 0.0, %v3069
      %v3071 = vpop.f32.mrf.mxu0
      %3072 = vmatprep.mubr.f32.mxu0 0.0
      %3073 = vmatmul.mubr.f32.gmra.mxu0 %v2908
      %v3074 = vpop.f32.mrf.mxu0
      %v3075 = vadd.f32 0.0, %v3074
      %v3076 = vpop.f32.mrf.mxu0
      %3077 = vmatprep.mubr.f32.mxu0 0.0
      %3078 = vmatmul.mubr.f32.gmra.mxu0 %v2911
      %v3079 = vpop.f32.mrf.mxu0
      %v3080 = vadd.f32 0.0, %v3079
      %v3081 = vpop.f32.mrf.mxu0
      %3082 = vmatprep.mubr.f32.mxu0 0.0
      %3083 = vmatmul.mubr.f32.gmra.mxu0 %v2914
      %v3084 = vpop.f32.mrf.mxu0
      %v3085 = vadd.f32 0.0, %v3084
      %v3086 = vpop.f32.mrf.mxu0
      %3087 = vmatprep.mubr.f32.mxu0 0.0
      %3088 = vmatmul.mubr.f32.gmra.mxu0 %v2917
      %v3089 = vpop.f32.mrf.mxu0
      %v3090 = vadd.f32 0.0, %v3089
      %v3091 = vpop.f32.mrf.mxu0
      %3092 = vmatprep.mubr.f32.mxu0 0.0
      %3093 = vmatmul.mubr.f32.gmra.mxu0 %v2920
      %v3094 = vpop.f32.mrf.mxu0
      %v3095 = vadd.f32 0.0, %v3094
      %v3096 = vpop.f32.mrf.mxu0
      %3097 = vmatprep.mubr.f32.mxu0 0.0
      %3098 = vmatmul.mubr.f32.gmra.mxu0 %v2923
      %v3099 = vpop.f32.mrf.mxu0
      %v3100 = vadd.f32 0.0, %v3099
      %v3101 = vpop.f32.mrf.mxu0
      %3102 = vmatprep.mubr.f32.mxu0 0.0
      %3103 = vmatmul.mubr.f32.gmra.mxu0 %v2926
      %v3104 = vpop.f32.mrf.mxu0
      %v3105 = vadd.f32 0.0, %v3104
      %v3106 = vpop.f32.mrf.mxu0
      %3107 = vmatprep.mubr.f32.mxu0 0.0
      %3108 = vmatmul.mubr.f32.gmra.mxu0 %v2929
      %v3109 = vpop.f32.mrf.mxu0
      %v3110 = vadd.f32 0.0, %v3109
      %v3111 = vpop.f32.mrf.mxu0
      %3112 = vmatprep.mubr.f32.mxu0 0.0
      %3113 = vmatmul.mubr.f32.gmra.mxu0 %v2932
      %v3114 = vpop.f32.mrf.mxu0
      %v3115 = vadd.f32 0.0, %v3114
      %v3116 = vpop.f32.mrf.mxu0
      %3117 = vmatprep.mubr.f32.mxu0 0.0
      %3118 = vmatmul.mubr.f32.gmra.mxu0 %v2935
      %v3119 = vpop.f32.mrf.mxu0
      %v3120 = vadd.f32 0.0, %v3119
      %v3121 = vpop.f32.mrf.mxu0
      %3122 = vmatprep.mubr.f32.mxu0 0.0
      %3123 = vmatmul.mubr.f32.gmra.mxu0 %v2938
      %v3124 = vpop.f32.mrf.mxu0
      %v3125 = vadd.f32 0.0, %v3124
      %v3126 = vpop.f32.mrf.mxu0
      %3127 = vmatprep.mubr.f32.mxu0 0.0
      %3128 = vmatmul.mubr.f32.gmra.mxu0 %v2941
      %v3129 = vpop.f32.mrf.mxu0
      %v3130 = vadd.f32 0.0, %v3129
      %v3131 = vpop.f32.mrf.mxu0
      %3132 = vmatprep.mubr.f32.mxu0 0.0
      %3133 = vmatmul.mubr.f32.gmra.mxu0 %v2944
      %v3134 = vpop.f32.mrf.mxu0
      %v3135 = vadd.f32 0.0, %v3134
      %v3136 = vpop.f32.mrf.mxu0
      %3137 = vmatprep.mubr.f32.mxu0 0.0
      %3138 = vmatmul.mubr.f32.gmra.mxu0 %v2947
      %v3139 = vpop.f32.mrf.mxu0
      %v3140 = vadd.f32 0.0, %v3139
      %v3141 = vpop.f32.mrf.mxu0
      %3142 = vmatprep.mubr.f32.mxu0 0.0
      %3143 = vmatmul.mubr.f32.gmra.mxu0 %v2950
      %v3144 = vpop.f32.mrf.mxu0
      %v3145 = vadd.f32 0.0, %v3144
      %v3146 = vpop.f32.mrf.mxu0
      %3147 = vmatprep.mubr.f32.mxu0 0.0
      %3148 = vmatmul.mubr.f32.gmra.mxu0 %v2953
      %v3149 = vpop.f32.mrf.mxu0
      %v3150 = vadd.f32 0.0, %v3149
      %v3151 = vpop.f32.mrf.mxu0
      %3152 = vmatprep.mubr.f32.mxu0 0.0
      %3153 = vmatmul.mubr.f32.gmra.mxu0 %v2956
      %v3154 = vpop.f32.mrf.mxu0
      %v3155 = vadd.f32 0.0, %v3154
      %v3156 = vpop.f32.mrf.mxu0
      %3157 = vmatprep.mubr.f32.mxu0 0.0
      %3158 = vmatmul.mubr.f32.gmra.mxu0 %v2959
      %v3159 = vpop.f32.mrf.mxu0
      %v3160 = vadd.f32 0.0, %v3159
      %v3161 = vpop.f32.mrf.mxu0
      %3162 = vmatprep.mubr.f32.mxu0 0.0
      %3163 = vmatmul.mubr.f32.gmra.mxu0 %v2962
      %v3164 = vpop.f32.mrf.mxu0
      %v3165 = vadd.f32 0.0, %v3164
      %v3166 = vpop.f32.mrf.mxu0
      %3167 = vmatprep.mubr.f32.mxu0 0.0
      %3168 = vmatmul.mubr.f32.gmra.mxu0 %v2965
      %v3169 = vpop.f32.mrf.mxu0
      %v3170 = vadd.f32 0.0, %v3169
      %v3171 = vpop.f32.mrf.mxu0
      %3172 = vmatprep.mubr.f32.mxu0 0.0
      %3173 = vmatmul.mubr.f32.gmra.mxu0 %v2968
      %v3174 = vpop.f32.mrf.mxu0
      %v3175 = vadd.f32 0.0, %v3174
      %v3176 = vpop.f32.mrf.mxu0
      %3177 = vmatprep.mubr.f32.mxu0 0.0
      %3178 = vmatmul.mubr.f32.gmra.mxu0 %v2971
      %v3179 = vpop.f32.mrf.mxu0
      %v3180 = vadd.f32 0.0, %v3179
      %v3181 = vpop.f32.mrf.mxu0
      %3182 = vmatprep.mubr.f32.mxu0 0.0
      %3183 = vmatmul.mubr.f32.gmra.mxu0 %v2974
      %v3184 = vpop.f32.mrf.mxu0
      %v3185 = vadd.f32 0.0, %v3184
      %v3186 = vpop.f32.mrf.mxu0
      %3187 = vmatprep.mubr.f32.mxu0 0.0
      %3188 = vmatmul.mubr.f32.gmra.mxu0 %v2977
      %v3189 = vpop.f32.mrf.mxu0
      %v3190 = vadd.f32 0.0, %v3189
      %v3191 = vpop.f32.mrf.mxu0
      %3192 = vmatprep.mubr.f32.mxu0 0.0
      %3193 = vmatmul.mubr.f32.gmra.mxu0 %v2980
      %v3194 = vpop.f32.mrf.mxu0
      %v3195 = vadd.f32 0.0, %v3194
      %v3196 = vpop.f32.mrf.mxu0
      %3197 = vmatprep.mubr.f32.mxu0 0.0
      %3198 = vmatmul.mubr.f32.gmra.mxu0 %v2983
      %v3199 = vpop.f32.mrf.mxu0
      %v3200 = vadd.f32 0.0, %v3199
      %v3201 = vpop.f32.mrf.mxu0
      %3202 = vmatprep.mubr.f32.mxu0 0.0
      %3203 = vmatmul.mubr.f32.gmra.mxu0 %v2986
      %v3204 = vpop.f32.mrf.mxu0
      %v3205 = vadd.f32 0.0, %v3204
      %v3206 = vpop.f32.mrf.mxu0
      %3207 = vmatprep.mubr.f32.mxu0 0.0
      %3208 = vmatmul.mubr.f32.gmra.mxu0 %v2989
      %v3209 = vpop.f32.mrf.mxu0
      %v3210 = vadd.f32 0.0, %v3209
      %v3211 = vpop.f32.mrf.mxu0
      %3212 = vmatprep.mubr.f32.mxu0 0.0
      %3213 = vmatmul.mubr.f32.gmra.mxu0 %v2992
      %v3214 = vpop.f32.mrf.mxu0
      %v3215 = vadd.f32 0.0, %v3214
      %v3216 = vpop.f32.mrf.mxu0
      %3217 = vmatprep.mubr.f32.mxu0 0.0
      %3218 = vmatmul.mubr.f32.gmra.mxu0 %v2995
      %v3219 = vpop.f32.mrf.mxu0
      %v3220 = vadd.f32 0.0, %v3219
      %v3221 = vpop.f32.mrf.mxu0
      %3222 = vmatprep.mubr.f32.mxu0 0.0
      %3223 = vmatmul.mubr.f32.gmra.mxu0 %v2998
      %v3224 = vpop.f32.mrf.mxu0
      %v3225 = vadd.f32 0.0, %v3224
      %v3226 = vpop.f32.mrf.mxu0
      %3227 = vdwg.mxu0
      %v3228 = vld [vmem:[#allocation2] sm:$0xff]
      %v3229 = vld [vmem:[#allocation2 + $0x8] sm:$0xff]
      %v3230 = vld [vmem:[#allocation2 + $0x10] sm:$0xff]
      %v3231 = vld [vmem:[#allocation2 + $0x18] sm:$0xff]
      %v3232 = vld [vmem:[#allocation2 + $0x20] sm:$0xff]
      %v3233 = vld [vmem:[#allocation2 + $0x28] sm:$0xff]
      %v3234 = vld [vmem:[#allocation2 + $0x30] sm:$0xff]
      %v3235 = vld [vmem:[#allocation2 + $0x38] sm:$0xff]
      %v3236 = vld [vmem:[#allocation2 + $0x40] sm:$0xff]
      %v3237 = vld [vmem:[#allocation2 + $0x48] sm:$0xff]
      %v3238 = vld [vmem:[#allocation2 + $0x50] sm:$0xff]
      %v3239 = vld [vmem:[#allocation2 + $0x58] sm:$0xff]
      %v3240 = vld [vmem:[#allocation2 + $0x60] sm:$0xff]
      %v3241 = vld [vmem:[#allocation2 + $0x68] sm:$0xff]
      %v3242 = vld [vmem:[#allocation2 + $0x70] sm:$0xff]
      %v3243 = vld [vmem:[#allocation2 + $0x78] sm:$0xff]
      %v3244 = vld [vmem:[#allocation2 + $0x80] sm:$0xff]
      %v3245 = vld [vmem:[#allocation2 + $0x88] sm:$0xff]
      %v3246 = vld [vmem:[#allocation2 + $0x90] sm:$0xff]
      %v3247 = vld [vmem:[#allocation2 + $0x98] sm:$0xff]
      %v3248 = vld [vmem:[#allocation2 + $0xa0] sm:$0xff]
      %v3249 = vld [vmem:[#allocation2 + $0xa8] sm:$0xff]
      %v3250 = vld [vmem:[#allocation2 + $0xb0] sm:$0xff]
      %v3251 = vld [vmem:[#allocation2 + $0xb8] sm:$0xff]
      %v3252 = vld [vmem:[#allocation2 + $0xc0] sm:$0xff]
      %v3253 = vld [vmem:[#allocation2 + $0xc8] sm:$0xff]
      %v3254 = vld [vmem:[#allocation2 + $0xd0] sm:$0xff]
      %v3255 = vld [vmem:[#allocation2 + $0xd8] sm:$0xff]
      %v3256 = vld [vmem:[#allocation2 + $0xe0] sm:$0xff]
      %v3257 = vld [vmem:[#allocation2 + $0xe8] sm:$0xff]
      %v3258 = vld [vmem:[#allocation2 + $0xf0] sm:$0xff]
      %v3259 = vld [vmem:[#allocation2 + $0xf8] sm:$0xff]
      %v3260 = vadd.f32 %v3228, %v3070
      %v3261 = vadd.f32 %v3229, %v3075
      %v3262 = vadd.f32 %v3230, %v3080
      %v3263 = vadd.f32 %v3231, %v3085
      %v3264 = vadd.f32 %v3232, %v3090
      %v3265 = vadd.f32 %v3233, %v3095
      %v3266 = vadd.f32 %v3234, %v3100
      %v3267 = vadd.f32 %v3235, %v3105
      %v3268 = vadd.f32 %v3236, %v3110
      %v3269 = vadd.f32 %v3237, %v3115
      %v3270 = vadd.f32 %v3238, %v3120
      %v3271 = vadd.f32 %v3239, %v3125
      %v3272 = vadd.f32 %v3240, %v3130
      %v3273 = vadd.f32 %v3241, %v3135
      %v3274 = vadd.f32 %v3242, %v3140
      %v3275 = vadd.f32 %v3243, %v3145
      %v3276 = vadd.f32 %v3244, %v3150
      %v3277 = vadd.f32 %v3245, %v3155
      %v3278 = vadd.f32 %v3246, %v3160
      %v3279 = vadd.f32 %v3247, %v3165
      %v3280 = vadd.f32 %v3248, %v3170
      %v3281 = vadd.f32 %v3249, %v3175
      %v3282 = vadd.f32 %v3250, %v3180
      %v3283 = vadd.f32 %v3251, %v3185
      %v3284 = vadd.f32 %v3252, %v3190
      %v3285 = vadd.f32 %v3253, %v3195
      %v3286 = vadd.f32 %v3254, %v3200
      %v3287 = vadd.f32 %v3255, %v3205
      %v3288 = vadd.f32 %v3256, %v3210
      %v3289 = vadd.f32 %v3257, %v3215
      %v3290 = vadd.f32 %v3258, %v3220
      %v3291 = vadd.f32 %v3259, %v3225
      %3292 = vst [vmem:[#allocation2] sm:$0xff] %v3260
      %3293 = vst [vmem:[#allocation2 + $0x8] sm:$0xff] %v3261
      %3294 = vst [vmem:[#allocation2 + $0x10] sm:$0xff] %v3262
      %3295 = vst [vmem:[#allocation2 + $0x18] sm:$0xff] %v3263
      %3296 = vst [vmem:[#allocation2 + $0x20] sm:$0xff] %v3264
      %3297 = vst [vmem:[#allocation2 + $0x28] sm:$0xff] %v3265
      %3298 = vst [vmem:[#allocation2 + $0x30] sm:$0xff] %v3266
      %3299 = vst [vmem:[#allocation2 + $0x38] sm:$0xff] %v3267
      %3300 = vst [vmem:[#allocation2 + $0x40] sm:$0xff] %v3268
      %3301 = vst [vmem:[#allocation2 + $0x48] sm:$0xff] %v3269
      %3302 = vst [vmem:[#allocation2 + $0x50] sm:$0xff] %v3270
      %3303 = vst [vmem:[#allocation2 + $0x58] sm:$0xff] %v3271
      %3304 = vst [vmem:[#allocation2 + $0x60] sm:$0xff] %v3272
      %3305 = vst [vmem:[#allocation2 + $0x68] sm:$0xff] %v3273
      %3306 = vst [vmem:[#allocation2 + $0x70] sm:$0xff] %v3274
      %3307 = vst [vmem:[#allocation2 + $0x78] sm:$0xff] %v3275
      %3308 = vst [vmem:[#allocation2 + $0x80] sm:$0xff] %v3276
      %3309 = vst [vmem:[#allocation2 + $0x88] sm:$0xff] %v3277
      %3310 = vst [vmem:[#allocation2 + $0x90] sm:$0xff] %v3278
      %3311 = vst [vmem:[#allocation2 + $0x98] sm:$0xff] %v3279
      %3312 = vst [vmem:[#allocation2 + $0xa0] sm:$0xff] %v3280
      %3313 = vst [vmem:[#allocation2 + $0xa8] sm:$0xff] %v3281
      %3314 = vst [vmem:[#allocation2 + $0xb0] sm:$0xff] %v3282
      %3315 = vst [vmem:[#allocation2 + $0xb8] sm:$0xff] %v3283
      %3316 = vst [vmem:[#allocation2 + $0xc0] sm:$0xff] %v3284
      %3317 = vst [vmem:[#allocation2 + $0xc8] sm:$0xff] %v3285
      %3318 = vst [vmem:[#allocation2 + $0xd0] sm:$0xff] %v3286
      %3319 = vst [vmem:[#allocation2 + $0xd8] sm:$0xff] %v3287
      %3320 = vst [vmem:[#allocation2 + $0xe0] sm:$0xff] %v3288
      %3321 = vst [vmem:[#allocation2 + $0xe8] sm:$0xff] %v3289
      %3322 = vst [vmem:[#allocation2 + $0xf0] sm:$0xff] %v3290
      %3323 = vst [vmem:[#allocation2 + $0xf8] sm:$0xff] %v3291
      %v3324 = vld [vmem:[%s2869 + $0x1] sm:$0xff]
      %v3325 = vld [vmem:[%s2869 + $0x9] sm:$0xff]
      %v3326 = vld [vmem:[%s2869 + $0x19] sm:$0xff]
      %v3327 = vld [vmem:[%s2869 + $0x21] sm:$0xff]
      %v3328 = vld [vmem:[%s2869 + $0x31] sm:$0xff]
      %v3329 = vld [vmem:[%s2869 + $0x39] sm:$0xff]
      %v3330 = vld [vmem:[%s2869 + $0x49] sm:$0xff]
      %v3331 = vld [vmem:[%s2869 + $0x51] sm:$0xff]
      %v3332 = vld [vmem:[%s2869 + $0x61] sm:$0xff]
      %v3333 = vld [vmem:[%s2869 + $0x69] sm:$0xff]
      %v3334 = vld [vmem:[%s2869 + $0x79] sm:$0xff]
      %v3335 = vld [vmem:[%s2869 + $0x81] sm:$0xff]
      %v3336 = vld [vmem:[%s2869 + $0x91] sm:$0xff]
      %v3337 = vld [vmem:[%s2869 + $0x99] sm:$0xff]
      %v3338 = vld [vmem:[%s2869 + $0xa9] sm:$0xff]
      %v3339 = vld [vmem:[%s2869 + $0xb1] sm:$0xff]
      %v3340 = vld [vmem:[%s2869 + $0xc1] sm:$0xff]
      %v3341 = vld [vmem:[%s2869 + $0xc9] sm:$0xff]
      %v3342 = vld [vmem:[%s2869 + $0xd9] sm:$0xff]
      %v3343 = vld [vmem:[%s2869 + $0xe1] sm:$0xff]
      %v3344 = vld [vmem:[%s2869 + $0xf1] sm:$0xff]
      %v3345 = vld [vmem:[%s2869 + $0xf9] sm:$0xff]
      %v3346 = vld [vmem:[%s2869 + $0x109] sm:$0xff]
      %v3347 = vld [vmem:[%s2869 + $0x111] sm:$0xff]
      %v3348 = vld [vmem:[%s2869 + $0x121] sm:$0xff]
      %v3349 = vld [vmem:[%s2869 + $0x129] sm:$0xff]
      %v3350 = vld [vmem:[%s2869 + $0x139] sm:$0xff]
      %v3351 = vld [vmem:[%s2869 + $0x141] sm:$0xff]
      %v3352 = vld [vmem:[%s2869 + $0x151] sm:$0xff]
      %v3353 = vld [vmem:[%s2869 + $0x159] sm:$0xff]
      %v3354 = vld [vmem:[%s2869 + $0x169] sm:$0xff]
      %v3355 = vld [vmem:[%s2869 + $0x171] sm:$0xff]
      %s3356 = scalar_lea.vmem %s1, 28
      %v3357 = vld [vmem:[%s3356] sm:$0xf]
      %v3359 = vsel %vm240, %v3324, 0
      %v3362 = vsel %vm240, %v3325, 0
      %v3365 = vsel %vm240, %v3326, 0
      %v3368 = vsel %vm240, %v3327, 0
      %v3371 = vsel %vm240, %v3328, 0
      %v3374 = vsel %vm240, %v3329, 0
      %v3377 = vsel %vm240, %v3330, 0
      %v3380 = vsel %vm240, %v3331, 0
      %v3383 = vsel %vm240, %v3332, 0
      %v3386 = vsel %vm240, %v3333, 0
      %v3389 = vsel %vm240, %v3334, 0
      %v3392 = vsel %vm240, %v3335, 0
      %v3395 = vsel %vm240, %v3336, 0
      %v3398 = vsel %vm240, %v3337, 0
      %v3401 = vsel %vm240, %v3338, 0
      %v3404 = vsel %vm240, %v3339, 0
      %v3407 = vsel %vm240, %v3340, 0
      %v3410 = vsel %vm240, %v3341, 0
      %v3413 = vsel %vm240, %v3342, 0
      %v3416 = vsel %vm240, %v3343, 0
      %v3419 = vsel %vm240, %v3344, 0
      %v3422 = vsel %vm240, %v3345, 0
      %v3425 = vsel %vm240, %v3346, 0
      %v3428 = vsel %vm240, %v3347, 0
      %v3431 = vsel %vm240, %v3348, 0
      %v3434 = vsel %vm240, %v3349, 0
      %v3437 = vsel %vm240, %v3350, 0
      %v3440 = vsel %vm240, %v3351, 0
      %v3443 = vsel %vm240, %v3352, 0
      %v3446 = vsel %vm240, %v3353, 0
      %v3449 = vsel %vm240, %v3354, 0
      %v3452 = vsel %vm240, %v3355, 0
      %v3455 = vsel %vm337, %v3357, 0
      %3457 = vmatprep.subr.mxu0 0.0
      %3458 = vmatpush1.msra.mxu0 0.0
      %3459 = vmatprep.subr.mxu0 0.0
      %3460 = vmatpush1.msra.mxu0 0.0
      %3461 = vmatprep.subr.mxu0 0.0
      %3462 = vmatpush1.msra.mxu0 0.0
      %3463 = vmatprep.subr.mxu0 0.0
      %3464 = vmatpush1.msra.mxu0 0.0
      %3465 = vmatprep.subr.mxu0 0.0
      %3466 = vmatpush1.msra.mxu0 0.0
      %3467 = vmatprep.subr.mxu0 0.0
      %3468 = vmatpush1.msra.mxu0 0.0
      %3469 = vmatprep.subr.mxu0 0.0
      %3470 = vmatpush1.msra.mxu0 0.0
      %3471 = vmatprep.subr.mxu0 0.0
      %3472 = vmatpush1.msra.mxu0 0.0
      %3473 = vmatprep.subr.mxu0 0.0
      %3474 = vmatpush1.msra.mxu0 0.0
      %3475 = vmatprep.subr.mxu0 0.0
      %3476 = vmatpush1.msra.mxu0 0.0
      %3477 = vmatprep.subr.mxu0 0.0
      %3478 = vmatpush1.msra.mxu0 0.0
      %3479 = vmatprep.subr.mxu0 0.0
      %3480 = vmatpush1.msra.mxu0 0.0
      %3481 = vmatprep.subr.mxu0 0.0
      %3482 = vmatpush1.msra.mxu0 0.0
      %3483 = vmatprep.subr.mxu0 0.0
      %3484 = vmatpush1.msra.mxu0 0.0
      %3485 = vmatprep.subr.mxu0 0.0
      %3486 = vmatpush1.msra.mxu0 0.0
      %3487 = vmatprep.subr.mxu0 0.0
      %3488 = vmatpush1.msra.mxu0 %v3455
      %3489 = vmatprep.subr.mxu0 0.0
      %3490 = vmatpush2.msra.mxu0 0.0
      %3491 = vmatprep.subr.mxu0 0.0
      %3492 = vmatpush2.msra.mxu0 0.0
      %3493 = vmatprep.subr.mxu0 0.0
      %3494 = vmatpush2.msra.mxu0 0.0
      %3495 = vmatprep.subr.mxu0 0.0
      %3496 = vmatpush2.msra.mxu0 0.0
      %3497 = vmatprep.subr.mxu0 0.0
      %3498 = vmatpush2.msra.mxu0 0.0
      %3499 = vmatprep.subr.mxu0 0.0
      %3500 = vmatpush2.msra.mxu0 0.0
      %3501 = vmatprep.subr.mxu0 0.0
      %3502 = vmatpush2.msra.mxu0 0.0
      %3503 = vmatprep.subr.mxu0 0.0
      %3504 = vmatpush2.msra.mxu0 0.0
      %3505 = vmatprep.subr.mxu0 0.0
      %3506 = vmatpush2.msra.mxu0 0.0
      %3507 = vmatprep.subr.mxu0 0.0
      %3508 = vmatpush2.msra.mxu0 0.0
      %3509 = vmatprep.subr.mxu0 0.0
      %3510 = vmatpush2.msra.mxu0 0.0
      %3511 = vmatprep.subr.mxu0 0.0
      %3512 = vmatpush2.msra.mxu0 0.0
      %3513 = vmatprep.subr.mxu0 0.0
      %3514 = vmatpush2.msra.mxu0 0.0
      %3515 = vmatprep.subr.mxu0 0.0
      %3516 = vmatpush2.msra.mxu0 0.0
      %3517 = vmatprep.subr.mxu0 0.0
      %3518 = vmatpush2.msra.mxu0 0.0
      %3519 = vmatprep.subr.mxu0 0.0
      %3520 = vmatpush2.msra.mxu0 0.0
      %3521 = vmatprep.mubr.f32.mxu0 0.0
      %3522 = vmatmul.mubr.f32.gmra.mxu0 %v3359
      %v3523 = vpop.f32.mrf.mxu0
      %v3524 = vadd.f32 0.0, %v3523
      %v3525 = vpop.f32.mrf.mxu0
      %3526 = vmatprep.mubr.f32.mxu0 0.0
      %3527 = vmatmul.mubr.f32.gmra.mxu0 %v3362
      %v3528 = vpop.f32.mrf.mxu0
      %v3529 = vadd.f32 0.0, %v3528
      %v3530 = vpop.f32.mrf.mxu0
      %3531 = vmatprep.mubr.f32.mxu0 0.0
      %3532 = vmatmul.mubr.f32.gmra.mxu0 %v3365
      %v3533 = vpop.f32.mrf.mxu0
      %v3534 = vadd.f32 0.0, %v3533
      %v3535 = vpop.f32.mrf.mxu0
      %3536 = vmatprep.mubr.f32.mxu0 0.0
      %3537 = vmatmul.mubr.f32.gmra.mxu0 %v3368
      %v3538 = vpop.f32.mrf.mxu0
      %v3539 = vadd.f32 0.0, %v3538
      %v3540 = vpop.f32.mrf.mxu0
      %3541 = vmatprep.mubr.f32.mxu0 0.0
      %3542 = vmatmul.mubr.f32.gmra.mxu0 %v3371
      %v3543 = vpop.f32.mrf.mxu0
      %v3544 = vadd.f32 0.0, %v3543
      %v3545 = vpop.f32.mrf.mxu0
      %3546 = vmatprep.mubr.f32.mxu0 0.0
      %3547 = vmatmul.mubr.f32.gmra.mxu0 %v3374
      %v3548 = vpop.f32.mrf.mxu0
      %v3549 = vadd.f32 0.0, %v3548
      %v3550 = vpop.f32.mrf.mxu0
      %3551 = vmatprep.mubr.f32.mxu0 0.0
      %3552 = vmatmul.mubr.f32.gmra.mxu0 %v3377
      %v3553 = vpop.f32.mrf.mxu0
      %v3554 = vadd.f32 0.0, %v3553
      %v3555 = vpop.f32.mrf.mxu0
      %3556 = vmatprep.mubr.f32.mxu0 0.0
      %3557 = vmatmul.mubr.f32.gmra.mxu0 %v3380
      %v3558 = vpop.f32.mrf.mxu0
      %v3559 = vadd.f32 0.0, %v3558
      %v3560 = vpop.f32.mrf.mxu0
      %3561 = vmatprep.mubr.f32.mxu0 0.0
      %3562 = vmatmul.mubr.f32.gmra.mxu0 %v3383
      %v3563 = vpop.f32.mrf.mxu0
      %v3564 = vadd.f32 0.0, %v3563
      %v3565 = vpop.f32.mrf.mxu0
      %3566 = vmatprep.mubr.f32.mxu0 0.0
      %3567 = vmatmul.mubr.f32.gmra.mxu0 %v3386
      %v3568 = vpop.f32.mrf.mxu0
      %v3569 = vadd.f32 0.0, %v3568
      %v3570 = vpop.f32.mrf.mxu0
      %3571 = vmatprep.mubr.f32.mxu0 0.0
      %3572 = vmatmul.mubr.f32.gmra.mxu0 %v3389
      %v3573 = vpop.f32.mrf.mxu0
      %v3574 = vadd.f32 0.0, %v3573
      %v3575 = vpop.f32.mrf.mxu0
      %3576 = vmatprep.mubr.f32.mxu0 0.0
      %3577 = vmatmul.mubr.f32.gmra.mxu0 %v3392
      %v3578 = vpop.f32.mrf.mxu0
      %v3579 = vadd.f32 0.0, %v3578
      %v3580 = vpop.f32.mrf.mxu0
      %3581 = vmatprep.mubr.f32.mxu0 0.0
      %3582 = vmatmul.mubr.f32.gmra.mxu0 %v3395
      %v3583 = vpop.f32.mrf.mxu0
      %v3584 = vadd.f32 0.0, %v3583
      %v3585 = vpop.f32.mrf.mxu0
      %3586 = vmatprep.mubr.f32.mxu0 0.0
      %3587 = vmatmul.mubr.f32.gmra.mxu0 %v3398
      %v3588 = vpop.f32.mrf.mxu0
      %v3589 = vadd.f32 0.0, %v3588
      %v3590 = vpop.f32.mrf.mxu0
      %3591 = vmatprep.mubr.f32.mxu0 0.0
      %3592 = vmatmul.mubr.f32.gmra.mxu0 %v3401
      %v3593 = vpop.f32.mrf.mxu0
      %v3594 = vadd.f32 0.0, %v3593
      %v3595 = vpop.f32.mrf.mxu0
      %3596 = vmatprep.mubr.f32.mxu0 0.0
      %3597 = vmatmul.mubr.f32.gmra.mxu0 %v3404
      %v3598 = vpop.f32.mrf.mxu0
      %v3599 = vadd.f32 0.0, %v3598
      %v3600 = vpop.f32.mrf.mxu0
      %3601 = vmatprep.mubr.f32.mxu0 0.0
      %3602 = vmatmul.mubr.f32.gmra.mxu0 %v3407
      %v3603 = vpop.f32.mrf.mxu0
      %v3604 = vadd.f32 0.0, %v3603
      %v3605 = vpop.f32.mrf.mxu0
      %3606 = vmatprep.mubr.f32.mxu0 0.0
      %3607 = vmatmul.mubr.f32.gmra.mxu0 %v3410
      %v3608 = vpop.f32.mrf.mxu0
      %v3609 = vadd.f32 0.0, %v3608
      %v3610 = vpop.f32.mrf.mxu0
      %3611 = vmatprep.mubr.f32.mxu0 0.0
      %3612 = vmatmul.mubr.f32.gmra.mxu0 %v3413
      %v3613 = vpop.f32.mrf.mxu0
      %v3614 = vadd.f32 0.0, %v3613
      %v3615 = vpop.f32.mrf.mxu0
      %3616 = vmatprep.mubr.f32.mxu0 0.0
      %3617 = vmatmul.mubr.f32.gmra.mxu0 %v3416
      %v3618 = vpop.f32.mrf.mxu0
      %v3619 = vadd.f32 0.0, %v3618
      %v3620 = vpop.f32.mrf.mxu0
      %3621 = vmatprep.mubr.f32.mxu0 0.0
      %3622 = vmatmul.mubr.f32.gmra.mxu0 %v3419
      %v3623 = vpop.f32.mrf.mxu0
      %v3624 = vadd.f32 0.0, %v3623
      %v3625 = vpop.f32.mrf.mxu0
      %3626 = vmatprep.mubr.f32.mxu0 0.0
      %3627 = vmatmul.mubr.f32.gmra.mxu0 %v3422
      %v3628 = vpop.f32.mrf.mxu0
      %v3629 = vadd.f32 0.0, %v3628
      %v3630 = vpop.f32.mrf.mxu0
      %3631 = vmatprep.mubr.f32.mxu0 0.0
      %3632 = vmatmul.mubr.f32.gmra.mxu0 %v3425
      %v3633 = vpop.f32.mrf.mxu0
      %v3634 = vadd.f32 0.0, %v3633
      %v3635 = vpop.f32.mrf.mxu0
      %3636 = vmatprep.mubr.f32.mxu0 0.0
      %3637 = vmatmul.mubr.f32.gmra.mxu0 %v3428
      %v3638 = vpop.f32.mrf.mxu0
      %v3639 = vadd.f32 0.0, %v3638
      %v3640 = vpop.f32.mrf.mxu0
      %3641 = vmatprep.mubr.f32.mxu0 0.0
      %3642 = vmatmul.mubr.f32.gmra.mxu0 %v3431
      %v3643 = vpop.f32.mrf.mxu0
      %v3644 = vadd.f32 0.0, %v3643
      %v3645 = vpop.f32.mrf.mxu0
      %3646 = vmatprep.mubr.f32.mxu0 0.0
      %3647 = vmatmul.mubr.f32.gmra.mxu0 %v3434
      %v3648 = vpop.f32.mrf.mxu0
      %v3649 = vadd.f32 0.0, %v3648
      %v3650 = vpop.f32.mrf.mxu0
      %3651 = vmatprep.mubr.f32.mxu0 0.0
      %3652 = vmatmul.mubr.f32.gmra.mxu0 %v3437
      %v3653 = vpop.f32.mrf.mxu0
      %v3654 = vadd.f32 0.0, %v3653
      %v3655 = vpop.f32.mrf.mxu0
      %3656 = vmatprep.mubr.f32.mxu0 0.0
      %3657 = vmatmul.mubr.f32.gmra.mxu0 %v3440
      %v3658 = vpop.f32.mrf.mxu0
      %v3659 = vadd.f32 0.0, %v3658
      %v3660 = vpop.f32.mrf.mxu0
      %3661 = vmatprep.mubr.f32.mxu0 0.0
      %3662 = vmatmul.mubr.f32.gmra.mxu0 %v3443
      %v3663 = vpop.f32.mrf.mxu0
      %v3664 = vadd.f32 0.0, %v3663
      %v3665 = vpop.f32.mrf.mxu0
      %3666 = vmatprep.mubr.f32.mxu0 0.0
      %3667 = vmatmul.mubr.f32.gmra.mxu0 %v3446
      %v3668 = vpop.f32.mrf.mxu0
      %v3669 = vadd.f32 0.0, %v3668
      %v3670 = vpop.f32.mrf.mxu0
      %3671 = vmatprep.mubr.f32.mxu0 0.0
      %3672 = vmatmul.mubr.f32.gmra.mxu0 %v3449
      %v3673 = vpop.f32.mrf.mxu0
      %v3674 = vadd.f32 0.0, %v3673
      %v3675 = vpop.f32.mrf.mxu0
      %3676 = vmatprep.mubr.f32.mxu0 0.0
      %3677 = vmatmul.mubr.f32.gmra.mxu0 %v3452
      %v3678 = vpop.f32.mrf.mxu0
      %v3679 = vadd.f32 0.0, %v3678
      %v3680 = vpop.f32.mrf.mxu0
      %3681 = vdwg.mxu0
      %v3682 = vld [vmem:[#allocation2] sm:$0xff]
      %v3683 = vld [vmem:[#allocation2 + $0x8] sm:$0xff]
      %v3684 = vld [vmem:[#allocation2 + $0x10] sm:$0xff]
      %v3685 = vld [vmem:[#allocation2 + $0x18] sm:$0xff]
      %v3686 = vld [vmem:[#allocation2 + $0x20] sm:$0xff]
      %v3687 = vld [vmem:[#allocation2 + $0x28] sm:$0xff]
      %v3688 = vld [vmem:[#allocation2 + $0x30] sm:$0xff]
      %v3689 = vld [vmem:[#allocation2 + $0x38] sm:$0xff]
      %v3690 = vld [vmem:[#allocation2 + $0x40] sm:$0xff]
      %v3691 = vld [vmem:[#allocation2 + $0x48] sm:$0xff]
      %v3692 = vld [vmem:[#allocation2 + $0x50] sm:$0xff]
      %v3693 = vld [vmem:[#allocation2 + $0x58] sm:$0xff]
      %v3694 = vld [vmem:[#allocation2 + $0x60] sm:$0xff]
      %v3695 = vld [vmem:[#allocation2 + $0x68] sm:$0xff]
      %v3696 = vld [vmem:[#allocation2 + $0x70] sm:$0xff]
      %v3697 = vld [vmem:[#allocation2 + $0x78] sm:$0xff]
      %v3698 = vld [vmem:[#allocation2 + $0x80] sm:$0xff]
      %v3699 = vld [vmem:[#allocation2 + $0x88] sm:$0xff]
      %v3700 = vld [vmem:[#allocation2 + $0x90] sm:$0xff]
      %v3701 = vld [vmem:[#allocation2 + $0x98] sm:$0xff]
      %v3702 = vld [vmem:[#allocation2 + $0xa0] sm:$0xff]
      %v3703 = vld [vmem:[#allocation2 + $0xa8] sm:$0xff]
      %v3704 = vld [vmem:[#allocation2 + $0xb0] sm:$0xff]
      %v3705 = vld [vmem:[#allocation2 + $0xb8] sm:$0xff]
      %v3706 = vld [vmem:[#allocation2 + $0xc0] sm:$0xff]
      %v3707 = vld [vmem:[#allocation2 + $0xc8] sm:$0xff]
      %v3708 = vld [vmem:[#allocation2 + $0xd0] sm:$0xff]
      %v3709 = vld [vmem:[#allocation2 + $0xd8] sm:$0xff]
      %v3710 = vld [vmem:[#allocation2 + $0xe0] sm:$0xff]
      %v3711 = vld [vmem:[#allocation2 + $0xe8] sm:$0xff]
      %v3712 = vld [vmem:[#allocation2 + $0xf0] sm:$0xff]
      %v3713 = vld [vmem:[#allocation2 + $0xf8] sm:$0xff]
      %v3714 = vadd.f32 %v3682, %v3524
      %v3715 = vadd.f32 %v3683, %v3529
      %v3716 = vadd.f32 %v3684, %v3534
      %v3717 = vadd.f32 %v3685, %v3539
      %v3718 = vadd.f32 %v3686, %v3544
      %v3719 = vadd.f32 %v3687, %v3549
      %v3720 = vadd.f32 %v3688, %v3554
      %v3721 = vadd.f32 %v3689, %v3559
      %v3722 = vadd.f32 %v3690, %v3564
      %v3723 = vadd.f32 %v3691, %v3569
      %v3724 = vadd.f32 %v3692, %v3574
      %v3725 = vadd.f32 %v3693, %v3579
      %v3726 = vadd.f32 %v3694, %v3584
      %v3727 = vadd.f32 %v3695, %v3589
      %v3728 = vadd.f32 %v3696, %v3594
      %v3729 = vadd.f32 %v3697, %v3599
      %v3730 = vadd.f32 %v3698, %v3604
      %v3731 = vadd.f32 %v3699, %v3609
      %v3732 = vadd.f32 %v3700, %v3614
      %v3733 = vadd.f32 %v3701, %v3619
      %v3734 = vadd.f32 %v3702, %v3624
      %v3735 = vadd.f32 %v3703, %v3629
      %v3736 = vadd.f32 %v3704, %v3634
      %v3737 = vadd.f32 %v3705, %v3639
      %v3738 = vadd.f32 %v3706, %v3644
      %v3739 = vadd.f32 %v3707, %v3649
      %v3740 = vadd.f32 %v3708, %v3654
      %v3741 = vadd.f32 %v3709, %v3659
      %v3742 = vadd.f32 %v3710, %v3664
      %v3743 = vadd.f32 %v3711, %v3669
      %v3744 = vadd.f32 %v3712, %v3674
      %v3745 = vadd.f32 %v3713, %v3679
      %3746 = vst [vmem:[#allocation2] sm:$0xff] %v3714
      %3747 = vst [vmem:[#allocation2 + $0x8] sm:$0xff] %v3715
      %3748 = vst [vmem:[#allocation2 + $0x10] sm:$0xff] %v3716
      %3749 = vst [vmem:[#allocation2 + $0x18] sm:$0xff] %v3717
      %3750 = vst [vmem:[#allocation2 + $0x20] sm:$0xff] %v3718
      %3751 = vst [vmem:[#allocation2 + $0x28] sm:$0xff] %v3719
      %3752 = vst [vmem:[#allocation2 + $0x30] sm:$0xff] %v3720
      %3753 = vst [vmem:[#allocation2 + $0x38] sm:$0xff] %v3721
      %3754 = vst [vmem:[#allocation2 + $0x40] sm:$0xff] %v3722
      %3755 = vst [vmem:[#allocation2 + $0x48] sm:$0xff] %v3723
      %3756 = vst [vmem:[#allocation2 + $0x50] sm:$0xff] %v3724
      %3757 = vst [vmem:[#allocation2 + $0x58] sm:$0xff] %v3725
      %3758 = vst [vmem:[#allocation2 + $0x60] sm:$0xff] %v3726
      %3759 = vst [vmem:[#allocation2 + $0x68] sm:$0xff] %v3727
      %3760 = vst [vmem:[#allocation2 + $0x70] sm:$0xff] %v3728
      %3761 = vst [vmem:[#allocation2 + $0x78] sm:$0xff] %v3729
      %3762 = vst [vmem:[#allocation2 + $0x80] sm:$0xff] %v3730
      %3763 = vst [vmem:[#allocation2 + $0x88] sm:$0xff] %v3731
      %3764 = vst [vmem:[#allocation2 + $0x90] sm:$0xff] %v3732
      %3765 = vst [vmem:[#allocation2 + $0x98] sm:$0xff] %v3733
      %3766 = vst [vmem:[#allocation2 + $0xa0] sm:$0xff] %v3734
      %3767 = vst [vmem:[#allocation2 + $0xa8] sm:$0xff] %v3735
      %3768 = vst [vmem:[#allocation2 + $0xb0] sm:$0xff] %v3736
      %3769 = vst [vmem:[#allocation2 + $0xb8] sm:$0xff] %v3737
      %3770 = vst [vmem:[#allocation2 + $0xc0] sm:$0xff] %v3738
      %3771 = vst [vmem:[#allocation2 + $0xc8] sm:$0xff] %v3739
      %3772 = vst [vmem:[#allocation2 + $0xd0] sm:$0xff] %v3740
      %3773 = vst [vmem:[#allocation2 + $0xd8] sm:$0xff] %v3741
      %3774 = vst [vmem:[#allocation2 + $0xe0] sm:$0xff] %v3742
      %3775 = vst [vmem:[#allocation2 + $0xe8] sm:$0xff] %v3743
      %3776 = vst [vmem:[#allocation2 + $0xf0] sm:$0xff] %v3744
      %3777 = vst [vmem:[#allocation2 + $0xf8] sm:$0xff] %v3745
      %v3778 = vld [vmem:[%s2869 + $0x2] sm:$0xff]
      %v3779 = vld [vmem:[%s2869 + $0xa] sm:$0xff]
      %v3780 = vld [vmem:[%s2869 + $0x1a] sm:$0xff]
      %v3781 = vld [vmem:[%s2869 + $0x22] sm:$0xff]
      %v3782 = vld [vmem:[%s2869 + $0x32] sm:$0xff]
      %v3783 = vld [vmem:[%s2869 + $0x3a] sm:$0xff]
      %v3784 = vld [vmem:[%s2869 + $0x4a] sm:$0xff]
      %v3785 = vld [vmem:[%s2869 + $0x52] sm:$0xff]
      %v3786 = vld [vmem:[%s2869 + $0x62] sm:$0xff]
      %v3787 = vld [vmem:[%s2869 + $0x6a] sm:$0xff]
      %v3788 = vld [vmem:[%s2869 + $0x7a] sm:$0xff]
      %v3789 = vld [vmem:[%s2869 + $0x82] sm:$0xff]
      %v3790 = vld [vmem:[%s2869 + $0x92] sm:$0xff]
      %v3791 = vld [vmem:[%s2869 + $0x9a] sm:$0xff]
      %v3792 = vld [vmem:[%s2869 + $0xaa] sm:$0xff]
      %v3793 = vld [vmem:[%s2869 + $0xb2] sm:$0xff]
      %v3794 = vld [vmem:[%s2869 + $0xc2] sm:$0xff]
      %v3795 = vld [vmem:[%s2869 + $0xca] sm:$0xff]
      %v3796 = vld [vmem:[%s2869 + $0xda] sm:$0xff]
      %v3797 = vld [vmem:[%s2869 + $0xe2] sm:$0xff]
      %v3798 = vld [vmem:[%s2869 + $0xf2] sm:$0xff]
      %v3799 = vld [vmem:[%s2869 + $0xfa] sm:$0xff]
      %v3800 = vld [vmem:[%s2869 + $0x10a] sm:$0xff]
      %v3801 = vld [vmem:[%s2869 + $0x112] sm:$0xff]
      %v3802 = vld [vmem:[%s2869 + $0x122] sm:$0xff]
      %v3803 = vld [vmem:[%s2869 + $0x12a] sm:$0xff]
      %v3804 = vld [vmem:[%s2869 + $0x13a] sm:$0xff]
      %v3805 = vld [vmem:[%s2869 + $0x142] sm:$0xff]
      %v3806 = vld [vmem:[%s2869 + $0x152] sm:$0xff]
      %v3807 = vld [vmem:[%s2869 + $0x15a] sm:$0xff]
      %v3808 = vld [vmem:[%s2869 + $0x16a] sm:$0xff]
      %v3809 = vld [vmem:[%s2869 + $0x172] sm:$0xff]
      %s3810 = scalar_lea.vmem %s1, 32
      %v3811 = vld [vmem:[%s3810] sm:$0xf]
      %v3813 = vsel %vm240, %v3778, 0
      %v3816 = vsel %vm240, %v3779, 0
      %v3819 = vsel %vm240, %v3780, 0
      %v3822 = vsel %vm240, %v3781, 0
      %v3825 = vsel %vm240, %v3782, 0
      %v3828 = vsel %vm240, %v3783, 0
      %v3831 = vsel %vm240, %v3784, 0
      %v3834 = vsel %vm240, %v3785, 0
      %v3837 = vsel %vm240, %v3786, 0
      %v3840 = vsel %vm240, %v3787, 0
      %v3843 = vsel %vm240, %v3788, 0
      %v3846 = vsel %vm240, %v3789, 0
      %v3849 = vsel %vm240, %v3790, 0
      %v3852 = vsel %vm240, %v3791, 0
      %v3855 = vsel %vm240, %v3792, 0
      %v3858 = vsel %vm240, %v3793, 0
      %v3861 = vsel %vm240, %v3794, 0
      %v3864 = vsel %vm240, %v3795, 0
      %v3867 = vsel %vm240, %v3796, 0
      %v3870 = vsel %vm240, %v3797, 0
      %v3873 = vsel %vm240, %v3798, 0
      %v3876 = vsel %vm240, %v3799, 0
      %v3879 = vsel %vm240, %v3800, 0
      %v3882 = vsel %vm240, %v3801, 0
      %v3885 = vsel %vm240, %v3802, 0
      %v3888 = vsel %vm240, %v3803, 0
      %v3891 = vsel %vm240, %v3804, 0
      %v3894 = vsel %vm240, %v3805, 0
      %v3897 = vsel %vm240, %v3806, 0
      %v3900 = vsel %vm240, %v3807, 0
      %v3903 = vsel %vm240, %v3808, 0
      %v3906 = vsel %vm240, %v3809, 0
      %v3909 = vsel %vm337, %v3811, 0
      %3911 = vmatprep.subr.mxu0 0.0
      %3912 = vmatpush1.msra.mxu0 0.0
      %3913 = vmatprep.subr.mxu0 0.0
      %3914 = vmatpush1.msra.mxu0 0.0
      %3915 = vmatprep.subr.mxu0 0.0
      %3916 = vmatpush1.msra.mxu0 0.0
      %3917 = vmatprep.subr.mxu0 0.0
      %3918 = vmatpush1.msra.mxu0 0.0
      %3919 = vmatprep.subr.mxu0 0.0
      %3920 = vmatpush1.msra.mxu0 0.0
      %3921 = vmatprep.subr.mxu0 0.0
      %3922 = vmatpush1.msra.mxu0 0.0
      %3923 = vmatprep.subr.mxu0 0.0
      %3924 = vmatpush1.msra.mxu0 0.0
      %3925 = vmatprep.subr.mxu0 0.0
      %3926 = vmatpush1.msra.mxu0 0.0
      %3927 = vmatprep.subr.mxu0 0.0
      %3928 = vmatpush1.msra.mxu0 0.0
      %3929 = vmatprep.subr.mxu0 0.0
      %3930 = vmatpush1.msra.mxu0 0.0
      %3931 = vmatprep.subr.mxu0 0.0
      %3932 = vmatpush1.msra.mxu0 0.0
      %3933 = vmatprep.subr.mxu0 0.0
      %3934 = vmatpush1.msra.mxu0 0.0
      %3935 = vmatprep.subr.mxu0 0.0
      %3936 = vmatpush1.msra.mxu0 0.0
      %3937 = vmatprep.subr.mxu0 0.0
      %3938 = vmatpush1.msra.mxu0 0.0
      %3939 = vmatprep.subr.mxu0 0.0
      %3940 = vmatpush1.msra.mxu0 0.0
      %3941 = vmatprep.subr.mxu0 0.0
      %3942 = vmatpush1.msra.mxu0 %v3909
      %3943 = vmatprep.subr.mxu0 0.0
      %3944 = vmatpush2.msra.mxu0 0.0
      %3945 = vmatprep.subr.mxu0 0.0
      %3946 = vmatpush2.msra.mxu0 0.0
      %3947 = vmatprep.subr.mxu0 0.0
      %3948 = vmatpush2.msra.mxu0 0.0
      %3949 = vmatprep.subr.mxu0 0.0
      %3950 = vmatpush2.msra.mxu0 0.0
      %3951 = vmatprep.subr.mxu0 0.0
      %3952 = vmatpush2.msra.mxu0 0.0
      %3953 = vmatprep.subr.mxu0 0.0
      %3954 = vmatpush2.msra.mxu0 0.0
      %3955 = vmatprep.subr.mxu0 0.0
      %3956 = vmatpush2.msra.mxu0 0.0
      %3957 = vmatprep.subr.mxu0 0.0
      %3958 = vmatpush2.msra.mxu0 0.0
      %3959 = vmatprep.subr.mxu0 0.0
      %3960 = vmatpush2.msra.mxu0 0.0
      %3961 = vmatprep.subr.mxu0 0.0
      %3962 = vmatpush2.msra.mxu0 0.0
      %3963 = vmatprep.subr.mxu0 0.0
      %3964 = vmatpush2.msra.mxu0 0.0
      %3965 = vmatprep.subr.mxu0 0.0
      %3966 = vmatpush2.msra.mxu0 0.0
      %3967 = vmatprep.subr.mxu0 0.0
      %3968 = vmatpush2.msra.mxu0 0.0
      %3969 = vmatprep.subr.mxu0 0.0
      %3970 = vmatpush2.msra.mxu0 0.0
      %3971 = vmatprep.subr.mxu0 0.0
      %3972 = vmatpush2.msra.mxu0 0.0
      %3973 = vmatprep.subr.mxu0 0.0
      %3974 = vmatpush2.msra.mxu0 0.0
      %3975 = vmatprep.mubr.f32.mxu0 0.0
      %3976 = vmatmul.mubr.f32.gmra.mxu0 %v3813
      %v3977 = vpop.f32.mrf.mxu0
      %v3978 = vadd.f32 0.0, %v3977
      %v3979 = vpop.f32.mrf.mxu0
      %3980 = vmatprep.mubr.f32.mxu0 0.0
      %3981 = vmatmul.mubr.f32.gmra.mxu0 %v3816
      %v3982 = vpop.f32.mrf.mxu0
      %v3983 = vadd.f32 0.0, %v3982
      %v3984 = vpop.f32.mrf.mxu0
      %3985 = vmatprep.mubr.f32.mxu0 0.0
      %3986 = vmatmul.mubr.f32.gmra.mxu0 %v3819
      %v3987 = vpop.f32.mrf.mxu0
      %v3988 = vadd.f32 0.0, %v3987
      %v3989 = vpop.f32.mrf.mxu0
      %3990 = vmatprep.mubr.f32.mxu0 0.0
      %3991 = vmatmul.mubr.f32.gmra.mxu0 %v3822
      %v3992 = vpop.f32.mrf.mxu0
      %v3993 = vadd.f32 0.0, %v3992
      %v3994 = vpop.f32.mrf.mxu0
      %3995 = vmatprep.mubr.f32.mxu0 0.0
      %3996 = vmatmul.mubr.f32.gmra.mxu0 %v3825
      %v3997 = vpop.f32.mrf.mxu0
      %v3998 = vadd.f32 0.0, %v3997
      %v3999 = vpop.f32.mrf.mxu0
      %4000 = vmatprep.mubr.f32.mxu0 0.0
      %4001 = vmatmul.mubr.f32.gmra.mxu0 %v3828
      %v4002 = vpop.f32.mrf.mxu0
      %v4003 = vadd.f32 0.0, %v4002
      %v4004 = vpop.f32.mrf.mxu0
      %4005 = vmatprep.mubr.f32.mxu0 0.0
      %4006 = vmatmul.mubr.f32.gmra.mxu0 %v3831
      %v4007 = vpop.f32.mrf.mxu0
      %v4008 = vadd.f32 0.0, %v4007
      %v4009 = vpop.f32.mrf.mxu0
      %4010 = vmatprep.mubr.f32.mxu0 0.0
      %4011 = vmatmul.mubr.f32.gmra.mxu0 %v3834
      %v4012 = vpop.f32.mrf.mxu0
      %v4013 = vadd.f32 0.0, %v4012
      %v4014 = vpop.f32.mrf.mxu0
      %4015 = vmatprep.mubr.f32.mxu0 0.0
      %4016 = vmatmul.mubr.f32.gmra.mxu0 %v3837
      %v4017 = vpop.f32.mrf.mxu0
      %v4018 = vadd.f32 0.0, %v4017
      %v4019 = vpop.f32.mrf.mxu0
      %4020 = vmatprep.mubr.f32.mxu0 0.0
      %4021 = vmatmul.mubr.f32.gmra.mxu0 %v3840
      %v4022 = vpop.f32.mrf.mxu0
      %v4023 = vadd.f32 0.0, %v4022
      %v4024 = vpop.f32.mrf.mxu0
      %4025 = vmatprep.mubr.f32.mxu0 0.0
      %4026 = vmatmul.mubr.f32.gmra.mxu0 %v3843
      %v4027 = vpop.f32.mrf.mxu0
      %v4028 = vadd.f32 0.0, %v4027
      %v4029 = vpop.f32.mrf.mxu0
      %4030 = vmatprep.mubr.f32.mxu0 0.0
      %4031 = vmatmul.mubr.f32.gmra.mxu0 %v3846
      %v4032 = vpop.f32.mrf.mxu0
      %v4033 = vadd.f32 0.0, %v4032
      %v4034 = vpop.f32.mrf.mxu0
      %4035 = vmatprep.mubr.f32.mxu0 0.0
      %4036 = vmatmul.mubr.f32.gmra.mxu0 %v3849
      %v4037 = vpop.f32.mrf.mxu0
      %v4038 = vadd.f32 0.0, %v4037
      %v4039 = vpop.f32.mrf.mxu0
      %4040 = vmatprep.mubr.f32.mxu0 0.0
      %4041 = vmatmul.mubr.f32.gmra.mxu0 %v3852
      %v4042 = vpop.f32.mrf.mxu0
      %v4043 = vadd.f32 0.0, %v4042
      %v4044 = vpop.f32.mrf.mxu0
      %4045 = vmatprep.mubr.f32.mxu0 0.0
      %4046 = vmatmul.mubr.f32.gmra.mxu0 %v3855
      %v4047 = vpop.f32.mrf.mxu0
      %v4048 = vadd.f32 0.0, %v4047
      %v4049 = vpop.f32.mrf.mxu0
      %4050 = vmatprep.mubr.f32.mxu0 0.0
      %4051 = vmatmul.mubr.f32.gmra.mxu0 %v3858
      %v4052 = vpop.f32.mrf.mxu0
      %v4053 = vadd.f32 0.0, %v4052
      %v4054 = vpop.f32.mrf.mxu0
      %4055 = vmatprep.mubr.f32.mxu0 0.0
      %4056 = vmatmul.mubr.f32.gmra.mxu0 %v3861
      %v4057 = vpop.f32.mrf.mxu0
      %v4058 = vadd.f32 0.0, %v4057
      %v4059 = vpop.f32.mrf.mxu0
      %4060 = vmatprep.mubr.f32.mxu0 0.0
      %4061 = vmatmul.mubr.f32.gmra.mxu0 %v3864
      %v4062 = vpop.f32.mrf.mxu0
      %v4063 = vadd.f32 0.0, %v4062
      %v4064 = vpop.f32.mrf.mxu0
      %4065 = vmatprep.mubr.f32.mxu0 0.0
      %4066 = vmatmul.mubr.f32.gmra.mxu0 %v3867
      %v4067 = vpop.f32.mrf.mxu0
      %v4068 = vadd.f32 0.0, %v4067
      %v4069 = vpop.f32.mrf.mxu0
      %4070 = vmatprep.mubr.f32.mxu0 0.0
      %4071 = vmatmul.mubr.f32.gmra.mxu0 %v3870
      %v4072 = vpop.f32.mrf.mxu0
      %v4073 = vadd.f32 0.0, %v4072
      %v4074 = vpop.f32.mrf.mxu0
      %4075 = vmatprep.mubr.f32.mxu0 0.0
      %4076 = vmatmul.mubr.f32.gmra.mxu0 %v3873
      %v4077 = vpop.f32.mrf.mxu0
      %v4078 = vadd.f32 0.0, %v4077
      %v4079 = vpop.f32.mrf.mxu0
      %4080 = vmatprep.mubr.f32.mxu0 0.0
      %4081 = vmatmul.mubr.f32.gmra.mxu0 %v3876
      %v4082 = vpop.f32.mrf.mxu0
      %v4083 = vadd.f32 0.0, %v4082
      %v4084 = vpop.f32.mrf.mxu0
      %4085 = vmatprep.mubr.f32.mxu0 0.0
      %4086 = vmatmul.mubr.f32.gmra.mxu0 %v3879
      %v4087 = vpop.f32.mrf.mxu0
      %v4088 = vadd.f32 0.0, %v4087
      %v4089 = vpop.f32.mrf.mxu0
      %4090 = vmatprep.mubr.f32.mxu0 0.0
      %4091 = vmatmul.mubr.f32.gmra.mxu0 %v3882
      %v4092 = vpop.f32.mrf.mxu0
      %v4093 = vadd.f32 0.0, %v4092
      %v4094 = vpop.f32.mrf.mxu0
      %4095 = vmatprep.mubr.f32.mxu0 0.0
      %4096 = vmatmul.mubr.f32.gmra.mxu0 %v3885
      %v4097 = vpop.f32.mrf.mxu0
      %v4098 = vadd.f32 0.0, %v4097
      %v4099 = vpop.f32.mrf.mxu0
      %4100 = vmatprep.mubr.f32.mxu0 0.0
      %4101 = vmatmul.mubr.f32.gmra.mxu0 %v3888
      %v4102 = vpop.f32.mrf.mxu0
      %v4103 = vadd.f32 0.0, %v4102
      %v4104 = vpop.f32.mrf.mxu0
      %4105 = vmatprep.mubr.f32.mxu0 0.0
      %4106 = vmatmul.mubr.f32.gmra.mxu0 %v3891
      %v4107 = vpop.f32.mrf.mxu0
      %v4108 = vadd.f32 0.0, %v4107
      %v4109 = vpop.f32.mrf.mxu0
      %4110 = vmatprep.mubr.f32.mxu0 0.0
      %4111 = vmatmul.mubr.f32.gmra.mxu0 %v3894
      %v4112 = vpop.f32.mrf.mxu0
      %v4113 = vadd.f32 0.0, %v4112
      %v4114 = vpop.f32.mrf.mxu0
      %4115 = vmatprep.mubr.f32.mxu0 0.0
      %4116 = vmatmul.mubr.f32.gmra.mxu0 %v3897
      %v4117 = vpop.f32.mrf.mxu0
      %v4118 = vadd.f32 0.0, %v4117
      %v4119 = vpop.f32.mrf.mxu0
      %4120 = vmatprep.mubr.f32.mxu0 0.0
      %4121 = vmatmul.mubr.f32.gmra.mxu0 %v3900
      %v4122 = vpop.f32.mrf.mxu0
      %v4123 = vadd.f32 0.0, %v4122
      %v4124 = vpop.f32.mrf.mxu0
      %4125 = vmatprep.mubr.f32.mxu0 0.0
      %4126 = vmatmul.mubr.f32.gmra.mxu0 %v3903
      %v4127 = vpop.f32.mrf.mxu0
      %v4128 = vadd.f32 0.0, %v4127
      %v4129 = vpop.f32.mrf.mxu0
      %4130 = vmatprep.mubr.f32.mxu0 0.0
      %4131 = vmatmul.mubr.f32.gmra.mxu0 %v3906
      %v4132 = vpop.f32.mrf.mxu0
      %v4133 = vadd.f32 0.0, %v4132
      %v4134 = vpop.f32.mrf.mxu0
      %4135 = vdwg.mxu0
      %v4136 = vld [vmem:[#allocation2] sm:$0xff]
      %v4137 = vld [vmem:[#allocation2 + $0x8] sm:$0xff]
      %v4138 = vld [vmem:[#allocation2 + $0x10] sm:$0xff]
      %v4139 = vld [vmem:[#allocation2 + $0x18] sm:$0xff]
      %v4140 = vld [vmem:[#allocation2 + $0x20] sm:$0xff]
      %v4141 = vld [vmem:[#allocation2 + $0x28] sm:$0xff]
      %v4142 = vld [vmem:[#allocation2 + $0x30] sm:$0xff]
      %v4143 = vld [vmem:[#allocation2 + $0x38] sm:$0xff]
      %v4144 = vld [vmem:[#allocation2 + $0x40] sm:$0xff]
      %v4145 = vld [vmem:[#allocation2 + $0x48] sm:$0xff]
      %v4146 = vld [vmem:[#allocation2 + $0x50] sm:$0xff]
      %v4147 = vld [vmem:[#allocation2 + $0x58] sm:$0xff]
      %v4148 = vld [vmem:[#allocation2 + $0x60] sm:$0xff]
      %v4149 = vld [vmem:[#allocation2 + $0x68] sm:$0xff]
      %v4150 = vld [vmem:[#allocation2 + $0x70] sm:$0xff]
      %v4151 = vld [vmem:[#allocation2 + $0x78] sm:$0xff]
      %v4152 = vld [vmem:[#allocation2 + $0x80] sm:$0xff]
      %v4153 = vld [vmem:[#allocation2 + $0x88] sm:$0xff]
      %v4154 = vld [vmem:[#allocation2 + $0x90] sm:$0xff]
      %v4155 = vld [vmem:[#allocation2 + $0x98] sm:$0xff]
      %v4156 = vld [vmem:[#allocation2 + $0xa0] sm:$0xff]
      %v4157 = vld [vmem:[#allocation2 + $0xa8] sm:$0xff]
      %v4158 = vld [vmem:[#allocation2 + $0xb0] sm:$0xff]
      %v4159 = vld [vmem:[#allocation2 + $0xb8] sm:$0xff]
      %v4160 = vld [vmem:[#allocation2 + $0xc0] sm:$0xff]
      %v4161 = vld [vmem:[#allocation2 + $0xc8] sm:$0xff]
      %v4162 = vld [vmem:[#allocation2 + $0xd0] sm:$0xff]
      %v4163 = vld [vmem:[#allocation2 + $0xd8] sm:$0xff]
      %v4164 = vld [vmem:[#allocation2 + $0xe0] sm:$0xff]
      %v4165 = vld [vmem:[#allocation2 + $0xe8] sm:$0xff]
      %v4166 = vld [vmem:[#allocation2 + $0xf0] sm:$0xff]
      %v4167 = vld [vmem:[#allocation2 + $0xf8] sm:$0xff]
      %v4168 = vadd.f32 %v4136, %v3978
      %v4169 = vadd.f32 %v4137, %v3983
      %v4170 = vadd.f32 %v4138, %v3988
      %v4171 = vadd.f32 %v4139, %v3993
      %v4172 = vadd.f32 %v4140, %v3998
      %v4173 = vadd.f32 %v4141, %v4003
      %v4174 = vadd.f32 %v4142, %v4008
      %v4175 = vadd.f32 %v4143, %v4013
      %v4176 = vadd.f32 %v4144, %v4018
      %v4177 = vadd.f32 %v4145, %v4023
      %v4178 = vadd.f32 %v4146, %v4028
      %v4179 = vadd.f32 %v4147, %v4033
      %v4180 = vadd.f32 %v4148, %v4038
      %v4181 = vadd.f32 %v4149, %v4043
      %v4182 = vadd.f32 %v4150, %v4048
      %v4183 = vadd.f32 %v4151, %v4053
      %v4184 = vadd.f32 %v4152, %v4058
      %v4185 = vadd.f32 %v4153, %v4063
      %v4186 = vadd.f32 %v4154, %v4068
      %v4187 = vadd.f32 %v4155, %v4073
      %v4188 = vadd.f32 %v4156, %v4078
      %v4189 = vadd.f32 %v4157, %v4083
      %v4190 = vadd.f32 %v4158, %v4088
      %v4191 = vadd.f32 %v4159, %v4093
      %v4192 = vadd.f32 %v4160, %v4098
      %v4193 = vadd.f32 %v4161, %v4103
      %v4194 = vadd.f32 %v4162, %v4108
      %v4195 = vadd.f32 %v4163, %v4113
      %v4196 = vadd.f32 %v4164, %v4118
      %v4197 = vadd.f32 %v4165, %v4123
      %v4198 = vadd.f32 %v4166, %v4128
      %v4199 = vadd.f32 %v4167, %v4133
      %4200 = vst [vmem:[#allocation2] sm:$0xff] %v4168
      %4201 = vst [vmem:[#allocation2 + $0x8] sm:$0xff] %v4169
      %4202 = vst [vmem:[#allocation2 + $0x10] sm:$0xff] %v4170
      %4203 = vst [vmem:[#allocation2 + $0x18] sm:$0xff] %v4171
      %4204 = vst [vmem:[#allocation2 + $0x20] sm:$0xff] %v4172
      %4205 = vst [vmem:[#allocation2 + $0x28] sm:$0xff] %v4173
      %4206 = vst [vmem:[#allocation2 + $0x30] sm:$0xff] %v4174
      %4207 = vst [vmem:[#allocation2 + $0x38] sm:$0xff] %v4175
      %4208 = vst [vmem:[#allocation2 + $0x40] sm:$0xff] %v4176
      %4209 = vst [vmem:[#allocation2 + $0x48] sm:$0xff] %v4177
      %4210 = vst [vmem:[#allocation2 + $0x50] sm:$0xff] %v4178
      %4211 = vst [vmem:[#allocation2 + $0x58] sm:$0xff] %v4179
      %4212 = vst [vmem:[#allocation2 + $0x60] sm:$0xff] %v4180
      %4213 = vst [vmem:[#allocation2 + $0x68] sm:$0xff] %v4181
      %4214 = vst [vmem:[#allocation2 + $0x70] sm:$0xff] %v4182
      %4215 = vst [vmem:[#allocation2 + $0x78] sm:$0xff] %v4183
      %4216 = vst [vmem:[#allocation2 + $0x80] sm:$0xff] %v4184
      %4217 = vst [vmem:[#allocation2 + $0x88] sm:$0xff] %v4185
      %4218 = vst [vmem:[#allocation2 + $0x90] sm:$0xff] %v4186
      %4219 = vst [vmem:[#allocation2 + $0x98] sm:$0xff] %v4187
      %4220 = vst [vmem:[#allocation2 + $0xa0] sm:$0xff] %v4188
      %4221 = vst [vmem:[#allocation2 + $0xa8] sm:$0xff] %v4189
      %4222 = vst [vmem:[#allocation2 + $0xb0] sm:$0xff] %v4190
      %4223 = vst [vmem:[#allocation2 + $0xb8] sm:$0xff] %v4191
      %4224 = vst [vmem:[#allocation2 + $0xc0] sm:$0xff] %v4192
      %4225 = vst [vmem:[#allocation2 + $0xc8] sm:$0xff] %v4193
      %4226 = vst [vmem:[#allocation2 + $0xd0] sm:$0xff] %v4194
      %4227 = vst [vmem:[#allocation2 + $0xd8] sm:$0xff] %v4195
      %4228 = vst [vmem:[#allocation2 + $0xe0] sm:$0xff] %v4196
      %4229 = vst [vmem:[#allocation2 + $0xe8] sm:$0xff] %v4197
      %4230 = vst [vmem:[#allocation2 + $0xf0] sm:$0xff] %v4198
      %4231 = vst [vmem:[#allocation2 + $0xf8] sm:$0xff] %v4199
      %v4232 = vld [vmem:[#allocation2] sm:$0xff]
      %v4233 = vld [vmem:[#allocation2 + $0x8] sm:$0xff]
      %v4234 = vld [vmem:[#allocation2 + $0x10] sm:$0xff]
      %v4235 = vld [vmem:[#allocation2 + $0x18] sm:$0xff]
      %v4236 = vld [vmem:[#allocation2 + $0x20] sm:$0xff]
      %v4237 = vld [vmem:[#allocation2 + $0x28] sm:$0xff]
      %v4238 = vld [vmem:[#allocation2 + $0x30] sm:$0xff]
      %v4239 = vld [vmem:[#allocation2 + $0x38] sm:$0xff]
      %v4240 = vld [vmem:[#allocation2 + $0x40] sm:$0xff]
      %v4241 = vld [vmem:[#allocation2 + $0x48] sm:$0xff]
      %v4242 = vld [vmem:[#allocation2 + $0x50] sm:$0xff]
      %v4243 = vld [vmem:[#allocation2 + $0x58] sm:$0xff]
      %v4244 = vld [vmem:[#allocation2 + $0x60] sm:$0xff]
      %v4245 = vld [vmem:[#allocation2 + $0x68] sm:$0xff]
      %v4246 = vld [vmem:[#allocation2 + $0x70] sm:$0xff]
      %v4247 = vld [vmem:[#allocation2 + $0x78] sm:$0xff]
      %v4248 = vld [vmem:[#allocation2 + $0x80] sm:$0xff]
      %v4249 = vld [vmem:[#allocation2 + $0x88] sm:$0xff]
      %v4250 = vld [vmem:[#allocation2 + $0x90] sm:$0xff]
      %v4251 = vld [vmem:[#allocation2 + $0x98] sm:$0xff]
      %v4252 = vld [vmem:[#allocation2 + $0xa0] sm:$0xff]
      %v4253 = vld [vmem:[#allocation2 + $0xa8] sm:$0xff]
      %v4254 = vld [vmem:[#allocation2 + $0xb0] sm:$0xff]
      %v4255 = vld [vmem:[#allocation2 + $0xb8] sm:$0xff]
      %v4256 = vld [vmem:[#allocation2 + $0xc0] sm:$0xff]
      %v4257 = vld [vmem:[#allocation2 + $0xc8] sm:$0xff]
      %v4258 = vld [vmem:[#allocation2 + $0xd0] sm:$0xff]
      %v4259 = vld [vmem:[#allocation2 + $0xd8] sm:$0xff]
      %v4260 = vld [vmem:[#allocation2 + $0xe0] sm:$0xff]
      %v4261 = vld [vmem:[#allocation2 + $0xe8] sm:$0xff]
      %v4262 = vld [vmem:[#allocation2 + $0xf0] sm:$0xff]
      %v4263 = vld [vmem:[#allocation2 + $0xf8] sm:$0xff]
      %v4264 = vld [vmem:[%s2] sm:$0x1]
      %v4266 = vlaneseq
      %v4267 = vshrl.u32 %v4266, 7
      %v4268 = vsub.s32 0, %v4267
      %v4269 = vrot.slane %v4264, %v4268
      %v4271 = vadd.f32 %v4232, %v4269
      %v4272 = vadd.f32 %v4233, %v4269
      %v4273 = vadd.f32 %v4234, %v4269
      %v4274 = vadd.f32 %v4235, %v4269
      %v4275 = vadd.f32 %v4236, %v4269
      %v4276 = vadd.f32 %v4237, %v4269
      %v4277 = vadd.f32 %v4238, %v4269
      %v4278 = vadd.f32 %v4239, %v4269
      %v4279 = vadd.f32 %v4240, %v4269
      %v4280 = vadd.f32 %v4241, %v4269
      %v4281 = vadd.f32 %v4242, %v4269
      %v4282 = vadd.f32 %v4243, %v4269
      %v4283 = vadd.f32 %v4244, %v4269
      %v4284 = vadd.f32 %v4245, %v4269
      %v4285 = vadd.f32 %v4246, %v4269
      %v4286 = vadd.f32 %v4247, %v4269
      %v4287 = vadd.f32 %v4248, %v4269
      %v4288 = vadd.f32 %v4249, %v4269
      %v4289 = vadd.f32 %v4250, %v4269
      %v4290 = vadd.f32 %v4251, %v4269
      %v4291 = vadd.f32 %v4252, %v4269
      %v4292 = vadd.f32 %v4253, %v4269
      %v4293 = vadd.f32 %v4254, %v4269
      %v4294 = vadd.f32 %v4255, %v4269
      %v4295 = vadd.f32 %v4256, %v4269
      %v4296 = vadd.f32 %v4257, %v4269
      %v4297 = vadd.f32 %v4258, %v4269
      %v4298 = vadd.f32 %v4259, %v4269
      %v4299 = vadd.f32 %v4260, %v4269
      %v4300 = vadd.f32 %v4261, %v4269
      %v4301 = vadd.f32 %v4262, %v4269
      %v4302 = vadd.f32 %v4263, %v4269
      %v4303 = vmax.f32 %v4271, 0.0
      %v4304 = vmax.f32 %v4272, 0.0
      %v4305 = vmax.f32 %v4273, 0.0
      %v4306 = vmax.f32 %v4274, 0.0
      %v4307 = vmax.f32 %v4275, 0.0
      %v4308 = vmax.f32 %v4276, 0.0
      %v4309 = vmax.f32 %v4277, 0.0
      %v4310 = vmax.f32 %v4278, 0.0
      %v4311 = vmax.f32 %v4279, 0.0
      %v4312 = vmax.f32 %v4280, 0.0
      %v4313 = vmax.f32 %v4281, 0.0
      %v4314 = vmax.f32 %v4282, 0.0
      %v4315 = vmax.f32 %v4283, 0.0
      %v4316 = vmax.f32 %v4284, 0.0
      %v4317 = vmax.f32 %v4285, 0.0
      %v4318 = vmax.f32 %v4286, 0.0
      %v4319 = vmax.f32 %v4287, 0.0
      %v4320 = vmax.f32 %v4288, 0.0
      %v4321 = vmax.f32 %v4289, 0.0
      %v4322 = vmax.f32 %v4290, 0.0
      %v4323 = vmax.f32 %v4291, 0.0
      %v4324 = vmax.f32 %v4292, 0.0
      %v4325 = vmax.f32 %v4293, 0.0
      %v4326 = vmax.f32 %v4294, 0.0
      %v4327 = vmax.f32 %v4295, 0.0
      %v4328 = vmax.f32 %v4296, 0.0
      %v4329 = vmax.f32 %v4297, 0.0
      %v4330 = vmax.f32 %v4298, 0.0
      %v4331 = vmax.f32 %v4299, 0.0
      %v4332 = vmax.f32 %v4300, 0.0
      %v4333 = vmax.f32 %v4301, 0.0
      %v4334 = vmax.f32 %v4302, 0.0
      %4335 = vst [vmem:[%s206] sm:$0xff] %v4303
      %4336 = vst [vmem:[%s206 + $0x8] sm:$0xff] %v4304
      %4337 = vst [vmem:[%s206 + $0x10] sm:$0xff] %v4305
      %4338 = vst [vmem:[%s206 + $0x18] sm:$0xff] %v4306
      %4339 = vst [vmem:[%s206 + $0x20] sm:$0xff] %v4307
      %4340 = vst [vmem:[%s206 + $0x28] sm:$0xff] %v4308
      %4341 = vst [vmem:[%s206 + $0x30] sm:$0xff] %v4309
      %4342 = vst [vmem:[%s206 + $0x38] sm:$0xff] %v4310
      %4343 = vst [vmem:[%s206 + $0x40] sm:$0xff] %v4311
      %4344 = vst [vmem:[%s206 + $0x48] sm:$0xff] %v4312
      %4345 = vst [vmem:[%s206 + $0x50] sm:$0xff] %v4313
      %4346 = vst [vmem:[%s206 + $0x58] sm:$0xff] %v4314
      %4347 = vst [vmem:[%s206 + $0x60] sm:$0xff] %v4315
      %4348 = vst [vmem:[%s206 + $0x68] sm:$0xff] %v4316
      %4349 = vst [vmem:[%s206 + $0x70] sm:$0xff] %v4317
      %4350 = vst [vmem:[%s206 + $0x78] sm:$0xff] %v4318
      %4351 = vst [vmem:[%s206 + $0x80] sm:$0xff] %v4319
      %4352 = vst [vmem:[%s206 + $0x88] sm:$0xff] %v4320
      %4353 = vst [vmem:[%s206 + $0x90] sm:$0xff] %v4321
      %4354 = vst [vmem:[%s206 + $0x98] sm:$0xff] %v4322
      %4355 = vst [vmem:[%s206 + $0xa0] sm:$0xff] %v4323
      %4356 = vst [vmem:[%s206 + $0xa8] sm:$0xff] %v4324
      %4357 = vst [vmem:[%s206 + $0xb0] sm:$0xff] %v4325
      %4358 = vst [vmem:[%s206 + $0xb8] sm:$0xff] %v4326
      %4359 = vst [vmem:[%s206 + $0xc0] sm:$0xff] %v4327
      %4360 = vst [vmem:[%s206 + $0xc8] sm:$0xff] %v4328
      %4361 = vst [vmem:[%s206 + $0xd0] sm:$0xff] %v4329
      %4362 = vst [vmem:[%s206 + $0xd8] sm:$0xff] %v4330
      %4363 = vst [vmem:[%s206 + $0xe0] sm:$0xff] %v4331
      %4364 = vst [vmem:[%s206 + $0xe8] sm:$0xff] %v4332
      %4365 = vst [vmem:[%s206 + $0xf0] sm:$0xff] %v4333
      %4366 = vst [vmem:[%s206 + $0xf8] sm:$0xff] %v4334
      %p4367 = scmp.lt.s32.totalorder %s18, 1
      %s4368 = scalar_select %p4367, %s18, 1
      %p4369 = scmp.lt.s32.totalorder %s19, 0
      %s4370 = scalar_select %p4369, %s19, 0
      %s4371 = smul.addr %s4370, 32
      %s4372 = smul.addr %s4368, 32
      %s4373 = sadd.s32 %s4371, %s4372
      %s4374 = smul.addr %s4373, 8
      %s4375 = scalar_lea.vmem %s3, %s4374
      // Predicated region
      $region33: #{basic_conv_forward.1} parent=31 // pred_check
        %p4376 = pneg %p116
      $region34: #{basic_conv_forward.1} parent=31 // pred_check_branch
        %4378 = sbr.rel (%p4376) target = $region36
      $region35: #{basic_conv_forward.1} parent=31 // pred_region
        _
      $region36: #{basic_conv_forward.1} parent=31 // pred_fallthru
        _
    $region32: #{basic_conv_forward.1} parent=5 // pred_fallthru
      _
    %p4379 = scmp.le.s32.totalorder 2, %s9
    // Predicated region
    $region37: #{basic_conv_forward.1} parent=5 // pred_check
      %p4380 = pneg %p4379
    $region38: #{basic_conv_forward.1} parent=5 // pred_check_branch
      %4382 = sbr.rel (%p4380) target = $region40
    $region39: #{basic_conv_forward.1} parent=5 // pred_region
      %s4383 = ssub.s32 %s9, 2
      // Predicated region
      $region41: #{basic_conv_forward.1} parent=39 // pred_check
        %p4384 = pneg %p122
      $region42: #{basic_conv_forward.1} parent=39 // pred_check_branch
        %4386 = sbr.rel (%p4384) target = $region44
      $region43: #{basic_conv_forward.1} parent=39 // pred_region
        %p4387 = scmp.lt.s32.totalorder %s20, 1
        %s4388 = scalar_select %p4387, %s20, 1
        %p4389 = scmp.lt.s32.totalorder %s21, 0
        %s4390 = scalar_select %p4389, %s21, 0
        %s4391 = smul.addr %s4390, 32
        %s4392 = smul.addr %s4388, 32
        %s4393 = sadd.s32 %s4391, %s4392
        %s4394 = smul.addr %s4393, 8
        %s4395 = scalar_lea.vmem %s3, %s4394
      $region44: #{basic_conv_forward.1} parent=39 // pred_fallthru
        _
    $region40: #{basic_conv_forward.1} parent=5 // pred_fallthru
      _
  $region6: #{basic_conv_forward.1} parent=0 // loop_footer
    %s13 = sadd.s32 1, %s9
  $region7: #{basic_conv_forward.1} parent=0 // loop_footer_branch
    %8 = sbr.rel target = $region3
  $region8: #{basic_conv_forward.1} parent=0 // loop_exit
    _

</llo_original>
